<compile_context>
chip_gen: v7x
topology: tpu7x:2x2x1
jax: 0.10.0
libtpu: 0.0.40
codegen_flags: <defaults>
</compile_context>

<pallas_src>
import math
import jax
import jax.numpy as jnp
from jax.experimental import pallas as pl
from jax.experimental.pallas import tpu as pltpu


def _round_up(a, b):
    return (a + b - 1) // b * b


def model_forward(x, weight, bias, subtract_value, pool_k):
    """x: (N, C, H, W) f32, weight: (OC, C, KH, KW), bias: (OC,). Returns NCHW pooled output."""
    N, C, H, W = x.shape
    OC, _, KH, KW = weight.shape
    OH, OW = H - KH + 1, W - KW + 1
    pk = pool_k
    PH, PW = OH // pk, OW // pk

    # ---- static layout constants -------------------------------------------
    Wp = _round_up(W, 8)                 # padded image width (sublane aligned)
    OCp = _round_up(OC, 128)             # lane-dense output channels for the MXU
    T = KH * KW
    Mrow = PH * pk * Wp                  # conv rows actually needed by the pool
    max_shift = (KH - 1) * Wp + (KW - 1)
    HXp = _round_up(max(H * Wp, Mrow + max_shift + 1), 8)   # padded flat x rows
    Wv = (PW - 1) * pk + 1               # un-compacted pooled width (valid at ::pk)

    # ---- wrapper-side prep (tiny XLA ops on the input / params only) --------
    x_nhwc = jnp.transpose(x, (0, 2, 3, 1))                       # (N, H, W, C)
    x_nhwc = jnp.pad(x_nhwc, ((0, 0), (0, 0), (0, Wp - W), (0, 0)))
    x_flat = x_nhwc.reshape(N, H * Wp, C)
    x_flat = jnp.pad(x_flat, ((0, 0), (0, HXp - H * Wp), (0, 0)))  # (N, HXp, C)

    w_r = jnp.transpose(weight, (2, 3, 1, 0)).reshape(T, C, OC)    # (T, C, OC)
    w_r = jnp.pad(w_r, ((0, 0), (0, 0), (0, OCp - OC)))            # (T, C, OCp)
    b2 = jnp.pad((bias - subtract_value).reshape(1, OC),
                 ((0, 0), (0, OCp - OC)))                          # (1, OCp)

    # ---- fused kernel: conv + bias/sub + hardswish + maxpool + mish ---------
    def fused_kernel(x_ref, w_ref, b_ref, out_ref):
        # conv as shifted matmuls, f32 accumulation on the MXU
        acc = jnp.broadcast_to(b_ref[...], (Mrow, OCp)).astype(jnp.float32)
        for kh in range(KH):
            for kw in range(KW):
                t = kh * KW + kw
                xt = x_ref[0, pl.ds(kh * Wp + kw, Mrow), :]        # (Mrow, C)
                acc = acc + jnp.dot(xt, w_ref[t],
                                    preferred_element_type=jnp.float32)
        # hardswish: v * clamp(v+3, 0, 6) / 6
        conv = acc * jnp.clip(acc + 3.0, 0.0, 6.0) * (1.0 / 6.0)

        # max-pool: height via tile-aligned reshape, width via shifted slices
        v4 = conv.reshape(PH, pk, Wp, OCp)
        hmax = v4[:, 0]
        for dh in range(1, pk):
            hmax = jnp.maximum(hmax, v4[:, dh])                    # (PH, Wp, OCp)
        wmax = hmax[:, 0:Wv]
        for dw in range(1, pk):
            wmax = jnp.maximum(wmax, hmax[:, dw:dw + Wv])          # (PH, Wv, OCp)

        # mish: v * tanh(softplus(v)); valid pooled values live at columns pw*pk
        res = wmax * jnp.tanh(jnp.logaddexp(wmax, 0.0))
        out_ref[0] = res[:, :, :OC]                                # masked tiny store

    out4 = pl.pallas_call(
        fused_kernel,
        out_shape=jax.ShapeDtypeStruct((N, PH, Wv, OC), jnp.float32),
        grid=(N,),
        in_specs=[
            pl.BlockSpec((1, HXp, C), lambda n: (n, 0, 0)),   # one image per step
            pl.BlockSpec((T, C, OCp), lambda n: (0, 0, 0)),   # weights resident
            pl.BlockSpec((1, OCp), lambda n: (0, 0)),         # bias (sub folded in)
        ],
        out_specs=pl.BlockSpec((1, PH, Wv, OC), lambda n: (n, 0, 0, 0)),
        compiler_params=pltpu.CompilerParams(
            dimension_semantics=("parallel",)),
    )(x_flat, w_r, b2)

    # compact the stride-pk pooled columns and go to NCHW on the tiny result
    pooled = out4[:, :, ::pk, :]                                   # (N, PH, PW, OC)
    return jnp.transpose(pooled, (0, 3, 1, 2))                     # (N, OC, PH, PW)


# ------------------------------------------------------------------
# Reference (pure JAX) for sanity checking
# ------------------------------------------------------------------
def reference_forward(x, weight, bias, subtract_value, pool_k):
    y = jax.lax.conv_general_dilated(
        x, weight, window_strides=(1, 1), padding="VALID",
        dimension_numbers=("NCHW", "OIHW", "NCHW"))
    y = y + bias.reshape(1, -1, 1, 1)
    y = y - subtract_value
    y = y * jnp.clip(y + 3.0, 0.0, 6.0) / 6.0
    N, OC, OH, OW = y.shape
    PH, PW = OH // pool_k, OW // pool_k
    y = y[:, :, :PH * pool_k, :PW * pool_k]
    y = y.reshape(N, OC, PH, pool_k, PW, pool_k).max(axis=(3, 5))
    return y * jnp.tanh(jnp.logaddexp(y, 0.0))


if __name__ == "__main__":
    # small shapes consistent with the module
    N, C, H, W = 2, 4, 16, 16
    OC, K = 8, 3
    subtract_value = 0.5
    pool_kernel_size = 2

    key = jax.random.PRNGKey(0)
    kx, kw, kb = jax.random.split(key, 3)

    x = jax.random.normal(kx, (N, C, H, W), dtype=jnp.float32)
    fan_in = C * K * K
    bound = 1.0 / math.sqrt(fan_in)
    weight = jax.random.uniform(kw, (OC, C, K, K), minval=-bound, maxval=bound,
                                dtype=jnp.float32)
    bias = jax.random.uniform(kb, (OC,), minval=-bound, maxval=bound,
                              dtype=jnp.float32)

    out = model_forward(x, weight, bias, subtract_value, pool_kernel_size)
    out = jax.block_until_ready(out)

    ref = reference_forward(x, weight, bias, subtract_value, pool_kernel_size)
    assert out.shape == ref.shape, (out.shape, ref.shape)
    assert jnp.allclose(out, ref, atol=1e-4, rtol=1e-4), float(jnp.abs(out - ref).max())

    print("KERNEL_OK")
</pallas_src>

<mosaic_0001>
module attributes {stable_mosaic.version = 11 : i64} {
  func.func @fused_kernel(%arg0: i32, %arg1: memref<1x264x4xf32, #tpu.memory_space<vmem>>, %arg2: memref<9x4x128xf32, #tpu.memory_space<vmem>>, %arg3: memref<1x128xf32, #tpu.memory_space<vmem>>, %arg4: memref<1x7x13x8xf32, #tpu.memory_space<vmem>>) attributes {dimension_semantics = [#tpu.dimension_semantics<parallel>], iteration_bounds = array<i64: 2>, scalar_prefetch = 0 : i64, scratch_operands = 0 : i64, tpu.core_type = #tpu.core_type<tc>, window_params = [{transform_indices = @transform_0, window_bounds = array<i64: 1, 264, 4>}, {pipeline_mode = #tpu.pipeline_mode<synchronous>, transform_indices = @transform_1, window_bounds = array<i64: 9, 4, 128>}, {pipeline_mode = #tpu.pipeline_mode<synchronous>, transform_indices = @transform_2, window_bounds = array<i64: 1, 128>}, {transform_indices = @transform_3, window_bounds = array<i64: 1, 7, 13, 8>}]} {
    %c0 = arith.constant 0 : index
    %c0_0 = arith.constant 0 : index
    %0 = vector.load %arg3[%c0, %c0_0] : memref<1x128xf32, #tpu.memory_space<vmem>>, vector<1x128xf32>
    %1 = vector.shape_cast %0 : vector<1x128xf32> to vector<1x128xf32>
    %2 = vector.broadcast %1 : vector<1x128xf32> to vector<224x128xf32>
    %c0_1 = arith.constant 0 : index
    %c0_2 = arith.constant 0 : index
    %c0_3 = arith.constant 0 : index
    %3 = vector.load %arg1[%c0_1, %c0_2, %c0_3] : memref<1x264x4xf32, #tpu.memory_space<vmem>>, vector<1x224x4xf32>
    %4 = vector.shape_cast %3 : vector<1x224x4xf32> to vector<224x4xf32>
    %c0_4 = arith.constant 0 : index
    %c0_5 = arith.constant 0 : index
    %c0_6 = arith.constant 0 : index
    %5 = vector.load %arg2[%c0_4, %c0_5, %c0_6] : memref<9x4x128xf32, #tpu.memory_space<vmem>>, vector<1x4x128xf32>
    %6 = vector.shape_cast %5 : vector<1x4x128xf32> to vector<4x128xf32>
    %cst = arith.constant dense<0.000000e+00> : vector<224x128xf32>
    %7 = tpu.matmul %4, %6, %cst {dimension_numbers = #tpu.dot_dimension_numbers<[1], [0], [0], [1], [0, 0, 1, 1], [], []>} : vector<224x4xf32>, vector<4x128xf32>, vector<224x128xf32> -> vector<224x128xf32>
    %8 = arith.addf %2, %7 : vector<224x128xf32>
    %c0_7 = arith.constant 0 : index
    %c1 = arith.constant 1 : index
    %c0_8 = arith.constant 0 : index
    %9 = vector.load %arg1[%c0_7, %c1, %c0_8] : memref<1x264x4xf32, #tpu.memory_space<vmem>>, vector<1x224x4xf32>
    %10 = vector.shape_cast %9 : vector<1x224x4xf32> to vector<224x4xf32>
    %c1_9 = arith.constant 1 : index
    %c0_10 = arith.constant 0 : index
    %c0_11 = arith.constant 0 : index
    %11 = vector.load %arg2[%c1_9, %c0_10, %c0_11] : memref<9x4x128xf32, #tpu.memory_space<vmem>>, vector<1x4x128xf32>
    %12 = vector.shape_cast %11 : vector<1x4x128xf32> to vector<4x128xf32>
    %cst_12 = arith.constant dense<0.000000e+00> : vector<224x128xf32>
    %13 = tpu.matmul %10, %12, %cst_12 {dimension_numbers = #tpu.dot_dimension_numbers<[1], [0], [0], [1], [0, 0, 1, 1], [], []>} : vector<224x4xf32>, vector<4x128xf32>, vector<224x128xf32> -> vector<224x128xf32>
    %14 = arith.addf %8, %13 : vector<224x128xf32>
    %c0_13 = arith.constant 0 : index
    %c2 = arith.constant 2 : index
    %c0_14 = arith.constant 0 : index
    %15 = vector.load %arg1[%c0_13, %c2, %c0_14] : memref<1x264x4xf32, #tpu.memory_space<vmem>>, vector<1x224x4xf32>
    %16 = vector.shape_cast %15 : vector<1x224x4xf32> to vector<224x4xf32>
    %c2_15 = arith.constant 2 : index
    %c0_16 = arith.constant 0 : index
    %c0_17 = arith.constant 0 : index
    %17 = vector.load %arg2[%c2_15, %c0_16, %c0_17] : memref<9x4x128xf32, #tpu.memory_space<vmem>>, vector<1x4x128xf32>
    %18 = vector.shape_cast %17 : vector<1x4x128xf32> to vector<4x128xf32>
    %cst_18 = arith.constant dense<0.000000e+00> : vector<224x128xf32>
    %19 = tpu.matmul %16, %18, %cst_18 {dimension_numbers = #tpu.dot_dimension_numbers<[1], [0], [0], [1], [0, 0, 1, 1], [], []>} : vector<224x4xf32>, vector<4x128xf32>, vector<224x128xf32> -> vector<224x128xf32>
    %20 = arith.addf %14, %19 : vector<224x128xf32>
    %c0_19 = arith.constant 0 : index
    %c16 = arith.constant 16 : index
    %c0_20 = arith.constant 0 : index
    %21 = vector.load %arg1[%c0_19, %c16, %c0_20] : memref<1x264x4xf32, #tpu.memory_space<vmem>>, vector<1x224x4xf32>
    %22 = vector.shape_cast %21 : vector<1x224x4xf32> to vector<224x4xf32>
    %c3 = arith.constant 3 : index
    %c0_21 = arith.constant 0 : index
    %c0_22 = arith.constant 0 : index
    %23 = vector.load %arg2[%c3, %c0_21, %c0_22] : memref<9x4x128xf32, #tpu.memory_space<vmem>>, vector<1x4x128xf32>
    %24 = vector.shape_cast %23 : vector<1x4x128xf32> to vector<4x128xf32>
    %cst_23 = arith.constant dense<0.000000e+00> : vector<224x128xf32>
    %25 = tpu.matmul %22, %24, %cst_23 {dimension_numbers = #tpu.dot_dimension_numbers<[1], [0], [0], [1], [0, 0, 1, 1], [], []>} : vector<224x4xf32>, vector<4x128xf32>, vector<224x128xf32> -> vector<224x128xf32>
    %26 = arith.addf %20, %25 : vector<224x128xf32>
    %c0_24 = arith.constant 0 : index
    %c17 = arith.constant 17 : index
    %c0_25 = arith.constant 0 : index
    %27 = vector.load %arg1[%c0_24, %c17, %c0_25] : memref<1x264x4xf32, #tpu.memory_space<vmem>>, vector<1x224x4xf32>
    %28 = vector.shape_cast %27 : vector<1x224x4xf32> to vector<224x4xf32>
    %c4 = arith.constant 4 : index
    %c0_26 = arith.constant 0 : index
    %c0_27 = arith.constant 0 : index
    %29 = vector.load %arg2[%c4, %c0_26, %c0_27] : memref<9x4x128xf32, #tpu.memory_space<vmem>>, vector<1x4x128xf32>
    %30 = vector.shape_cast %29 : vector<1x4x128xf32> to vector<4x128xf32>
    %cst_28 = arith.constant dense<0.000000e+00> : vector<224x128xf32>
    %31 = tpu.matmul %28, %30, %cst_28 {dimension_numbers = #tpu.dot_dimension_numbers<[1], [0], [0], [1], [0, 0, 1, 1], [], []>} : vector<224x4xf32>, vector<4x128xf32>, vector<224x128xf32> -> vector<224x128xf32>
    %32 = arith.addf %26, %31 : vector<224x128xf32>
    %c0_29 = arith.constant 0 : index
    %c18 = arith.constant 18 : index
    %c0_30 = arith.constant 0 : index
    %33 = vector.load %arg1[%c0_29, %c18, %c0_30] : memref<1x264x4xf32, #tpu.memory_space<vmem>>, vector<1x224x4xf32>
    %34 = vector.shape_cast %33 : vector<1x224x4xf32> to vector<224x4xf32>
    %c5 = arith.constant 5 : index
    %c0_31 = arith.constant 0 : index
    %c0_32 = arith.constant 0 : index
    %35 = vector.load %arg2[%c5, %c0_31, %c0_32] : memref<9x4x128xf32, #tpu.memory_space<vmem>>, vector<1x4x128xf32>
    %36 = vector.shape_cast %35 : vector<1x4x128xf32> to vector<4x128xf32>
    %cst_33 = arith.constant dense<0.000000e+00> : vector<224x128xf32>
    %37 = tpu.matmul %34, %36, %cst_33 {dimension_numbers = #tpu.dot_dimension_numbers<[1], [0], [0], [1], [0, 0, 1, 1], [], []>} : vector<224x4xf32>, vector<4x128xf32>, vector<224x128xf32> -> vector<224x128xf32>
    %38 = arith.addf %32, %37 : vector<224x128xf32>
    %c0_34 = arith.constant 0 : index
    %c32 = arith.constant 32 : index
    %c0_35 = arith.constant 0 : index
    %39 = vector.load %arg1[%c0_34, %c32, %c0_35] : memref<1x264x4xf32, #tpu.memory_space<vmem>>, vector<1x224x4xf32>
    %40 = vector.shape_cast %39 : vector<1x224x4xf32> to vector<224x4xf32>
    %c6 = arith.constant 6 : index
    %c0_36 = arith.constant 0 : index
    %c0_37 = arith.constant 0 : index
    %41 = vector.load %arg2[%c6, %c0_36, %c0_37] : memref<9x4x128xf32, #tpu.memory_space<vmem>>, vector<1x4x128xf32>
    %42 = vector.shape_cast %41 : vector<1x4x128xf32> to vector<4x128xf32>
    %cst_38 = arith.constant dense<0.000000e+00> : vector<224x128xf32>
    %43 = tpu.matmul %40, %42, %cst_38 {dimension_numbers = #tpu.dot_dimension_numbers<[1], [0], [0], [1], [0, 0, 1, 1], [], []>} : vector<224x4xf32>, vector<4x128xf32>, vector<224x128xf32> -> vector<224x128xf32>
    %44 = arith.addf %38, %43 : vector<224x128xf32>
    %c0_39 = arith.constant 0 : index
    %c33 = arith.constant 33 : index
    %c0_40 = arith.constant 0 : index
    %45 = vector.load %arg1[%c0_39, %c33, %c0_40] : memref<1x264x4xf32, #tpu.memory_space<vmem>>, vector<1x224x4xf32>
    %46 = vector.shape_cast %45 : vector<1x224x4xf32> to vector<224x4xf32>
    %c7 = arith.constant 7 : index
    %c0_41 = arith.constant 0 : index
    %c0_42 = arith.constant 0 : index
    %47 = vector.load %arg2[%c7, %c0_41, %c0_42] : memref<9x4x128xf32, #tpu.memory_space<vmem>>, vector<1x4x128xf32>
    %48 = vector.shape_cast %47 : vector<1x4x128xf32> to vector<4x128xf32>
    %cst_43 = arith.constant dense<0.000000e+00> : vector<224x128xf32>
    %49 = tpu.matmul %46, %48, %cst_43 {dimension_numbers = #tpu.dot_dimension_numbers<[1], [0], [0], [1], [0, 0, 1, 1], [], []>} : vector<224x4xf32>, vector<4x128xf32>, vector<224x128xf32> -> vector<224x128xf32>
    %50 = arith.addf %44, %49 : vector<224x128xf32>
    %c0_44 = arith.constant 0 : index
    %c34 = arith.constant 34 : index
    %c0_45 = arith.constant 0 : index
    %51 = vector.load %arg1[%c0_44, %c34, %c0_45] : memref<1x264x4xf32, #tpu.memory_space<vmem>>, vector<1x224x4xf32>
    %52 = vector.shape_cast %51 : vector<1x224x4xf32> to vector<224x4xf32>
    %c8 = arith.constant 8 : index
    %c0_46 = arith.constant 0 : index
    %c0_47 = arith.constant 0 : index
    %53 = vector.load %arg2[%c8, %c0_46, %c0_47] : memref<9x4x128xf32, #tpu.memory_space<vmem>>, vector<1x4x128xf32>
    %54 = vector.shape_cast %53 : vector<1x4x128xf32> to vector<4x128xf32>
    %cst_48 = arith.constant dense<0.000000e+00> : vector<224x128xf32>
    %55 = tpu.matmul %52, %54, %cst_48 {dimension_numbers = #tpu.dot_dimension_numbers<[1], [0], [0], [1], [0, 0, 1, 1], [], []>} : vector<224x4xf32>, vector<4x128xf32>, vector<224x128xf32> -> vector<224x128xf32>
    %56 = arith.addf %50, %55 : vector<224x128xf32>
    %cst_49 = arith.constant 3.000000e+00 : f32
    %57 = vector.broadcast %cst_49 : f32 to vector<224x128xf32>
    %58 = arith.addf %56, %57 : vector<224x128xf32>
    %cst_50 = arith.constant 0.000000e+00 : f32
    %cst_51 = arith.constant 6.000000e+00 : f32
    %59 = vector.broadcast %cst_50 : f32 to vector<224x128xf32>
    %60 = arith.maximumf %59, %58 : vector<224x128xf32>
    %61 = vector.broadcast %cst_51 : f32 to vector<224x128xf32>
    %62 = arith.minimumf %61, %60 : vector<224x128xf32>
    %63 = arith.mulf %56, %62 : vector<224x128xf32>
    %cst_52 = arith.constant 0.166666672 : f32
    %64 = vector.broadcast %cst_52 : f32 to vector<224x128xf32>
    %65 = arith.mulf %63, %64 : vector<224x128xf32>
    %66 = vector.shape_cast %65 : vector<224x128xf32> to vector<7x2x16x128xf32>
    %67 = vector.extract_strided_slice %66 {offsets = [0, 0, 0, 0], sizes = [7, 1, 16, 128], strides = [1, 1, 1, 1]} : vector<7x2x16x128xf32> to vector<7x1x16x128xf32>
    %68 = vector.shape_cast %67 : vector<7x1x16x128xf32> to vector<7x16x128xf32>
    %69 = vector.extract_strided_slice %66 {offsets = [0, 1, 0, 0], sizes = [7, 1, 16, 128], strides = [1, 1, 1, 1]} : vector<7x2x16x128xf32> to vector<7x1x16x128xf32>
    %70 = vector.shape_cast %69 : vector<7x1x16x128xf32> to vector<7x16x128xf32>
    %71 = arith.maximumf %68, %70 : vector<7x16x128xf32>
    %72 = vector.extract_strided_slice %71 {offsets = [0, 0, 0], sizes = [7, 13, 128], strides = [1, 1, 1]} : vector<7x16x128xf32> to vector<7x13x128xf32>
    %73 = vector.extract_strided_slice %71 {offsets = [0, 1, 0], sizes = [7, 13, 128], strides = [1, 1, 1]} : vector<7x16x128xf32> to vector<7x13x128xf32>
    %74 = arith.maximumf %72, %73 : vector<7x13x128xf32>
    %cst_53 = arith.constant 0.000000e+00 : f32
    %75 = vector.broadcast %cst_53 : f32 to vector<7x13x128xf32>
    %76 = arith.maximumf %74, %75 : vector<7x13x128xf32>
    %77 = vector.broadcast %cst_53 : f32 to vector<7x13x128xf32>
    %78 = arith.subf %74, %77 : vector<7x13x128xf32>
    %79 = arith.cmpf one, %78, %78 : vector<7x13x128xf32>
    %80 = vector.broadcast %cst_53 : f32 to vector<7x13x128xf32>
    %81 = arith.addf %74, %80 : vector<7x13x128xf32>
    %82 = math.absf %78 : vector<7x13x128xf32>
    %cst_54 = arith.constant 0.000000e+00 : f32
    %83 = vector.broadcast %cst_54 : f32 to vector<7x13x128xf32>
    %84 = arith.subf %83, %82 : vector<7x13x128xf32>
    %85 = math.exp %84 : vector<7x13x128xf32>
    %86 = math.log1p %85 : vector<7x13x128xf32>
    %87 = arith.addf %76, %86 : vector<7x13x128xf32>
    %88 = arith.select %79, %81, %87 : vector<7x13x128xi1>, vector<7x13x128xf32>
    %89 = math.tanh %88 : vector<7x13x128xf32>
    %90 = arith.mulf %74, %89 : vector<7x13x128xf32>
    %91 = vector.extract_strided_slice %90 {offsets = [0, 0, 0], sizes = [7, 13, 8], strides = [1, 1, 1]} : vector<7x13x128xf32> to vector<7x13x8xf32>
    %c0_55 = arith.constant 0 : index
    %c0_56 = arith.constant 0 : index
    %c0_57 = arith.constant 0 : index
    %c0_58 = arith.constant 0 : index
    %92 = vector.load %arg4[%c0_55, %c0_56, %c0_57, %c0_58] : memref<1x7x13x8xf32, #tpu.memory_space<vmem>>, vector<1x7x13x8xf32>
    %93 = vector.shape_cast %92 : vector<1x7x13x8xf32> to vector<7x13x8xf32>
    %94 = vector.shape_cast %91 : vector<7x13x8xf32> to vector<1x7x13x8xf32>
    tpu.vector_store %arg4[%c0_55, %c0_56, %c0_57, %c0_58], %94 {strides = array<i32>} : memref<1x7x13x8xf32, #tpu.memory_space<vmem>>, vector<1x7x13x8xf32>,
    return
  }
  func.func @transform_0(%arg0: i32) -> (i32, i32, i32) {
    %c0_i32 = arith.constant 0 : i32
    %c0_i32_0 = arith.constant 0 : i32
    %c0_i32_1 = arith.constant 0 : i32
    return %arg0, %c0_i32, %c0_i32_0 : i32, i32, i32
  }
  func.func @transform_1(%arg0: i32) -> (i32, i32, i32) {
    %c0_i32 = arith.constant 0 : i32
    %c0_i32_0 = arith.constant 0 : i32
    %c0_i32_1 = arith.constant 0 : i32
    %c0_i32_2 = arith.constant 0 : i32
    return %c0_i32, %c0_i32_0, %c0_i32_1 : i32, i32, i32
  }
  func.func @transform_2(%arg0: i32) -> (i32, i32) {
    %c0_i32 = arith.constant 0 : i32
    %c0_i32_0 = arith.constant 0 : i32
    %c0_i32_1 = arith.constant 0 : i32
    return %c0_i32, %c0_i32_0 : i32, i32
  }
  func.func @transform_3(%arg0: i32) -> (i32, i32, i32, i32) {
    %c0_i32 = arith.constant 0 : i32
    %c0_i32_0 = arith.constant 0 : i32
    %c0_i32_1 = arith.constant 0 : i32
    %c0_i32_2 = arith.constant 0 : i32
    return %arg0, %c0_i32, %c0_i32_0, %c0_i32_1 : i32, i32, i32, i32
  }
}

</mosaic_0001>

<llo_original>
// kernel: tpu_custom_call.1
$region0: #{tpu_custom_call.1}
  #allocation0 [shape = 'u32[]', space=smem, size = 0x4, offset = 0x4, fixed_abs, tag = 'smem constant byte address 0x4 - core index']
  #allocation1 [shape = 'u32[144,128]{1,0:T(1,128)}', space=vmem, size = 0x12000, scoped, tag = 'internal scratch']
  %s0 = inlined_call_operand.vmem [shape: f32[2,264,4], index: 0, kind: input, shape index: {}]
  %s1 = inlined_call_operand.vmem [shape: f32[9,4,128], index: 1, kind: input, shape index: {}]
  %s2 = inlined_call_operand.vmem [shape: f32[1,128], index: 2, kind: input, shape index: {}]
  %s3 = inlined_call_operand.vmem [shape: f32[2,7,13,8], index: 3, kind: output, shape index: {}]
  %s4 = sld [smem:[#allocation0]]
  $region45: #{tpu_custom_call.1} parent=0
    _
  %s6 = ssub.s32 1, %s4
  %s7 = scalar_select 0, %s6, %s4
  loop: start=0, step=1, limit=4
  $region2: #{tpu_custom_call.1} parent=0 // loop_pre_header
    _
  $region3: #{tpu_custom_call.1} parent=0 // loop_header
    %s9 = sphi 0, %s13
    %p10 = scmp.ge.s32.totalorder %s9, 4
    %s19 = sphi 0, %s21
    %s22 = sphi 0, %s19
    %s23 = sphi 0, %s22
    %s39 = sphi 0, %s23
    %s43 = sphi 0, %s43
    %s45 = sphi 0, %s43
    %s46 = sphi 0, %s45
    %s60 = sphi 0, %s46
    %s64 = sphi 0, %s64
    %s66 = sphi 0, %s64
    %s67 = sphi 0, %s66
    %s81 = sphi 0, %s67
    %s87 = sphi 0, %s89
    %s90 = sphi 0, %s87
    %s91 = sphi 0, %s90
    %s107 = sphi 0, %s91
  $region4: #{tpu_custom_call.1} parent=0 // loop_header_branch
    %12 = sbr.rel (%p10) target = $region8
  $region5: #{tpu_custom_call.1} parent=0 // loop_body
    %s14 = ssub.s32 %s9, 1
    %s15 = ssub.s32 %s9, 2
    %s16 = sadd.s32 %s9, 1
    %s17 = ssub.s32 %s9, %s16
    %p18 = scmp.eq.s32.totalorder %s17, 0
    %s20 = sadd.s32 %s19, 1
    %s21 = scalar_select %p18, %s19, %s20
    %p24 = pneg %p18
    %p25 = scmp.eq.s32.totalorder %s9, 1
    %p26 = por %p24, %p25
    %p27 = scmp.ne.s32.totalorder %s19, %s22
    %p28 = scmp.eq.s32.totalorder %s9, 0
    %p29 = por %p27, %p28
    %p30 = scmp.ne.s32.totalorder %s19, %s22
    %p31 = scmp.eq.s32.totalorder %s14, 1
    %p32 = por %p30, %p31
    %p33 = scmp.ne.s32.totalorder %s22, %s23
    %p34 = scmp.eq.s32.totalorder %s14, 0
    %p35 = por %p33, %p34
    %p36 = scmp.ne.s32.totalorder %s22, %s23
    %p37 = scmp.eq.s32.totalorder %s15, 1
    %p38 = por %p36, %p37
    %p40 = scmp.ne.s32.totalorder %s23, %s39
    %p41 = scmp.eq.s32.totalorder %s15, 0
    %p42 = por %p40, %p41
    %s44 = sadd.s32 %s43, 1
    %p47 = scmp.eq.s32.totalorder %s9, 1
    %p48 = scmp.ne.s32.totalorder %s43, %s45
    %p49 = scmp.eq.s32.totalorder %s9, 0
    %p50 = por %p48, %p49
    %p51 = scmp.ne.s32.totalorder %s43, %s45
    %p52 = scmp.eq.s32.totalorder %s14, 1
    %p53 = por %p51, %p52
    %p54 = scmp.ne.s32.totalorder %s45, %s46
    %p55 = scmp.eq.s32.totalorder %s14, 0
    %p56 = por %p54, %p55
    %p57 = scmp.ne.s32.totalorder %s45, %s46
    %p58 = scmp.eq.s32.totalorder %s15, 1
    %p59 = por %p57, %p58
    %p61 = scmp.ne.s32.totalorder %s46, %s60
    %p62 = scmp.eq.s32.totalorder %s15, 0
    %p63 = por %p61, %p62
    %s65 = sadd.s32 %s64, 1
    %p68 = scmp.eq.s32.totalorder %s9, 1
    %p69 = scmp.ne.s32.totalorder %s64, %s66
    %p70 = scmp.eq.s32.totalorder %s9, 0
    %p71 = por %p69, %p70
    %p72 = scmp.ne.s32.totalorder %s64, %s66
    %p73 = scmp.eq.s32.totalorder %s14, 1
    %p74 = por %p72, %p73
    %p75 = scmp.ne.s32.totalorder %s66, %s67
    %p76 = scmp.eq.s32.totalorder %s14, 0
    %p77 = por %p75, %p76
    %p78 = scmp.ne.s32.totalorder %s66, %s67
    %p79 = scmp.eq.s32.totalorder %s15, 1
    %p80 = por %p78, %p79
    %p82 = scmp.ne.s32.totalorder %s67, %s81
    %p83 = scmp.eq.s32.totalorder %s15, 0
    %p84 = por %p82, %p83
    %s85 = ssub.s32 %s9, %s16
    %p86 = scmp.eq.s32.totalorder %s85, 0
    %s88 = sadd.s32 %s87, 1
    %s89 = scalar_select %p86, %s87, %s88
    %p92 = pneg %p86
    %p93 = scmp.eq.s32.totalorder %s9, 1
    %p94 = por %p92, %p93
    %p95 = scmp.ne.s32.totalorder %s87, %s90
    %p96 = scmp.eq.s32.totalorder %s9, 0
    %p97 = por %p95, %p96
    %p98 = scmp.ne.s32.totalorder %s87, %s90
    %p99 = scmp.eq.s32.totalorder %s14, 1
    %p100 = por %p98, %p99
    %p101 = scmp.ne.s32.totalorder %s90, %s91
    %p102 = scmp.eq.s32.totalorder %s14, 0
    %p103 = por %p101, %p102
    %p104 = scmp.ne.s32.totalorder %s90, %s91
    %p105 = scmp.eq.s32.totalorder %s15, 1
    %p106 = por %p104, %p105
    %p108 = scmp.ne.s32.totalorder %s91, %s107
    %p109 = scmp.eq.s32.totalorder %s15, 0
    %p110 = por %p108, %p109
    %p111 = scmp.le.s32.totalorder 1, %s9
    %p112 = scmp.lt.s32.totalorder %s9, 3
    %p113 = pnand %p111, %p112
    %p114 = pneg %p113
    // Predicated region
    $region9: #{tpu_custom_call.1} parent=5 // pred_check
      _
    $region10: #{tpu_custom_call.1} parent=5 // pred_check_branch
      %116 = sbr.rel (%p113) target = $region12
    $region11: #{tpu_custom_call.1} parent=5 // pred_region
      %s117 = ssub.s32 %s9, 1
      // Predicated region
      $region13: #{tpu_custom_call.1} parent=11 // pred_check
        %p118 = pneg %p56
      $region14: #{tpu_custom_call.1} parent=11 // pred_check_branch
        %120 = sbr.rel (%p118) target = $region16
      $region15: #{tpu_custom_call.1} parent=11 // pred_region
        _
      $region16: #{tpu_custom_call.1} parent=11 // pred_fallthru
        _
      // Predicated region
      $region17: #{tpu_custom_call.1} parent=11 // pred_check
        %p121 = pneg %p77
      $region18: #{tpu_custom_call.1} parent=11 // pred_check_branch
        %123 = sbr.rel (%p121) target = $region20
      $region19: #{tpu_custom_call.1} parent=11 // pred_region
        _
      $region20: #{tpu_custom_call.1} parent=11 // pred_fallthru
        _
    $region12: #{tpu_custom_call.1} parent=5 // pred_fallthru
      _
    %p124 = scmp.lt.s32.totalorder %s9, 2
    // Predicated region
    $region21: #{tpu_custom_call.1} parent=5 // pred_check
      %p125 = pneg %p124
    $region22: #{tpu_custom_call.1} parent=5 // pred_check_branch
      %127 = sbr.rel (%p125) target = $region24
    $region23: #{tpu_custom_call.1} parent=5 // pred_region
      // Predicated region
      $region25: #{tpu_custom_call.1} parent=23 // pred_check
        %p128 = pneg %p29
      $region26: #{tpu_custom_call.1} parent=23 // pred_check_branch
        %130 = sbr.rel (%p128) target = $region28
      $region27: #{tpu_custom_call.1} parent=23 // pred_region
        %p131 = scmp.lt.s32.totalorder %s9, 1
        %s132 = scalar_select %p131, %s9, 1
        %s133 = smul.addr %s132, 33
        %s134 = smul.addr %s133, 8
        %s135 = scalar_lea.vmem %s0, %s134
      $region28: #{tpu_custom_call.1} parent=23 // pred_fallthru
        _
    $region24: #{tpu_custom_call.1} parent=5 // pred_fallthru
      _
    %p136 = scmp.le.s32.totalorder 1, %s9
    %p137 = scmp.lt.s32.totalorder %s9, 3
    %p138 = pnand %p136, %p137
    %p139 = pneg %p138
    // Predicated region
    $region29: #{tpu_custom_call.1} parent=5 // pred_check
      _
    $region30: #{tpu_custom_call.1} parent=5 // pred_check_branch
      %141 = sbr.rel (%p138) target = $region32
    $region31: #{tpu_custom_call.1} parent=5 // pred_region
      %s142 = ssub.s32 %s9, 1
      %p143 = scmp.lt.s32.totalorder %s14, 1
      %s144 = scalar_select %p143, %s14, 1
      %s145 = smul.addr %s144, 33
      %s146 = smul.addr %s145, 8
      %s147 = scalar_lea.vmem %s0, %s146
      %p148 = pneg %p35
      %p149 = pneg %p32
      %p150 = pneg %p56
      %p151 = pneg %p53
      %p152 = pneg %p77
      %p153 = pneg %p74
      %p154 = pneg %p103
      %p155 = pneg %p100
      %p156 = scmp.lt.s32.totalorder %s14, 1
      %s157 = scalar_select %p156, %s14, 1
      %s158 = smul.addr %s157, 14
      %s159 = smul.addr %s158, 8
      %s160 = scalar_lea.vmem %s3, %s159
      %p161 = scmp.lt.s32.totalorder %s14, 1
      %s162 = scalar_select %p161, %s14, 1
      %s163 = smul.addr %s162, 33
      %s164 = smul.addr %s163, 8
      %s165 = scalar_lea.vmem %s0, %s164
      %p166 = scmp.lt.s32.totalorder %s14, 1
      %s167 = scalar_select %p166, %s14, 1
      %s168 = smul.addr %s167, 14
      %s169 = smul.addr %s168, 8
      %s170 = scalar_lea.vmem %s3, %s169
      %v171 = vld [vmem:[%s2] sm:$0x1]
      %v173 = vlaneseq
      %v174 = vshrl.u32 %v173, 7
      %v175 = vsub.s32 0, %v174
      %v176 = vrot.slane %v171, %v175
      %v178 = vld [vmem:[%s165] sm:$0xff]
      %v179 = vld [vmem:[%s165 + $0x8] sm:$0xff]
      %v180 = vld [vmem:[%s165 + $0x10] sm:$0xff]
      %v181 = vld [vmem:[%s165 + $0x18] sm:$0xff]
      %v182 = vld [vmem:[%s165 + $0x20] sm:$0xff]
      %v183 = vld [vmem:[%s165 + $0x28] sm:$0xff]
      %v184 = vld [vmem:[%s165 + $0x30] sm:$0xff]
      %v185 = vld [vmem:[%s165 + $0x38] sm:$0xff]
      %v186 = vld [vmem:[%s165 + $0x40] sm:$0xff]
      %v187 = vld [vmem:[%s165 + $0x48] sm:$0xff]
      %v188 = vld [vmem:[%s165 + $0x50] sm:$0xff]
      %v189 = vld [vmem:[%s165 + $0x58] sm:$0xff]
      %v190 = vld [vmem:[%s165 + $0x60] sm:$0xff]
      %v191 = vld [vmem:[%s165 + $0x68] sm:$0xff]
      %v192 = vld [vmem:[%s165 + $0x70] sm:$0xff]
      %v193 = vld [vmem:[%s165 + $0x78] sm:$0xff]
      %v194 = vld [vmem:[%s165 + $0x80] sm:$0xff]
      %v195 = vld [vmem:[%s165 + $0x88] sm:$0xff]
      %v196 = vld [vmem:[%s165 + $0x90] sm:$0xff]
      %v197 = vld [vmem:[%s165 + $0x98] sm:$0xff]
      %v198 = vld [vmem:[%s165 + $0xa0] sm:$0xff]
      %v199 = vld [vmem:[%s165 + $0xa8] sm:$0xff]
      %v200 = vld [vmem:[%s165 + $0xb0] sm:$0xff]
      %v201 = vld [vmem:[%s165 + $0xb8] sm:$0xff]
      %v202 = vld [vmem:[%s165 + $0xc0] sm:$0xff]
      %v203 = vld [vmem:[%s165 + $0xc8] sm:$0xff]
      %v204 = vld [vmem:[%s165 + $0xd0] sm:$0xff]
      %v205 = vld [vmem:[%s165 + $0xd8] sm:$0xff]
      %v206 = vld [vmem:[%s1] sm:$0xf]
      %vm207 = vcmask 31744
      %v209 = vsel %vm207, %v178, 0
      %v212 = vsel %vm207, %v179, 0
      %v215 = vsel %vm207, %v180, 0
      %v218 = vsel %vm207, %v181, 0
      %v221 = vsel %vm207, %v182, 0
      %v224 = vsel %vm207, %v183, 0
      %v227 = vsel %vm207, %v184, 0
      %v230 = vsel %vm207, %v185, 0
      %v233 = vsel %vm207, %v186, 0
      %v236 = vsel %vm207, %v187, 0
      %v239 = vsel %vm207, %v188, 0
      %v242 = vsel %vm207, %v189, 0
      %v245 = vsel %vm207, %v190, 0
      %v248 = vsel %vm207, %v191, 0
      %v251 = vsel %vm207, %v192, 0
      %v254 = vsel %vm207, %v193, 0
      %v257 = vsel %vm207, %v194, 0
      %v260 = vsel %vm207, %v195, 0
      %v263 = vsel %vm207, %v196, 0
      %v266 = vsel %vm207, %v197, 0
      %v269 = vsel %vm207, %v198, 0
      %v272 = vsel %vm207, %v199, 0
      %v275 = vsel %vm207, %v200, 0
      %v278 = vsel %vm207, %v201, 0
      %v281 = vsel %vm207, %v202, 0
      %v284 = vsel %vm207, %v203, 0
      %v287 = vsel %vm207, %v204, 0
      %v290 = vsel %vm207, %v205, 0
      %vm292 = vcmask 1043456
      %v294 = vsel %vm292, %v206, 0
      %296 = vmatprep.subr.mxu0 0.0
      %297 = vmatpush1.msra.mxu0 %v294
      %298 = vmatprep.subr.mxu0 0.0
      %299 = vmatpush1.msra.mxu0 0.0
      %300 = vmatprep.subr.mxu0 0.0
      %301 = vmatpush1.msra.mxu0 0.0
      %302 = vmatprep.subr.mxu0 0.0
      %303 = vmatpush1.msra.mxu0 0.0
      %304 = vmatprep.subr.mxu0 0.0
      %305 = vmatpush1.msra.mxu0 0.0
      %306 = vmatprep.subr.mxu0 0.0
      %307 = vmatpush1.msra.mxu0 0.0
      %308 = vmatprep.subr.mxu0 0.0
      %309 = vmatpush1.msra.mxu0 0.0
      %310 = vmatprep.subr.mxu0 0.0
      %311 = vmatpush1.msra.mxu0 0.0
      %312 = vmatprep.subr.mxu0 0.0
      %313 = vmatpush1.msra.mxu0 0.0
      %314 = vmatprep.subr.mxu0 0.0
      %315 = vmatpush1.msra.mxu0 0.0
      %316 = vmatprep.subr.mxu0 0.0
      %317 = vmatpush1.msra.mxu0 0.0
      %318 = vmatprep.subr.mxu0 0.0
      %319 = vmatpush1.msra.mxu0 0.0
      %320 = vmatprep.subr.mxu0 0.0
      %321 = vmatpush1.msra.mxu0 0.0
      %322 = vmatprep.subr.mxu0 0.0
      %323 = vmatpush1.msra.mxu0 0.0
      %324 = vmatprep.subr.mxu0 0.0
      %325 = vmatpush1.msra.mxu0 0.0
      %326 = vmatprep.subr.mxu0 0.0
      %327 = vmatpush1.msra.mxu0 0.0
      %328 = vmatprep.subr.mxu0 0.0
      %329 = vmatpush1.msra.mxu0 0.0
      %330 = vmatprep.subr.mxu0 0.0
      %331 = vmatpush1.msra.mxu0 0.0
      %332 = vmatprep.subr.mxu0 0.0
      %333 = vmatpush1.msra.mxu0 0.0
      %334 = vmatprep.subr.mxu0 0.0
      %335 = vmatpush1.msra.mxu0 0.0
      %336 = vmatprep.subr.mxu0 0.0
      %337 = vmatpush1.msra.mxu0 0.0
      %338 = vmatprep.subr.mxu0 0.0
      %339 = vmatpush1.msra.mxu0 0.0
      %340 = vmatprep.subr.mxu0 0.0
      %341 = vmatpush1.msra.mxu0 0.0
      %342 = vmatprep.subr.mxu0 0.0
      %343 = vmatpush1.msra.mxu0 0.0
      %344 = vmatprep.subr.mxu0 0.0
      %345 = vmatpush1.msra.mxu0 0.0
      %346 = vmatprep.subr.mxu0 0.0
      %347 = vmatpush1.msra.mxu0 0.0
      %348 = vmatprep.subr.mxu0 0.0
      %349 = vmatpush1.msra.mxu0 0.0
      %350 = vmatprep.subr.mxu0 0.0
      %351 = vmatpush1.msra.mxu0 0.0
      %352 = vmatprep.subr.mxu0 0.0
      %353 = vmatpush1.msra.mxu0 0.0
      %354 = vmatprep.subr.mxu0 0.0
      %355 = vmatpush1.msra.mxu0 0.0
      %356 = vmatprep.subr.mxu0 0.0
      %357 = vmatpush1.msra.mxu0 0.0
      %358 = vmatprep.subr.mxu0 0.0
      %359 = vmatpush1.msra.mxu0 0.0
      %360 = vmatprep.mubr.f32.mxu0 0.0
      %361 = vmatmul.mubr.f32.gmra.mrb[0].mxu0 %v209
      %v362 = vpop.f32.mrb[0].mxu0
      %v363 = vadd.f32 0.0, %v362
      %v364 = vpop.f32.mrb[0].mxu0
      %365 = vmatprep.mubr.f32.mxu0 0.0
      %366 = vmatmul.mubr.f32.gmra.mrb[0].mxu0 %v212
      %v367 = vpop.f32.mrb[0].mxu0
      %v368 = vadd.f32 0.0, %v367
      %v369 = vpop.f32.mrb[0].mxu0
      %370 = vmatprep.mubr.f32.mxu0 0.0
      %371 = vmatmul.mubr.f32.gmra.mrb[0].mxu0 %v215
      %v372 = vpop.f32.mrb[0].mxu0
      %v373 = vadd.f32 0.0, %v372
      %v374 = vpop.f32.mrb[0].mxu0
      %375 = vmatprep.mubr.f32.mxu0 0.0
      %376 = vmatmul.mubr.f32.gmra.mrb[0].mxu0 %v218
      %v377 = vpop.f32.mrb[0].mxu0
      %v378 = vadd.f32 0.0, %v377
      %v379 = vpop.f32.mrb[0].mxu0
      %380 = vmatprep.mubr.f32.mxu0 0.0
      %381 = vmatmul.mubr.f32.gmra.mrb[0].mxu0 %v221
      %v382 = vpop.f32.mrb[0].mxu0
      %v383 = vadd.f32 0.0, %v382
      %v384 = vpop.f32.mrb[0].mxu0
      %385 = vmatprep.mubr.f32.mxu0 0.0
      %386 = vmatmul.mubr.f32.gmra.mrb[0].mxu0 %v224
      %v387 = vpop.f32.mrb[0].mxu0
      %v388 = vadd.f32 0.0, %v387
      %v389 = vpop.f32.mrb[0].mxu0
      %390 = vmatprep.mubr.f32.mxu0 0.0
      %391 = vmatmul.mubr.f32.gmra.mrb[0].mxu0 %v227
      %v392 = vpop.f32.mrb[0].mxu0
      %v393 = vadd.f32 0.0, %v392
      %v394 = vpop.f32.mrb[0].mxu0
      %395 = vmatprep.mubr.f32.mxu0 0.0
      %396 = vmatmul.mubr.f32.gmra.mrb[0].mxu0 %v230
      %v397 = vpop.f32.mrb[0].mxu0
      %v398 = vadd.f32 0.0, %v397
      %v399 = vpop.f32.mrb[0].mxu0
      %400 = vmatprep.mubr.f32.mxu0 0.0
      %401 = vmatmul.mubr.f32.gmra.mrb[0].mxu0 %v233
      %v402 = vpop.f32.mrb[0].mxu0
      %v403 = vadd.f32 0.0, %v402
      %v404 = vpop.f32.mrb[0].mxu0
      %405 = vmatprep.mubr.f32.mxu0 0.0
      %406 = vmatmul.mubr.f32.gmra.mrb[0].mxu0 %v236
      %v407 = vpop.f32.mrb[0].mxu0
      %v408 = vadd.f32 0.0, %v407
      %v409 = vpop.f32.mrb[0].mxu0
      %410 = vmatprep.mubr.f32.mxu0 0.0
      %411 = vmatmul.mubr.f32.gmra.mrb[0].mxu0 %v239
      %v412 = vpop.f32.mrb[0].mxu0
      %v413 = vadd.f32 0.0, %v412
      %v414 = vpop.f32.mrb[0].mxu0
      %415 = vmatprep.mubr.f32.mxu0 0.0
      %416 = vmatmul.mubr.f32.gmra.mrb[0].mxu0 %v242
      %v417 = vpop.f32.mrb[0].mxu0
      %v418 = vadd.f32 0.0, %v417
      %v419 = vpop.f32.mrb[0].mxu0
      %420 = vmatprep.mubr.f32.mxu0 0.0
      %421 = vmatmul.mubr.f32.gmra.mrb[0].mxu0 %v245
      %v422 = vpop.f32.mrb[0].mxu0
      %v423 = vadd.f32 0.0, %v422
      %v424 = vpop.f32.mrb[0].mxu0
      %425 = vmatprep.mubr.f32.mxu0 0.0
      %426 = vmatmul.mubr.f32.gmra.mrb[0].mxu0 %v248
      %v427 = vpop.f32.mrb[0].mxu0
      %v428 = vadd.f32 0.0, %v427
      %v429 = vpop.f32.mrb[0].mxu0
      %430 = vmatprep.mubr.f32.mxu0 0.0
      %431 = vmatmul.mubr.f32.gmra.mrb[0].mxu0 %v251
      %v432 = vpop.f32.mrb[0].mxu0
      %v433 = vadd.f32 0.0, %v432
      %v434 = vpop.f32.mrb[0].mxu0
      %435 = vmatprep.mubr.f32.mxu0 0.0
      %436 = vmatmul.mubr.f32.gmra.mrb[0].mxu0 %v254
      %v437 = vpop.f32.mrb[0].mxu0
      %v438 = vadd.f32 0.0, %v437
      %v439 = vpop.f32.mrb[0].mxu0
      %440 = vmatprep.mubr.f32.mxu0 0.0
      %441 = vmatmul.mubr.f32.gmra.mrb[0].mxu0 %v257
      %v442 = vpop.f32.mrb[0].mxu0
      %v443 = vadd.f32 0.0, %v442
      %v444 = vpop.f32.mrb[0].mxu0
      %445 = vmatprep.mubr.f32.mxu0 0.0
      %446 = vmatmul.mubr.f32.gmra.mrb[0].mxu0 %v260
      %v447 = vpop.f32.mrb[0].mxu0
      %v448 = vadd.f32 0.0, %v447
      %v449 = vpop.f32.mrb[0].mxu0
      %450 = vmatprep.mubr.f32.mxu0 0.0
      %451 = vmatmul.mubr.f32.gmra.mrb[0].mxu0 %v263
      %v452 = vpop.f32.mrb[0].mxu0
      %v453 = vadd.f32 0.0, %v452
      %v454 = vpop.f32.mrb[0].mxu0
      %455 = vmatprep.mubr.f32.mxu0 0.0
      %456 = vmatmul.mubr.f32.gmra.mrb[0].mxu0 %v266
      %v457 = vpop.f32.mrb[0].mxu0
      %v458 = vadd.f32 0.0, %v457
      %v459 = vpop.f32.mrb[0].mxu0
      %460 = vmatprep.mubr.f32.mxu0 0.0
      %461 = vmatmul.mubr.f32.gmra.mrb[0].mxu0 %v269
      %v462 = vpop.f32.mrb[0].mxu0
      %v463 = vadd.f32 0.0, %v462
      %v464 = vpop.f32.mrb[0].mxu0
      %465 = vmatprep.mubr.f32.mxu0 0.0
      %466 = vmatmul.mubr.f32.gmra.mrb[0].mxu0 %v272
      %v467 = vpop.f32.mrb[0].mxu0
      %v468 = vadd.f32 0.0, %v467
      %v469 = vpop.f32.mrb[0].mxu0
      %470 = vmatprep.mubr.f32.mxu0 0.0
      %471 = vmatmul.mubr.f32.gmra.mrb[0].mxu0 %v275
      %v472 = vpop.f32.mrb[0].mxu0
      %v473 = vadd.f32 0.0, %v472
      %v474 = vpop.f32.mrb[0].mxu0
      %475 = vmatprep.mubr.f32.mxu0 0.0
      %476 = vmatmul.mubr.f32.gmra.mrb[0].mxu0 %v278
      %v477 = vpop.f32.mrb[0].mxu0
      %v478 = vadd.f32 0.0, %v477
      %v479 = vpop.f32.mrb[0].mxu0
      %480 = vmatprep.mubr.f32.mxu0 0.0
      %481 = vmatmul.mubr.f32.gmra.mrb[0].mxu0 %v281
      %v482 = vpop.f32.mrb[0].mxu0
      %v483 = vadd.f32 0.0, %v482
      %v484 = vpop.f32.mrb[0].mxu0
      %485 = vmatprep.mubr.f32.mxu0 0.0
      %486 = vmatmul.mubr.f32.gmra.mrb[0].mxu0 %v284
      %v487 = vpop.f32.mrb[0].mxu0
      %v488 = vadd.f32 0.0, %v487
      %v489 = vpop.f32.mrb[0].mxu0
      %490 = vmatprep.mubr.f32.mxu0 0.0
      %491 = vmatmul.mubr.f32.gmra.mrb[0].mxu0 %v287
      %v492 = vpop.f32.mrb[0].mxu0
      %v493 = vadd.f32 0.0, %v492
      %v494 = vpop.f32.mrb[0].mxu0
      %495 = vmatprep.mubr.f32.mxu0 0.0
      %496 = vmatmul.mubr.f32.gmra.mrb[0].mxu0 %v290
      %v497 = vpop.f32.mrb[0].mxu0
      %v498 = vadd.f32 0.0, %v497
      %v499 = vpop.f32.mrb[0].mxu0
      %500 = vdwg.mxu0
      %v501 = vadd.f32 %v176, %v363
      %v502 = vadd.f32 %v176, %v368
      %v503 = vadd.f32 %v176, %v373
      %v504 = vadd.f32 %v176, %v378
      %v505 = vadd.f32 %v176, %v383
      %v506 = vadd.f32 %v176, %v388
      %v507 = vadd.f32 %v176, %v393
      %v508 = vadd.f32 %v176, %v398
      %v509 = vadd.f32 %v176, %v403
      %v510 = vadd.f32 %v176, %v408
      %v511 = vadd.f32 %v176, %v413
      %v512 = vadd.f32 %v176, %v418
      %v513 = vadd.f32 %v176, %v423
      %v514 = vadd.f32 %v176, %v428
      %v515 = vadd.f32 %v176, %v433
      %v516 = vadd.f32 %v176, %v438
      %v517 = vadd.f32 %v176, %v443
      %v518 = vadd.f32 %v176, %v448
      %v519 = vadd.f32 %v176, %v453
      %v520 = vadd.f32 %v176, %v458
      %v521 = vadd.f32 %v176, %v463
      %v522 = vadd.f32 %v176, %v468
      %v523 = vadd.f32 %v176, %v473
      %v524 = vadd.f32 %v176, %v478
      %v525 = vadd.f32 %v176, %v483
      %v526 = vadd.f32 %v176, %v488
      %v527 = vadd.f32 %v176, %v493
      %v528 = vadd.f32 %v176, %v498
      %v529 = vld [vmem:[%s165 + $0x1] sm:$0xff]
      %v530 = vld [vmem:[%s165 + $0x9] sm:$0xff]
      %v531 = vld [vmem:[%s165 + $0x11] sm:$0xff]
      %v532 = vld [vmem:[%s165 + $0x19] sm:$0xff]
      %v533 = vld [vmem:[%s165 + $0x21] sm:$0xff]
      %v534 = vld [vmem:[%s165 + $0x29] sm:$0xff]
      %v535 = vld [vmem:[%s165 + $0x31] sm:$0xff]
      %v536 = vld [vmem:[%s165 + $0x39] sm:$0xff]
      %v537 = vld [vmem:[%s165 + $0x41] sm:$0xff]
      %v538 = vld [vmem:[%s165 + $0x49] sm:$0xff]
      %v539 = vld [vmem:[%s165 + $0x51] sm:$0xff]
      %v540 = vld [vmem:[%s165 + $0x59] sm:$0xff]
      %v541 = vld [vmem:[%s165 + $0x61] sm:$0xff]
      %v542 = vld [vmem:[%s165 + $0x69] sm:$0xff]
      %v543 = vld [vmem:[%s165 + $0x71] sm:$0xff]
      %v544 = vld [vmem:[%s165 + $0x79] sm:$0xff]
      %v545 = vld [vmem:[%s165 + $0x81] sm:$0xff]
      %v546 = vld [vmem:[%s165 + $0x89] sm:$0xff]
      %v547 = vld [vmem:[%s165 + $0x91] sm:$0xff]
      %v548 = vld [vmem:[%s165 + $0x99] sm:$0xff]
      %v549 = vld [vmem:[%s165 + $0xa1] sm:$0xff]
      %v550 = vld [vmem:[%s165 + $0xa9] sm:$0xff]
      %v551 = vld [vmem:[%s165 + $0xb1] sm:$0xff]
      %v552 = vld [vmem:[%s165 + $0xb9] sm:$0xff]
      %v553 = vld [vmem:[%s165 + $0xc1] sm:$0xff]
      %v554 = vld [vmem:[%s165 + $0xc9] sm:$0xff]
      %v555 = vld [vmem:[%s165 + $0xd1] sm:$0xff]
      %v556 = vld [vmem:[%s165 + $0xd9] sm:$0xff]
      %s557 = scalar_lea.vmem %s1, 4
      %v558 = vld [vmem:[%s557] sm:$0xf]
      %v560 = vsel %vm207, %v529, 0
      %v563 = vsel %vm207, %v530, 0
      %v566 = vsel %vm207, %v531, 0
      %v569 = vsel %vm207, %v532, 0
      %v572 = vsel %vm207, %v533, 0
      %v575 = vsel %vm207, %v534, 0
      %v578 = vsel %vm207, %v535, 0
      %v581 = vsel %vm207, %v536, 0
      %v584 = vsel %vm207, %v537, 0
      %v587 = vsel %vm207, %v538, 0
      %v590 = vsel %vm207, %v539, 0
      %v593 = vsel %vm207, %v540, 0
      %v596 = vsel %vm207, %v541, 0
      %v599 = vsel %vm207, %v542, 0
      %v602 = vsel %vm207, %v543, 0
      %v605 = vsel %vm207, %v544, 0
      %v608 = vsel %vm207, %v545, 0
      %v611 = vsel %vm207, %v546, 0
      %v614 = vsel %vm207, %v547, 0
      %v617 = vsel %vm207, %v548, 0
      %v620 = vsel %vm207, %v549, 0
      %v623 = vsel %vm207, %v550, 0
      %v626 = vsel %vm207, %v551, 0
      %v629 = vsel %vm207, %v552, 0
      %v632 = vsel %vm207, %v553, 0
      %v635 = vsel %vm207, %v554, 0
      %v638 = vsel %vm207, %v555, 0
      %v641 = vsel %vm207, %v556, 0
      %v644 = vsel %vm292, %v558, 0
      %646 = vmatprep.subr.mxu0 0.0
      %647 = vmatpush1.msra.mxu0 %v644
      %648 = vmatprep.subr.mxu0 0.0
      %649 = vmatpush1.msra.mxu0 0.0
      %650 = vmatprep.subr.mxu0 0.0
      %651 = vmatpush1.msra.mxu0 0.0
      %652 = vmatprep.subr.mxu0 0.0
      %653 = vmatpush1.msra.mxu0 0.0
      %654 = vmatprep.subr.mxu0 0.0
      %655 = vmatpush1.msra.mxu0 0.0
      %656 = vmatprep.subr.mxu0 0.0
      %657 = vmatpush1.msra.mxu0 0.0
      %658 = vmatprep.subr.mxu0 0.0
      %659 = vmatpush1.msra.mxu0 0.0
      %660 = vmatprep.subr.mxu0 0.0
      %661 = vmatpush1.msra.mxu0 0.0
      %662 = vmatprep.subr.mxu0 0.0
      %663 = vmatpush1.msra.mxu0 0.0
      %664 = vmatprep.subr.mxu0 0.0
      %665 = vmatpush1.msra.mxu0 0.0
      %666 = vmatprep.subr.mxu0 0.0
      %667 = vmatpush1.msra.mxu0 0.0
      %668 = vmatprep.subr.mxu0 0.0
      %669 = vmatpush1.msra.mxu0 0.0
      %670 = vmatprep.subr.mxu0 0.0
      %671 = vmatpush1.msra.mxu0 0.0
      %672 = vmatprep.subr.mxu0 0.0
      %673 = vmatpush1.msra.mxu0 0.0
      %674 = vmatprep.subr.mxu0 0.0
      %675 = vmatpush1.msra.mxu0 0.0
      %676 = vmatprep.subr.mxu0 0.0
      %677 = vmatpush1.msra.mxu0 0.0
      %678 = vmatprep.subr.mxu0 0.0
      %679 = vmatpush1.msra.mxu0 0.0
      %680 = vmatprep.subr.mxu0 0.0
      %681 = vmatpush1.msra.mxu0 0.0
      %682 = vmatprep.subr.mxu0 0.0
      %683 = vmatpush1.msra.mxu0 0.0
      %684 = vmatprep.subr.mxu0 0.0
      %685 = vmatpush1.msra.mxu0 0.0
      %686 = vmatprep.subr.mxu0 0.0
      %687 = vmatpush1.msra.mxu0 0.0
      %688 = vmatprep.subr.mxu0 0.0
      %689 = vmatpush1.msra.mxu0 0.0
      %690 = vmatprep.subr.mxu0 0.0
      %691 = vmatpush1.msra.mxu0 0.0
      %692 = vmatprep.subr.mxu0 0.0
      %693 = vmatpush1.msra.mxu0 0.0
      %694 = vmatprep.subr.mxu0 0.0
      %695 = vmatpush1.msra.mxu0 0.0
      %696 = vmatprep.subr.mxu0 0.0
      %697 = vmatpush1.msra.mxu0 0.0
      %698 = vmatprep.subr.mxu0 0.0
      %699 = vmatpush1.msra.mxu0 0.0
      %700 = vmatprep.subr.mxu0 0.0
      %701 = vmatpush1.msra.mxu0 0.0
      %702 = vmatprep.subr.mxu0 0.0
      %703 = vmatpush1.msra.mxu0 0.0
      %704 = vmatprep.subr.mxu0 0.0
      %705 = vmatpush1.msra.mxu0 0.0
      %706 = vmatprep.subr.mxu0 0.0
      %707 = vmatpush1.msra.mxu0 0.0
      %708 = vmatprep.subr.mxu0 0.0
      %709 = vmatpush1.msra.mxu0 0.0
      %710 = vmatprep.mubr.f32.mxu0 0.0
      %711 = vmatmul.mubr.f32.gmra.mrb[0].mxu0 %v560
      %v712 = vpop.f32.mrb[0].mxu0
      %v713 = vadd.f32 0.0, %v712
      %v714 = vpop.f32.mrb[0].mxu0
      %715 = vmatprep.mubr.f32.mxu0 0.0
      %716 = vmatmul.mubr.f32.gmra.mrb[0].mxu0 %v563
      %v717 = vpop.f32.mrb[0].mxu0
      %v718 = vadd.f32 0.0, %v717
      %v719 = vpop.f32.mrb[0].mxu0
      %720 = vmatprep.mubr.f32.mxu0 0.0
      %721 = vmatmul.mubr.f32.gmra.mrb[0].mxu0 %v566
      %v722 = vpop.f32.mrb[0].mxu0
      %v723 = vadd.f32 0.0, %v722
      %v724 = vpop.f32.mrb[0].mxu0
      %725 = vmatprep.mubr.f32.mxu0 0.0
      %726 = vmatmul.mubr.f32.gmra.mrb[0].mxu0 %v569
      %v727 = vpop.f32.mrb[0].mxu0
      %v728 = vadd.f32 0.0, %v727
      %v729 = vpop.f32.mrb[0].mxu0
      %730 = vmatprep.mubr.f32.mxu0 0.0
      %731 = vmatmul.mubr.f32.gmra.mrb[0].mxu0 %v572
      %v732 = vpop.f32.mrb[0].mxu0
      %v733 = vadd.f32 0.0, %v732
      %v734 = vpop.f32.mrb[0].mxu0
      %735 = vmatprep.mubr.f32.mxu0 0.0
      %736 = vmatmul.mubr.f32.gmra.mrb[0].mxu0 %v575
      %v737 = vpop.f32.mrb[0].mxu0
      %v738 = vadd.f32 0.0, %v737
      %v739 = vpop.f32.mrb[0].mxu0
      %740 = vmatprep.mubr.f32.mxu0 0.0
      %741 = vmatmul.mubr.f32.gmra.mrb[0].mxu0 %v578
      %v742 = vpop.f32.mrb[0].mxu0
      %v743 = vadd.f32 0.0, %v742
      %v744 = vpop.f32.mrb[0].mxu0
      %745 = vmatprep.mubr.f32.mxu0 0.0
      %746 = vmatmul.mubr.f32.gmra.mrb[0].mxu0 %v581
      %v747 = vpop.f32.mrb[0].mxu0
      %v748 = vadd.f32 0.0, %v747
      %v749 = vpop.f32.mrb[0].mxu0
      %750 = vmatprep.mubr.f32.mxu0 0.0
      %751 = vmatmul.mubr.f32.gmra.mrb[0].mxu0 %v584
      %v752 = vpop.f32.mrb[0].mxu0
      %v753 = vadd.f32 0.0, %v752
      %v754 = vpop.f32.mrb[0].mxu0
      %755 = vmatprep.mubr.f32.mxu0 0.0
      %756 = vmatmul.mubr.f32.gmra.mrb[0].mxu0 %v587
      %v757 = vpop.f32.mrb[0].mxu0
      %v758 = vadd.f32 0.0, %v757
      %v759 = vpop.f32.mrb[0].mxu0
      %760 = vmatprep.mubr.f32.mxu0 0.0
      %761 = vmatmul.mubr.f32.gmra.mrb[0].mxu0 %v590
      %v762 = vpop.f32.mrb[0].mxu0
      %v763 = vadd.f32 0.0, %v762
      %v764 = vpop.f32.mrb[0].mxu0
      %765 = vmatprep.mubr.f32.mxu0 0.0
      %766 = vmatmul.mubr.f32.gmra.mrb[0].mxu0 %v593
      %v767 = vpop.f32.mrb[0].mxu0
      %v768 = vadd.f32 0.0, %v767
      %v769 = vpop.f32.mrb[0].mxu0
      %770 = vmatprep.mubr.f32.mxu0 0.0
      %771 = vmatmul.mubr.f32.gmra.mrb[0].mxu0 %v596
      %v772 = vpop.f32.mrb[0].mxu0
      %v773 = vadd.f32 0.0, %v772
      %v774 = vpop.f32.mrb[0].mxu0
      %775 = vmatprep.mubr.f32.mxu0 0.0
      %776 = vmatmul.mubr.f32.gmra.mrb[0].mxu0 %v599
      %v777 = vpop.f32.mrb[0].mxu0
      %v778 = vadd.f32 0.0, %v777
      %v779 = vpop.f32.mrb[0].mxu0
      %780 = vmatprep.mubr.f32.mxu0 0.0
      %781 = vmatmul.mubr.f32.gmra.mrb[0].mxu0 %v602
      %v782 = vpop.f32.mrb[0].mxu0
      %v783 = vadd.f32 0.0, %v782
      %v784 = vpop.f32.mrb[0].mxu0
      %785 = vmatprep.mubr.f32.mxu0 0.0
      %786 = vmatmul.mubr.f32.gmra.mrb[0].mxu0 %v605
      %v787 = vpop.f32.mrb[0].mxu0
      %v788 = vadd.f32 0.0, %v787
      %v789 = vpop.f32.mrb[0].mxu0
      %790 = vmatprep.mubr.f32.mxu0 0.0
      %791 = vmatmul.mubr.f32.gmra.mrb[0].mxu0 %v608
      %v792 = vpop.f32.mrb[0].mxu0
      %v793 = vadd.f32 0.0, %v792
      %v794 = vpop.f32.mrb[0].mxu0
      %795 = vmatprep.mubr.f32.mxu0 0.0
      %796 = vmatmul.mubr.f32.gmra.mrb[0].mxu0 %v611
      %v797 = vpop.f32.mrb[0].mxu0
      %v798 = vadd.f32 0.0, %v797
      %v799 = vpop.f32.mrb[0].mxu0
      %800 = vmatprep.mubr.f32.mxu0 0.0
      %801 = vmatmul.mubr.f32.gmra.mrb[0].mxu0 %v614
      %v802 = vpop.f32.mrb[0].mxu0
      %v803 = vadd.f32 0.0, %v802
      %v804 = vpop.f32.mrb[0].mxu0
      %805 = vmatprep.mubr.f32.mxu0 0.0
      %806 = vmatmul.mubr.f32.gmra.mrb[0].mxu0 %v617
      %v807 = vpop.f32.mrb[0].mxu0
      %v808 = vadd.f32 0.0, %v807
      %v809 = vpop.f32.mrb[0].mxu0
      %810 = vmatprep.mubr.f32.mxu0 0.0
      %811 = vmatmul.mubr.f32.gmra.mrb[0].mxu0 %v620
      %v812 = vpop.f32.mrb[0].mxu0
      %v813 = vadd.f32 0.0, %v812
      %v814 = vpop.f32.mrb[0].mxu0
      %815 = vmatprep.mubr.f32.mxu0 0.0
      %816 = vmatmul.mubr.f32.gmra.mrb[0].mxu0 %v623
      %v817 = vpop.f32.mrb[0].mxu0
      %v818 = vadd.f32 0.0, %v817
      %v819 = vpop.f32.mrb[0].mxu0
      %820 = vmatprep.mubr.f32.mxu0 0.0
      %821 = vmatmul.mubr.f32.gmra.mrb[0].mxu0 %v626
      %v822 = vpop.f32.mrb[0].mxu0
      %v823 = vadd.f32 0.0, %v822
      %v824 = vpop.f32.mrb[0].mxu0
      %825 = vmatprep.mubr.f32.mxu0 0.0
      %826 = vmatmul.mubr.f32.gmra.mrb[0].mxu0 %v629
      %v827 = vpop.f32.mrb[0].mxu0
      %v828 = vadd.f32 0.0, %v827
      %v829 = vpop.f32.mrb[0].mxu0
      %830 = vmatprep.mubr.f32.mxu0 0.0
      %831 = vmatmul.mubr.f32.gmra.mrb[0].mxu0 %v632
      %v832 = vpop.f32.mrb[0].mxu0
      %v833 = vadd.f32 0.0, %v832
      %v834 = vpop.f32.mrb[0].mxu0
      %835 = vmatprep.mubr.f32.mxu0 0.0
      %836 = vmatmul.mubr.f32.gmra.mrb[0].mxu0 %v635
      %v837 = vpop.f32.mrb[0].mxu0
      %v838 = vadd.f32 0.0, %v837
      %v839 = vpop.f32.mrb[0].mxu0
      %840 = vmatprep.mubr.f32.mxu0 0.0
      %841 = vmatmul.mubr.f32.gmra.mrb[0].mxu0 %v638
      %v842 = vpop.f32.mrb[0].mxu0
      %v843 = vadd.f32 0.0, %v842
      %v844 = vpop.f32.mrb[0].mxu0
      %845 = vmatprep.mubr.f32.mxu0 0.0
      %846 = vmatmul.mubr.f32.gmra.mrb[0].mxu0 %v641
      %v847 = vpop.f32.mrb[0].mxu0
      %v848 = vadd.f32 0.0, %v847
      %v849 = vpop.f32.mrb[0].mxu0
      %850 = vdwg.mxu0
      %v851 = vadd.f32 %v501, %v713
      %v852 = vadd.f32 %v502, %v718
      %v853 = vadd.f32 %v503, %v723
      %v854 = vadd.f32 %v504, %v728
      %v855 = vadd.f32 %v505, %v733
      %v856 = vadd.f32 %v506, %v738
      %v857 = vadd.f32 %v507, %v743
      %v858 = vadd.f32 %v508, %v748
      %v859 = vadd.f32 %v509, %v753
      %v860 = vadd.f32 %v510, %v758
      %v861 = vadd.f32 %v511, %v763
      %v862 = vadd.f32 %v512, %v768
      %v863 = vadd.f32 %v513, %v773
      %v864 = vadd.f32 %v514, %v778
      %v865 = vadd.f32 %v515, %v783
      %v866 = vadd.f32 %v516, %v788
      %v867 = vadd.f32 %v517, %v793
      %v868 = vadd.f32 %v518, %v798
      %v869 = vadd.f32 %v519, %v803
      %v870 = vadd.f32 %v520, %v808
      %v871 = vadd.f32 %v521, %v813
      %v872 = vadd.f32 %v522, %v818
      %v873 = vadd.f32 %v523, %v823
      %v874 = vadd.f32 %v524, %v828
      %v875 = vadd.f32 %v525, %v833
      %v876 = vadd.f32 %v526, %v838
      %v877 = vadd.f32 %v527, %v843
      %v878 = vadd.f32 %v528, %v848
      %v879 = vld [vmem:[%s165 + $0x2] sm:$0xff]
      %v880 = vld [vmem:[%s165 + $0xa] sm:$0xff]
      %v881 = vld [vmem:[%s165 + $0x12] sm:$0xff]
      %v882 = vld [vmem:[%s165 + $0x1a] sm:$0xff]
      %v883 = vld [vmem:[%s165 + $0x22] sm:$0xff]
      %v884 = vld [vmem:[%s165 + $0x2a] sm:$0xff]
      %v885 = vld [vmem:[%s165 + $0x32] sm:$0xff]
      %v886 = vld [vmem:[%s165 + $0x3a] sm:$0xff]
      %v887 = vld [vmem:[%s165 + $0x42] sm:$0xff]
      %v888 = vld [vmem:[%s165 + $0x4a] sm:$0xff]
      %v889 = vld [vmem:[%s165 + $0x52] sm:$0xff]
      %v890 = vld [vmem:[%s165 + $0x5a] sm:$0xff]
      %v891 = vld [vmem:[%s165 + $0x62] sm:$0xff]
      %v892 = vld [vmem:[%s165 + $0x6a] sm:$0xff]
      %v893 = vld [vmem:[%s165 + $0x72] sm:$0xff]
      %v894 = vld [vmem:[%s165 + $0x7a] sm:$0xff]
      %v895 = vld [vmem:[%s165 + $0x82] sm:$0xff]
      %v896 = vld [vmem:[%s165 + $0x8a] sm:$0xff]
      %v897 = vld [vmem:[%s165 + $0x92] sm:$0xff]
      %v898 = vld [vmem:[%s165 + $0x9a] sm:$0xff]
      %v899 = vld [vmem:[%s165 + $0xa2] sm:$0xff]
      %v900 = vld [vmem:[%s165 + $0xaa] sm:$0xff]
      %v901 = vld [vmem:[%s165 + $0xb2] sm:$0xff]
      %v902 = vld [vmem:[%s165 + $0xba] sm:$0xff]
      %v903 = vld [vmem:[%s165 + $0xc2] sm:$0xff]
      %v904 = vld [vmem:[%s165 + $0xca] sm:$0xff]
      %v905 = vld [vmem:[%s165 + $0xd2] sm:$0xff]
      %v906 = vld [vmem:[%s165 + $0xda] sm:$0xff]
      %s907 = scalar_lea.vmem %s1, 8
      %v908 = vld [vmem:[%s907] sm:$0xf]
      %v910 = vsel %vm207, %v879, 0
      %v913 = vsel %vm207, %v880, 0
      %v916 = vsel %vm207, %v881, 0
      %v919 = vsel %vm207, %v882, 0
      %v922 = vsel %vm207, %v883, 0
      %v925 = vsel %vm207, %v884, 0
      %v928 = vsel %vm207, %v885, 0
      %v931 = vsel %vm207, %v886, 0
      %v934 = vsel %vm207, %v887, 0
      %v937 = vsel %vm207, %v888, 0
      %v940 = vsel %vm207, %v889, 0
      %v943 = vsel %vm207, %v890, 0
      %v946 = vsel %vm207, %v891, 0
      %v949 = vsel %vm207, %v892, 0
      %v952 = vsel %vm207, %v893, 0
      %v955 = vsel %vm207, %v894, 0
      %v958 = vsel %vm207, %v895, 0
      %v961 = vsel %vm207, %v896, 0
      %v964 = vsel %vm207, %v897, 0
      %v967 = vsel %vm207, %v898, 0
      %v970 = vsel %vm207, %v899, 0
      %v973 = vsel %vm207, %v900, 0
      %v976 = vsel %vm207, %v901, 0
      %v979 = vsel %vm207, %v902, 0
      %v982 = vsel %vm207, %v903, 0
      %v985 = vsel %vm207, %v904, 0
      %v988 = vsel %vm207, %v905, 0
      %v991 = vsel %vm207, %v906, 0
      %v994 = vsel %vm292, %v908, 0
      %996 = vmatprep.subr.mxu0 0.0
      %997 = vmatpush1.msra.mxu0 %v994
      %998 = vmatprep.subr.mxu0 0.0
      %999 = vmatpush1.msra.mxu0 0.0
      %1000 = vmatprep.subr.mxu0 0.0
      %1001 = vmatpush1.msra.mxu0 0.0
      %1002 = vmatprep.subr.mxu0 0.0
      %1003 = vmatpush1.msra.mxu0 0.0
      %1004 = vmatprep.subr.mxu0 0.0
      %1005 = vmatpush1.msra.mxu0 0.0
      %1006 = vmatprep.subr.mxu0 0.0
      %1007 = vmatpush1.msra.mxu0 0.0
      %1008 = vmatprep.subr.mxu0 0.0
      %1009 = vmatpush1.msra.mxu0 0.0
      %1010 = vmatprep.subr.mxu0 0.0
      %1011 = vmatpush1.msra.mxu0 0.0
      %1012 = vmatprep.subr.mxu0 0.0
      %1013 = vmatpush1.msra.mxu0 0.0
      %1014 = vmatprep.subr.mxu0 0.0
      %1015 = vmatpush1.msra.mxu0 0.0
      %1016 = vmatprep.subr.mxu0 0.0
      %1017 = vmatpush1.msra.mxu0 0.0
      %1018 = vmatprep.subr.mxu0 0.0
      %1019 = vmatpush1.msra.mxu0 0.0
      %1020 = vmatprep.subr.mxu0 0.0
      %1021 = vmatpush1.msra.mxu0 0.0
      %1022 = vmatprep.subr.mxu0 0.0
      %1023 = vmatpush1.msra.mxu0 0.0
      %1024 = vmatprep.subr.mxu0 0.0
      %1025 = vmatpush1.msra.mxu0 0.0
      %1026 = vmatprep.subr.mxu0 0.0
      %1027 = vmatpush1.msra.mxu0 0.0
      %1028 = vmatprep.subr.mxu0 0.0
      %1029 = vmatpush1.msra.mxu0 0.0
      %1030 = vmatprep.subr.mxu0 0.0
      %1031 = vmatpush1.msra.mxu0 0.0
      %1032 = vmatprep.subr.mxu0 0.0
      %1033 = vmatpush1.msra.mxu0 0.0
      %1034 = vmatprep.subr.mxu0 0.0
      %1035 = vmatpush1.msra.mxu0 0.0
      %1036 = vmatprep.subr.mxu0 0.0
      %1037 = vmatpush1.msra.mxu0 0.0
      %1038 = vmatprep.subr.mxu0 0.0
      %1039 = vmatpush1.msra.mxu0 0.0
      %1040 = vmatprep.subr.mxu0 0.0
      %1041 = vmatpush1.msra.mxu0 0.0
      %1042 = vmatprep.subr.mxu0 0.0
      %1043 = vmatpush1.msra.mxu0 0.0
      %1044 = vmatprep.subr.mxu0 0.0
      %1045 = vmatpush1.msra.mxu0 0.0
      %1046 = vmatprep.subr.mxu0 0.0
      %1047 = vmatpush1.msra.mxu0 0.0
      %1048 = vmatprep.subr.mxu0 0.0
      %1049 = vmatpush1.msra.mxu0 0.0
      %1050 = vmatprep.subr.mxu0 0.0
      %1051 = vmatpush1.msra.mxu0 0.0
      %1052 = vmatprep.subr.mxu0 0.0
      %1053 = vmatpush1.msra.mxu0 0.0
      %1054 = vmatprep.subr.mxu0 0.0
      %1055 = vmatpush1.msra.mxu0 0.0
      %1056 = vmatprep.subr.mxu0 0.0
      %1057 = vmatpush1.msra.mxu0 0.0
      %1058 = vmatprep.subr.mxu0 0.0
      %1059 = vmatpush1.msra.mxu0 0.0
      %1060 = vmatprep.mubr.f32.mxu0 0.0
      %1061 = vmatmul.mubr.f32.gmra.mrb[0].mxu0 %v910
      %v1062 = vpop.f32.mrb[0].mxu0
      %v1063 = vadd.f32 0.0, %v1062
      %v1064 = vpop.f32.mrb[0].mxu0
      %1065 = vmatprep.mubr.f32.mxu0 0.0
      %1066 = vmatmul.mubr.f32.gmra.mrb[0].mxu0 %v913
      %v1067 = vpop.f32.mrb[0].mxu0
      %v1068 = vadd.f32 0.0, %v1067
      %v1069 = vpop.f32.mrb[0].mxu0
      %1070 = vmatprep.mubr.f32.mxu0 0.0
      %1071 = vmatmul.mubr.f32.gmra.mrb[0].mxu0 %v916
      %v1072 = vpop.f32.mrb[0].mxu0
      %v1073 = vadd.f32 0.0, %v1072
      %v1074 = vpop.f32.mrb[0].mxu0
      %1075 = vmatprep.mubr.f32.mxu0 0.0
      %1076 = vmatmul.mubr.f32.gmra.mrb[0].mxu0 %v919
      %v1077 = vpop.f32.mrb[0].mxu0
      %v1078 = vadd.f32 0.0, %v1077
      %v1079 = vpop.f32.mrb[0].mxu0
      %1080 = vmatprep.mubr.f32.mxu0 0.0
      %1081 = vmatmul.mubr.f32.gmra.mrb[0].mxu0 %v922
      %v1082 = vpop.f32.mrb[0].mxu0
      %v1083 = vadd.f32 0.0, %v1082
      %v1084 = vpop.f32.mrb[0].mxu0
      %1085 = vmatprep.mubr.f32.mxu0 0.0
      %1086 = vmatmul.mubr.f32.gmra.mrb[0].mxu0 %v925
      %v1087 = vpop.f32.mrb[0].mxu0
      %v1088 = vadd.f32 0.0, %v1087
      %v1089 = vpop.f32.mrb[0].mxu0
      %1090 = vmatprep.mubr.f32.mxu0 0.0
      %1091 = vmatmul.mubr.f32.gmra.mrb[0].mxu0 %v928
      %v1092 = vpop.f32.mrb[0].mxu0
      %v1093 = vadd.f32 0.0, %v1092
      %v1094 = vpop.f32.mrb[0].mxu0
      %1095 = vmatprep.mubr.f32.mxu0 0.0
      %1096 = vmatmul.mubr.f32.gmra.mrb[0].mxu0 %v931
      %v1097 = vpop.f32.mrb[0].mxu0
      %v1098 = vadd.f32 0.0, %v1097
      %v1099 = vpop.f32.mrb[0].mxu0
      %1100 = vmatprep.mubr.f32.mxu0 0.0
      %1101 = vmatmul.mubr.f32.gmra.mrb[0].mxu0 %v934
      %v1102 = vpop.f32.mrb[0].mxu0
      %v1103 = vadd.f32 0.0, %v1102
      %v1104 = vpop.f32.mrb[0].mxu0
      %1105 = vmatprep.mubr.f32.mxu0 0.0
      %1106 = vmatmul.mubr.f32.gmra.mrb[0].mxu0 %v937
      %v1107 = vpop.f32.mrb[0].mxu0
      %v1108 = vadd.f32 0.0, %v1107
      %v1109 = vpop.f32.mrb[0].mxu0
      %1110 = vmatprep.mubr.f32.mxu0 0.0
      %1111 = vmatmul.mubr.f32.gmra.mrb[0].mxu0 %v940
      %v1112 = vpop.f32.mrb[0].mxu0
      %v1113 = vadd.f32 0.0, %v1112
      %v1114 = vpop.f32.mrb[0].mxu0
      %1115 = vmatprep.mubr.f32.mxu0 0.0
      %1116 = vmatmul.mubr.f32.gmra.mrb[0].mxu0 %v943
      %v1117 = vpop.f32.mrb[0].mxu0
      %v1118 = vadd.f32 0.0, %v1117
      %v1119 = vpop.f32.mrb[0].mxu0
      %1120 = vmatprep.mubr.f32.mxu0 0.0
      %1121 = vmatmul.mubr.f32.gmra.mrb[0].mxu0 %v946
      %v1122 = vpop.f32.mrb[0].mxu0
      %v1123 = vadd.f32 0.0, %v1122
      %v1124 = vpop.f32.mrb[0].mxu0
      %1125 = vmatprep.mubr.f32.mxu0 0.0
      %1126 = vmatmul.mubr.f32.gmra.mrb[0].mxu0 %v949
      %v1127 = vpop.f32.mrb[0].mxu0
      %v1128 = vadd.f32 0.0, %v1127
      %v1129 = vpop.f32.mrb[0].mxu0
      %1130 = vmatprep.mubr.f32.mxu0 0.0
      %1131 = vmatmul.mubr.f32.gmra.mrb[0].mxu0 %v952
      %v1132 = vpop.f32.mrb[0].mxu0
      %v1133 = vadd.f32 0.0, %v1132
      %v1134 = vpop.f32.mrb[0].mxu0
      %1135 = vmatprep.mubr.f32.mxu0 0.0
      %1136 = vmatmul.mubr.f32.gmra.mrb[0].mxu0 %v955
      %v1137 = vpop.f32.mrb[0].mxu0
      %v1138 = vadd.f32 0.0, %v1137
      %v1139 = vpop.f32.mrb[0].mxu0
      %1140 = vmatprep.mubr.f32.mxu0 0.0
      %1141 = vmatmul.mubr.f32.gmra.mrb[0].mxu0 %v958
      %v1142 = vpop.f32.mrb[0].mxu0
      %v1143 = vadd.f32 0.0, %v1142
      %v1144 = vpop.f32.mrb[0].mxu0
      %1145 = vmatprep.mubr.f32.mxu0 0.0
      %1146 = vmatmul.mubr.f32.gmra.mrb[0].mxu0 %v961
      %v1147 = vpop.f32.mrb[0].mxu0
      %v1148 = vadd.f32 0.0, %v1147
      %v1149 = vpop.f32.mrb[0].mxu0
      %1150 = vmatprep.mubr.f32.mxu0 0.0
      %1151 = vmatmul.mubr.f32.gmra.mrb[0].mxu0 %v964
      %v1152 = vpop.f32.mrb[0].mxu0
      %v1153 = vadd.f32 0.0, %v1152
      %v1154 = vpop.f32.mrb[0].mxu0
      %1155 = vmatprep.mubr.f32.mxu0 0.0
      %1156 = vmatmul.mubr.f32.gmra.mrb[0].mxu0 %v967
      %v1157 = vpop.f32.mrb[0].mxu0
      %v1158 = vadd.f32 0.0, %v1157
      %v1159 = vpop.f32.mrb[0].mxu0
      %1160 = vmatprep.mubr.f32.mxu0 0.0
      %1161 = vmatmul.mubr.f32.gmra.mrb[0].mxu0 %v970
      %v1162 = vpop.f32.mrb[0].mxu0
      %v1163 = vadd.f32 0.0, %v1162
      %v1164 = vpop.f32.mrb[0].mxu0
      %1165 = vmatprep.mubr.f32.mxu0 0.0
      %1166 = vmatmul.mubr.f32.gmra.mrb[0].mxu0 %v973
      %v1167 = vpop.f32.mrb[0].mxu0
      %v1168 = vadd.f32 0.0, %v1167
      %v1169 = vpop.f32.mrb[0].mxu0
      %1170 = vmatprep.mubr.f32.mxu0 0.0
      %1171 = vmatmul.mubr.f32.gmra.mrb[0].mxu0 %v976
      %v1172 = vpop.f32.mrb[0].mxu0
      %v1173 = vadd.f32 0.0, %v1172
      %v1174 = vpop.f32.mrb[0].mxu0
      %1175 = vmatprep.mubr.f32.mxu0 0.0
      %1176 = vmatmul.mubr.f32.gmra.mrb[0].mxu0 %v979
      %v1177 = vpop.f32.mrb[0].mxu0
      %v1178 = vadd.f32 0.0, %v1177
      %v1179 = vpop.f32.mrb[0].mxu0
      %1180 = vmatprep.mubr.f32.mxu0 0.0
      %1181 = vmatmul.mubr.f32.gmra.mrb[0].mxu0 %v982
      %v1182 = vpop.f32.mrb[0].mxu0
      %v1183 = vadd.f32 0.0, %v1182
      %v1184 = vpop.f32.mrb[0].mxu0
      %1185 = vmatprep.mubr.f32.mxu0 0.0
      %1186 = vmatmul.mubr.f32.gmra.mrb[0].mxu0 %v985
      %v1187 = vpop.f32.mrb[0].mxu0
      %v1188 = vadd.f32 0.0, %v1187
      %v1189 = vpop.f32.mrb[0].mxu0
      %1190 = vmatprep.mubr.f32.mxu0 0.0
      %1191 = vmatmul.mubr.f32.gmra.mrb[0].mxu0 %v988
      %v1192 = vpop.f32.mrb[0].mxu0
      %v1193 = vadd.f32 0.0, %v1192
      %v1194 = vpop.f32.mrb[0].mxu0
      %1195 = vmatprep.mubr.f32.mxu0 0.0
      %1196 = vmatmul.mubr.f32.gmra.mrb[0].mxu0 %v991
      %v1197 = vpop.f32.mrb[0].mxu0
      %v1198 = vadd.f32 0.0, %v1197
      %v1199 = vpop.f32.mrb[0].mxu0
      %1200 = vdwg.mxu0
      %v1201 = vadd.f32 %v851, %v1063
      %v1202 = vadd.f32 %v852, %v1068
      %v1203 = vadd.f32 %v853, %v1073
      %v1204 = vadd.f32 %v854, %v1078
      %v1205 = vadd.f32 %v855, %v1083
      %v1206 = vadd.f32 %v856, %v1088
      %v1207 = vadd.f32 %v857, %v1093
      %v1208 = vadd.f32 %v858, %v1098
      %v1209 = vadd.f32 %v859, %v1103
      %v1210 = vadd.f32 %v860, %v1108
      %v1211 = vadd.f32 %v861, %v1113
      %v1212 = vadd.f32 %v862, %v1118
      %v1213 = vadd.f32 %v863, %v1123
      %v1214 = vadd.f32 %v864, %v1128
      %v1215 = vadd.f32 %v865, %v1133
      %v1216 = vadd.f32 %v866, %v1138
      %v1217 = vadd.f32 %v867, %v1143
      %v1218 = vadd.f32 %v868, %v1148
      %v1219 = vadd.f32 %v869, %v1153
      %v1220 = vadd.f32 %v870, %v1158
      %v1221 = vadd.f32 %v871, %v1163
      %v1222 = vadd.f32 %v872, %v1168
      %v1223 = vadd.f32 %v873, %v1173
      %v1224 = vadd.f32 %v874, %v1178
      %v1225 = vadd.f32 %v875, %v1183
      %v1226 = vadd.f32 %v876, %v1188
      %v1227 = vadd.f32 %v877, %v1193
      %v1228 = vadd.f32 %v878, %v1198
      %v1229 = vld [vmem:[%s165 + $0x10] sm:$0xff]
      %v1230 = vld [vmem:[%s165 + $0x18] sm:$0xff]
      %v1231 = vld [vmem:[%s165 + $0x20] sm:$0xff]
      %v1232 = vld [vmem:[%s165 + $0x28] sm:$0xff]
      %v1233 = vld [vmem:[%s165 + $0x30] sm:$0xff]
      %v1234 = vld [vmem:[%s165 + $0x38] sm:$0xff]
      %v1235 = vld [vmem:[%s165 + $0x40] sm:$0xff]
      %v1236 = vld [vmem:[%s165 + $0x48] sm:$0xff]
      %v1237 = vld [vmem:[%s165 + $0x50] sm:$0xff]
      %v1238 = vld [vmem:[%s165 + $0x58] sm:$0xff]
      %v1239 = vld [vmem:[%s165 + $0x60] sm:$0xff]
      %v1240 = vld [vmem:[%s165 + $0x68] sm:$0xff]
      %v1241 = vld [vmem:[%s165 + $0x70] sm:$0xff]
      %v1242 = vld [vmem:[%s165 + $0x78] sm:$0xff]
      %v1243 = vld [vmem:[%s165 + $0x80] sm:$0xff]
      %v1244 = vld [vmem:[%s165 + $0x88] sm:$0xff]
      %v1245 = vld [vmem:[%s165 + $0x90] sm:$0xff]
      %v1246 = vld [vmem:[%s165 + $0x98] sm:$0xff]
      %v1247 = vld [vmem:[%s165 + $0xa0] sm:$0xff]
      %v1248 = vld [vmem:[%s165 + $0xa8] sm:$0xff]
      %v1249 = vld [vmem:[%s165 + $0xb0] sm:$0xff]
      %v1250 = vld [vmem:[%s165 + $0xb8] sm:$0xff]
      %v1251 = vld [vmem:[%s165 + $0xc0] sm:$0xff]
      %v1252 = vld [vmem:[%s165 + $0xc8] sm:$0xff]
      %v1253 = vld [vmem:[%s165 + $0xd0] sm:$0xff]
      %v1254 = vld [vmem:[%s165 + $0xd8] sm:$0xff]
      %v1255 = vld [vmem:[%s165 + $0xe0] sm:$0xff]
      %v1256 = vld [vmem:[%s165 + $0xe8] sm:$0xff]
      %s1257 = scalar_lea.vmem %s1, 12
      %v1258 = vld [vmem:[%s1257] sm:$0xf]
      %v1260 = vsel %vm207, %v1229, 0
      %v1263 = vsel %vm207, %v1230, 0
      %v1266 = vsel %vm207, %v1231, 0
      %v1269 = vsel %vm207, %v1232, 0
      %v1272 = vsel %vm207, %v1233, 0
      %v1275 = vsel %vm207, %v1234, 0
      %v1278 = vsel %vm207, %v1235, 0
      %v1281 = vsel %vm207, %v1236, 0
      %v1284 = vsel %vm207, %v1237, 0
      %v1287 = vsel %vm207, %v1238, 0
      %v1290 = vsel %vm207, %v1239, 0
      %v1293 = vsel %vm207, %v1240, 0
      %v1296 = vsel %vm207, %v1241, 0
      %v1299 = vsel %vm207, %v1242, 0
      %v1302 = vsel %vm207, %v1243, 0
      %v1305 = vsel %vm207, %v1244, 0
      %v1308 = vsel %vm207, %v1245, 0
      %v1311 = vsel %vm207, %v1246, 0
      %v1314 = vsel %vm207, %v1247, 0
      %v1317 = vsel %vm207, %v1248, 0
      %v1320 = vsel %vm207, %v1249, 0
      %v1323 = vsel %vm207, %v1250, 0
      %v1326 = vsel %vm207, %v1251, 0
      %v1329 = vsel %vm207, %v1252, 0
      %v1332 = vsel %vm207, %v1253, 0
      %v1335 = vsel %vm207, %v1254, 0
      %v1338 = vsel %vm207, %v1255, 0
      %v1341 = vsel %vm207, %v1256, 0
      %v1344 = vsel %vm292, %v1258, 0
      %1346 = vmatprep.subr.mxu0 0.0
      %1347 = vmatpush1.msra.mxu0 %v1344
      %1348 = vmatprep.subr.mxu0 0.0
      %1349 = vmatpush1.msra.mxu0 0.0
      %1350 = vmatprep.subr.mxu0 0.0
      %1351 = vmatpush1.msra.mxu0 0.0
      %1352 = vmatprep.subr.mxu0 0.0
      %1353 = vmatpush1.msra.mxu0 0.0
      %1354 = vmatprep.subr.mxu0 0.0
      %1355 = vmatpush1.msra.mxu0 0.0
      %1356 = vmatprep.subr.mxu0 0.0
      %1357 = vmatpush1.msra.mxu0 0.0
      %1358 = vmatprep.subr.mxu0 0.0
      %1359 = vmatpush1.msra.mxu0 0.0
      %1360 = vmatprep.subr.mxu0 0.0
      %1361 = vmatpush1.msra.mxu0 0.0
      %1362 = vmatprep.subr.mxu0 0.0
      %1363 = vmatpush1.msra.mxu0 0.0
      %1364 = vmatprep.subr.mxu0 0.0
      %1365 = vmatpush1.msra.mxu0 0.0
      %1366 = vmatprep.subr.mxu0 0.0
      %1367 = vmatpush1.msra.mxu0 0.0
      %1368 = vmatprep.subr.mxu0 0.0
      %1369 = vmatpush1.msra.mxu0 0.0
      %1370 = vmatprep.subr.mxu0 0.0
      %1371 = vmatpush1.msra.mxu0 0.0
      %1372 = vmatprep.subr.mxu0 0.0
      %1373 = vmatpush1.msra.mxu0 0.0
      %1374 = vmatprep.subr.mxu0 0.0
      %1375 = vmatpush1.msra.mxu0 0.0
      %1376 = vmatprep.subr.mxu0 0.0
      %1377 = vmatpush1.msra.mxu0 0.0
      %1378 = vmatprep.subr.mxu0 0.0
      %1379 = vmatpush1.msra.mxu0 0.0
      %1380 = vmatprep.subr.mxu0 0.0
      %1381 = vmatpush1.msra.mxu0 0.0
      %1382 = vmatprep.subr.mxu0 0.0
      %1383 = vmatpush1.msra.mxu0 0.0
      %1384 = vmatprep.subr.mxu0 0.0
      %1385 = vmatpush1.msra.mxu0 0.0
      %1386 = vmatprep.subr.mxu0 0.0
      %1387 = vmatpush1.msra.mxu0 0.0
      %1388 = vmatprep.subr.mxu0 0.0
      %1389 = vmatpush1.msra.mxu0 0.0
      %1390 = vmatprep.subr.mxu0 0.0
      %1391 = vmatpush1.msra.mxu0 0.0
      %1392 = vmatprep.subr.mxu0 0.0
      %1393 = vmatpush1.msra.mxu0 0.0
      %1394 = vmatprep.subr.mxu0 0.0
      %1395 = vmatpush1.msra.mxu0 0.0
      %1396 = vmatprep.subr.mxu0 0.0
      %1397 = vmatpush1.msra.mxu0 0.0
      %1398 = vmatprep.subr.mxu0 0.0
      %1399 = vmatpush1.msra.mxu0 0.0
      %1400 = vmatprep.subr.mxu0 0.0
      %1401 = vmatpush1.msra.mxu0 0.0
      %1402 = vmatprep.subr.mxu0 0.0
      %1403 = vmatpush1.msra.mxu0 0.0
      %1404 = vmatprep.subr.mxu0 0.0
      %1405 = vmatpush1.msra.mxu0 0.0
      %1406 = vmatprep.subr.mxu0 0.0
      %1407 = vmatpush1.msra.mxu0 0.0
      %1408 = vmatprep.subr.mxu0 0.0
      %1409 = vmatpush1.msra.mxu0 0.0
      %1410 = vmatprep.mubr.f32.mxu0 0.0
      %1411 = vmatmul.mubr.f32.gmra.mrb[0].mxu0 %v1260
      %v1412 = vpop.f32.mrb[0].mxu0
      %v1413 = vadd.f32 0.0, %v1412
      %v1414 = vpop.f32.mrb[0].mxu0
      %1415 = vmatprep.mubr.f32.mxu0 0.0
      %1416 = vmatmul.mubr.f32.gmra.mrb[0].mxu0 %v1263
      %v1417 = vpop.f32.mrb[0].mxu0
      %v1418 = vadd.f32 0.0, %v1417
      %v1419 = vpop.f32.mrb[0].mxu0
      %1420 = vmatprep.mubr.f32.mxu0 0.0
      %1421 = vmatmul.mubr.f32.gmra.mrb[0].mxu0 %v1266
      %v1422 = vpop.f32.mrb[0].mxu0
      %v1423 = vadd.f32 0.0, %v1422
      %v1424 = vpop.f32.mrb[0].mxu0
      %1425 = vmatprep.mubr.f32.mxu0 0.0
      %1426 = vmatmul.mubr.f32.gmra.mrb[0].mxu0 %v1269
      %v1427 = vpop.f32.mrb[0].mxu0
      %v1428 = vadd.f32 0.0, %v1427
      %v1429 = vpop.f32.mrb[0].mxu0
      %1430 = vmatprep.mubr.f32.mxu0 0.0
      %1431 = vmatmul.mubr.f32.gmra.mrb[0].mxu0 %v1272
      %v1432 = vpop.f32.mrb[0].mxu0
      %v1433 = vadd.f32 0.0, %v1432
      %v1434 = vpop.f32.mrb[0].mxu0
      %1435 = vmatprep.mubr.f32.mxu0 0.0
      %1436 = vmatmul.mubr.f32.gmra.mrb[0].mxu0 %v1275
      %v1437 = vpop.f32.mrb[0].mxu0
      %v1438 = vadd.f32 0.0, %v1437
      %v1439 = vpop.f32.mrb[0].mxu0
      %1440 = vmatprep.mubr.f32.mxu0 0.0
      %1441 = vmatmul.mubr.f32.gmra.mrb[0].mxu0 %v1278
      %v1442 = vpop.f32.mrb[0].mxu0
      %v1443 = vadd.f32 0.0, %v1442
      %v1444 = vpop.f32.mrb[0].mxu0
      %1445 = vmatprep.mubr.f32.mxu0 0.0
      %1446 = vmatmul.mubr.f32.gmra.mrb[0].mxu0 %v1281
      %v1447 = vpop.f32.mrb[0].mxu0
      %v1448 = vadd.f32 0.0, %v1447
      %v1449 = vpop.f32.mrb[0].mxu0
      %1450 = vmatprep.mubr.f32.mxu0 0.0
      %1451 = vmatmul.mubr.f32.gmra.mrb[0].mxu0 %v1284
      %v1452 = vpop.f32.mrb[0].mxu0
      %v1453 = vadd.f32 0.0, %v1452
      %v1454 = vpop.f32.mrb[0].mxu0
      %1455 = vmatprep.mubr.f32.mxu0 0.0
      %1456 = vmatmul.mubr.f32.gmra.mrb[0].mxu0 %v1287
      %v1457 = vpop.f32.mrb[0].mxu0
      %v1458 = vadd.f32 0.0, %v1457
      %v1459 = vpop.f32.mrb[0].mxu0
      %1460 = vmatprep.mubr.f32.mxu0 0.0
      %1461 = vmatmul.mubr.f32.gmra.mrb[0].mxu0 %v1290
      %v1462 = vpop.f32.mrb[0].mxu0
      %v1463 = vadd.f32 0.0, %v1462
      %v1464 = vpop.f32.mrb[0].mxu0
      %1465 = vmatprep.mubr.f32.mxu0 0.0
      %1466 = vmatmul.mubr.f32.gmra.mrb[0].mxu0 %v1293
      %v1467 = vpop.f32.mrb[0].mxu0
      %v1468 = vadd.f32 0.0, %v1467
      %v1469 = vpop.f32.mrb[0].mxu0
      %1470 = vmatprep.mubr.f32.mxu0 0.0
      %1471 = vmatmul.mubr.f32.gmra.mrb[0].mxu0 %v1296
      %v1472 = vpop.f32.mrb[0].mxu0
      %v1473 = vadd.f32 0.0, %v1472
      %v1474 = vpop.f32.mrb[0].mxu0
      %1475 = vmatprep.mubr.f32.mxu0 0.0
      %1476 = vmatmul.mubr.f32.gmra.mrb[0].mxu0 %v1299
      %v1477 = vpop.f32.mrb[0].mxu0
      %v1478 = vadd.f32 0.0, %v1477
      %v1479 = vpop.f32.mrb[0].mxu0
      %1480 = vmatprep.mubr.f32.mxu0 0.0
      %1481 = vmatmul.mubr.f32.gmra.mrb[0].mxu0 %v1302
      %v1482 = vpop.f32.mrb[0].mxu0
      %v1483 = vadd.f32 0.0, %v1482
      %v1484 = vpop.f32.mrb[0].mxu0
      %1485 = vmatprep.mubr.f32.mxu0 0.0
      %1486 = vmatmul.mubr.f32.gmra.mrb[0].mxu0 %v1305
      %v1487 = vpop.f32.mrb[0].mxu0
      %v1488 = vadd.f32 0.0, %v1487
      %v1489 = vpop.f32.mrb[0].mxu0
      %1490 = vmatprep.mubr.f32.mxu0 0.0
      %1491 = vmatmul.mubr.f32.gmra.mrb[0].mxu0 %v1308
      %v1492 = vpop.f32.mrb[0].mxu0
      %v1493 = vadd.f32 0.0, %v1492
      %v1494 = vpop.f32.mrb[0].mxu0
      %1495 = vmatprep.mubr.f32.mxu0 0.0
      %1496 = vmatmul.mubr.f32.gmra.mrb[0].mxu0 %v1311
      %v1497 = vpop.f32.mrb[0].mxu0
      %v1498 = vadd.f32 0.0, %v1497
      %v1499 = vpop.f32.mrb[0].mxu0
      %1500 = vmatprep.mubr.f32.mxu0 0.0
      %1501 = vmatmul.mubr.f32.gmra.mrb[0].mxu0 %v1314
      %v1502 = vpop.f32.mrb[0].mxu0
      %v1503 = vadd.f32 0.0, %v1502
      %v1504 = vpop.f32.mrb[0].mxu0
      %1505 = vmatprep.mubr.f32.mxu0 0.0
      %1506 = vmatmul.mubr.f32.gmra.mrb[0].mxu0 %v1317
      %v1507 = vpop.f32.mrb[0].mxu0
      %v1508 = vadd.f32 0.0, %v1507
      %v1509 = vpop.f32.mrb[0].mxu0
      %1510 = vmatprep.mubr.f32.mxu0 0.0
      %1511 = vmatmul.mubr.f32.gmra.mrb[0].mxu0 %v1320
      %v1512 = vpop.f32.mrb[0].mxu0
      %v1513 = vadd.f32 0.0, %v1512
      %v1514 = vpop.f32.mrb[0].mxu0
      %1515 = vmatprep.mubr.f32.mxu0 0.0
      %1516 = vmatmul.mubr.f32.gmra.mrb[0].mxu0 %v1323
      %v1517 = vpop.f32.mrb[0].mxu0
      %v1518 = vadd.f32 0.0, %v1517
      %v1519 = vpop.f32.mrb[0].mxu0
      %1520 = vmatprep.mubr.f32.mxu0 0.0
      %1521 = vmatmul.mubr.f32.gmra.mrb[0].mxu0 %v1326
      %v1522 = vpop.f32.mrb[0].mxu0
      %v1523 = vadd.f32 0.0, %v1522
      %v1524 = vpop.f32.mrb[0].mxu0
      %1525 = vmatprep.mubr.f32.mxu0 0.0
      %1526 = vmatmul.mubr.f32.gmra.mrb[0].mxu0 %v1329
      %v1527 = vpop.f32.mrb[0].mxu0
      %v1528 = vadd.f32 0.0, %v1527
      %v1529 = vpop.f32.mrb[0].mxu0
      %1530 = vmatprep.mubr.f32.mxu0 0.0
      %1531 = vmatmul.mubr.f32.gmra.mrb[0].mxu0 %v1332
      %v1532 = vpop.f32.mrb[0].mxu0
      %v1533 = vadd.f32 0.0, %v1532
      %v1534 = vpop.f32.mrb[0].mxu0
      %1535 = vmatprep.mubr.f32.mxu0 0.0
      %1536 = vmatmul.mubr.f32.gmra.mrb[0].mxu0 %v1335
      %v1537 = vpop.f32.mrb[0].mxu0
      %v1538 = vadd.f32 0.0, %v1537
      %v1539 = vpop.f32.mrb[0].mxu0
      %1540 = vmatprep.mubr.f32.mxu0 0.0
      %1541 = vmatmul.mubr.f32.gmra.mrb[0].mxu0 %v1338
      %v1542 = vpop.f32.mrb[0].mxu0
      %v1543 = vadd.f32 0.0, %v1542
      %v1544 = vpop.f32.mrb[0].mxu0
      %1545 = vmatprep.mubr.f32.mxu0 0.0
      %1546 = vmatmul.mubr.f32.gmra.mrb[0].mxu0 %v1341
      %v1547 = vpop.f32.mrb[0].mxu0
      %v1548 = vadd.f32 0.0, %v1547
      %v1549 = vpop.f32.mrb[0].mxu0
      %1550 = vdwg.mxu0
      %v1551 = vadd.f32 %v1201, %v1413
      %v1552 = vadd.f32 %v1202, %v1418
      %v1553 = vadd.f32 %v1203, %v1423
      %v1554 = vadd.f32 %v1204, %v1428
      %v1555 = vadd.f32 %v1205, %v1433
      %v1556 = vadd.f32 %v1206, %v1438
      %v1557 = vadd.f32 %v1207, %v1443
      %v1558 = vadd.f32 %v1208, %v1448
      %v1559 = vadd.f32 %v1209, %v1453
      %v1560 = vadd.f32 %v1210, %v1458
      %v1561 = vadd.f32 %v1211, %v1463
      %v1562 = vadd.f32 %v1212, %v1468
      %v1563 = vadd.f32 %v1213, %v1473
      %v1564 = vadd.f32 %v1214, %v1478
      %v1565 = vadd.f32 %v1215, %v1483
      %v1566 = vadd.f32 %v1216, %v1488
      %v1567 = vadd.f32 %v1217, %v1493
      %v1568 = vadd.f32 %v1218, %v1498
      %v1569 = vadd.f32 %v1219, %v1503
      %v1570 = vadd.f32 %v1220, %v1508
      %v1571 = vadd.f32 %v1221, %v1513
      %v1572 = vadd.f32 %v1222, %v1518
      %v1573 = vadd.f32 %v1223, %v1523
      %v1574 = vadd.f32 %v1224, %v1528
      %v1575 = vadd.f32 %v1225, %v1533
      %v1576 = vadd.f32 %v1226, %v1538
      %v1577 = vadd.f32 %v1227, %v1543
      %v1578 = vadd.f32 %v1228, %v1548
      %v1579 = vld [vmem:[%s165 + $0x11] sm:$0xff]
      %v1580 = vld [vmem:[%s165 + $0x19] sm:$0xff]
      %v1581 = vld [vmem:[%s165 + $0x21] sm:$0xff]
      %v1582 = vld [vmem:[%s165 + $0x29] sm:$0xff]
      %v1583 = vld [vmem:[%s165 + $0x31] sm:$0xff]
      %v1584 = vld [vmem:[%s165 + $0x39] sm:$0xff]
      %v1585 = vld [vmem:[%s165 + $0x41] sm:$0xff]
      %v1586 = vld [vmem:[%s165 + $0x49] sm:$0xff]
      %v1587 = vld [vmem:[%s165 + $0x51] sm:$0xff]
      %v1588 = vld [vmem:[%s165 + $0x59] sm:$0xff]
      %v1589 = vld [vmem:[%s165 + $0x61] sm:$0xff]
      %v1590 = vld [vmem:[%s165 + $0x69] sm:$0xff]
      %v1591 = vld [vmem:[%s165 + $0x71] sm:$0xff]
      %v1592 = vld [vmem:[%s165 + $0x79] sm:$0xff]
      %v1593 = vld [vmem:[%s165 + $0x81] sm:$0xff]
      %v1594 = vld [vmem:[%s165 + $0x89] sm:$0xff]
      %v1595 = vld [vmem:[%s165 + $0x91] sm:$0xff]
      %v1596 = vld [vmem:[%s165 + $0x99] sm:$0xff]
      %v1597 = vld [vmem:[%s165 + $0xa1] sm:$0xff]
      %v1598 = vld [vmem:[%s165 + $0xa9] sm:$0xff]
      %v1599 = vld [vmem:[%s165 + $0xb1] sm:$0xff]
      %v1600 = vld [vmem:[%s165 + $0xb9] sm:$0xff]
      %v1601 = vld [vmem:[%s165 + $0xc1] sm:$0xff]
      %v1602 = vld [vmem:[%s165 + $0xc9] sm:$0xff]
      %v1603 = vld [vmem:[%s165 + $0xd1] sm:$0xff]
      %v1604 = vld [vmem:[%s165 + $0xd9] sm:$0xff]
      %v1605 = vld [vmem:[%s165 + $0xe1] sm:$0xff]
      %v1606 = vld [vmem:[%s165 + $0xe9] sm:$0xff]
      %s1607 = scalar_lea.vmem %s1, 16
      %v1608 = vld [vmem:[%s1607] sm:$0xf]
      %v1610 = vsel %vm207, %v1579, 0
      %v1613 = vsel %vm207, %v1580, 0
      %v1616 = vsel %vm207, %v1581, 0
      %v1619 = vsel %vm207, %v1582, 0
      %v1622 = vsel %vm207, %v1583, 0
      %v1625 = vsel %vm207, %v1584, 0
      %v1628 = vsel %vm207, %v1585, 0
      %v1631 = vsel %vm207, %v1586, 0
      %v1634 = vsel %vm207, %v1587, 0
      %v1637 = vsel %vm207, %v1588, 0
      %v1640 = vsel %vm207, %v1589, 0
      %v1643 = vsel %vm207, %v1590, 0
      %v1646 = vsel %vm207, %v1591, 0
      %v1649 = vsel %vm207, %v1592, 0
      %v1652 = vsel %vm207, %v1593, 0
      %v1655 = vsel %vm207, %v1594, 0
      %v1658 = vsel %vm207, %v1595, 0
      %v1661 = vsel %vm207, %v1596, 0
      %v1664 = vsel %vm207, %v1597, 0
      %v1667 = vsel %vm207, %v1598, 0
      %v1670 = vsel %vm207, %v1599, 0
      %v1673 = vsel %vm207, %v1600, 0
      %v1676 = vsel %vm207, %v1601, 0
      %v1679 = vsel %vm207, %v1602, 0
      %v1682 = vsel %vm207, %v1603, 0
      %v1685 = vsel %vm207, %v1604, 0
      %v1688 = vsel %vm207, %v1605, 0
      %v1691 = vsel %vm207, %v1606, 0
      %v1694 = vsel %vm292, %v1608, 0
      %1696 = vmatprep.subr.mxu0 0.0
      %1697 = vmatpush1.msra.mxu0 %v1694
      %1698 = vmatprep.subr.mxu0 0.0
      %1699 = vmatpush1.msra.mxu0 0.0
      %1700 = vmatprep.subr.mxu0 0.0
      %1701 = vmatpush1.msra.mxu0 0.0
      %1702 = vmatprep.subr.mxu0 0.0
      %1703 = vmatpush1.msra.mxu0 0.0
      %1704 = vmatprep.subr.mxu0 0.0
      %1705 = vmatpush1.msra.mxu0 0.0
      %1706 = vmatprep.subr.mxu0 0.0
      %1707 = vmatpush1.msra.mxu0 0.0
      %1708 = vmatprep.subr.mxu0 0.0
      %1709 = vmatpush1.msra.mxu0 0.0
      %1710 = vmatprep.subr.mxu0 0.0
      %1711 = vmatpush1.msra.mxu0 0.0
      %1712 = vmatprep.subr.mxu0 0.0
      %1713 = vmatpush1.msra.mxu0 0.0
      %1714 = vmatprep.subr.mxu0 0.0
      %1715 = vmatpush1.msra.mxu0 0.0
      %1716 = vmatprep.subr.mxu0 0.0
      %1717 = vmatpush1.msra.mxu0 0.0
      %1718 = vmatprep.subr.mxu0 0.0
      %1719 = vmatpush1.msra.mxu0 0.0
      %1720 = vmatprep.subr.mxu0 0.0
      %1721 = vmatpush1.msra.mxu0 0.0
      %1722 = vmatprep.subr.mxu0 0.0
      %1723 = vmatpush1.msra.mxu0 0.0
      %1724 = vmatprep.subr.mxu0 0.0
      %1725 = vmatpush1.msra.mxu0 0.0
      %1726 = vmatprep.subr.mxu0 0.0
      %1727 = vmatpush1.msra.mxu0 0.0
      %1728 = vmatprep.subr.mxu0 0.0
      %1729 = vmatpush1.msra.mxu0 0.0
      %1730 = vmatprep.subr.mxu0 0.0
      %1731 = vmatpush1.msra.mxu0 0.0
      %1732 = vmatprep.subr.mxu0 0.0
      %1733 = vmatpush1.msra.mxu0 0.0
      %1734 = vmatprep.subr.mxu0 0.0
      %1735 = vmatpush1.msra.mxu0 0.0
      %1736 = vmatprep.subr.mxu0 0.0
      %1737 = vmatpush1.msra.mxu0 0.0
      %1738 = vmatprep.subr.mxu0 0.0
      %1739 = vmatpush1.msra.mxu0 0.0
      %1740 = vmatprep.subr.mxu0 0.0
      %1741 = vmatpush1.msra.mxu0 0.0
      %1742 = vmatprep.subr.mxu0 0.0
      %1743 = vmatpush1.msra.mxu0 0.0
      %1744 = vmatprep.subr.mxu0 0.0
      %1745 = vmatpush1.msra.mxu0 0.0
      %1746 = vmatprep.subr.mxu0 0.0
      %1747 = vmatpush1.msra.mxu0 0.0
      %1748 = vmatprep.subr.mxu0 0.0
      %1749 = vmatpush1.msra.mxu0 0.0
      %1750 = vmatprep.subr.mxu0 0.0
      %1751 = vmatpush1.msra.mxu0 0.0
      %1752 = vmatprep.subr.mxu0 0.0
      %1753 = vmatpush1.msra.mxu0 0.0
      %1754 = vmatprep.subr.mxu0 0.0
      %1755 = vmatpush1.msra.mxu0 0.0
      %1756 = vmatprep.subr.mxu0 0.0
      %1757 = vmatpush1.msra.mxu0 0.0
      %1758 = vmatprep.subr.mxu0 0.0
      %1759 = vmatpush1.msra.mxu0 0.0
      %1760 = vmatprep.mubr.f32.mxu0 0.0
      %1761 = vmatmul.mubr.f32.gmra.mrb[0].mxu0 %v1610
      %v1762 = vpop.f32.mrb[0].mxu0
      %v1763 = vadd.f32 0.0, %v1762
      %v1764 = vpop.f32.mrb[0].mxu0
      %1765 = vmatprep.mubr.f32.mxu0 0.0
      %1766 = vmatmul.mubr.f32.gmra.mrb[0].mxu0 %v1613
      %v1767 = vpop.f32.mrb[0].mxu0
      %v1768 = vadd.f32 0.0, %v1767
      %v1769 = vpop.f32.mrb[0].mxu0
      %1770 = vmatprep.mubr.f32.mxu0 0.0
      %1771 = vmatmul.mubr.f32.gmra.mrb[0].mxu0 %v1616
      %v1772 = vpop.f32.mrb[0].mxu0
      %v1773 = vadd.f32 0.0, %v1772
      %v1774 = vpop.f32.mrb[0].mxu0
      %1775 = vmatprep.mubr.f32.mxu0 0.0
      %1776 = vmatmul.mubr.f32.gmra.mrb[0].mxu0 %v1619
      %v1777 = vpop.f32.mrb[0].mxu0
      %v1778 = vadd.f32 0.0, %v1777
      %v1779 = vpop.f32.mrb[0].mxu0
      %1780 = vmatprep.mubr.f32.mxu0 0.0
      %1781 = vmatmul.mubr.f32.gmra.mrb[0].mxu0 %v1622
      %v1782 = vpop.f32.mrb[0].mxu0
      %v1783 = vadd.f32 0.0, %v1782
      %v1784 = vpop.f32.mrb[0].mxu0
      %1785 = vmatprep.mubr.f32.mxu0 0.0
      %1786 = vmatmul.mubr.f32.gmra.mrb[0].mxu0 %v1625
      %v1787 = vpop.f32.mrb[0].mxu0
      %v1788 = vadd.f32 0.0, %v1787
      %v1789 = vpop.f32.mrb[0].mxu0
      %1790 = vmatprep.mubr.f32.mxu0 0.0
      %1791 = vmatmul.mubr.f32.gmra.mrb[0].mxu0 %v1628
      %v1792 = vpop.f32.mrb[0].mxu0
      %v1793 = vadd.f32 0.0, %v1792
      %v1794 = vpop.f32.mrb[0].mxu0
      %1795 = vmatprep.mubr.f32.mxu0 0.0
      %1796 = vmatmul.mubr.f32.gmra.mrb[0].mxu0 %v1631
      %v1797 = vpop.f32.mrb[0].mxu0
      %v1798 = vadd.f32 0.0, %v1797
      %v1799 = vpop.f32.mrb[0].mxu0
      %1800 = vmatprep.mubr.f32.mxu0 0.0
      %1801 = vmatmul.mubr.f32.gmra.mrb[0].mxu0 %v1634
      %v1802 = vpop.f32.mrb[0].mxu0
      %v1803 = vadd.f32 0.0, %v1802
      %v1804 = vpop.f32.mrb[0].mxu0
      %1805 = vmatprep.mubr.f32.mxu0 0.0
      %1806 = vmatmul.mubr.f32.gmra.mrb[0].mxu0 %v1637
      %v1807 = vpop.f32.mrb[0].mxu0
      %v1808 = vadd.f32 0.0, %v1807
      %v1809 = vpop.f32.mrb[0].mxu0
      %1810 = vmatprep.mubr.f32.mxu0 0.0
      %1811 = vmatmul.mubr.f32.gmra.mrb[0].mxu0 %v1640
      %v1812 = vpop.f32.mrb[0].mxu0
      %v1813 = vadd.f32 0.0, %v1812
      %v1814 = vpop.f32.mrb[0].mxu0
      %1815 = vmatprep.mubr.f32.mxu0 0.0
      %1816 = vmatmul.mubr.f32.gmra.mrb[0].mxu0 %v1643
      %v1817 = vpop.f32.mrb[0].mxu0
      %v1818 = vadd.f32 0.0, %v1817
      %v1819 = vpop.f32.mrb[0].mxu0
      %1820 = vmatprep.mubr.f32.mxu0 0.0
      %1821 = vmatmul.mubr.f32.gmra.mrb[0].mxu0 %v1646
      %v1822 = vpop.f32.mrb[0].mxu0
      %v1823 = vadd.f32 0.0, %v1822
      %v1824 = vpop.f32.mrb[0].mxu0
      %1825 = vmatprep.mubr.f32.mxu0 0.0
      %1826 = vmatmul.mubr.f32.gmra.mrb[0].mxu0 %v1649
      %v1827 = vpop.f32.mrb[0].mxu0
      %v1828 = vadd.f32 0.0, %v1827
      %v1829 = vpop.f32.mrb[0].mxu0
      %1830 = vmatprep.mubr.f32.mxu0 0.0
      %1831 = vmatmul.mubr.f32.gmra.mrb[0].mxu0 %v1652
      %v1832 = vpop.f32.mrb[0].mxu0
      %v1833 = vadd.f32 0.0, %v1832
      %v1834 = vpop.f32.mrb[0].mxu0
      %1835 = vmatprep.mubr.f32.mxu0 0.0
      %1836 = vmatmul.mubr.f32.gmra.mrb[0].mxu0 %v1655
      %v1837 = vpop.f32.mrb[0].mxu0
      %v1838 = vadd.f32 0.0, %v1837
      %v1839 = vpop.f32.mrb[0].mxu0
      %1840 = vmatprep.mubr.f32.mxu0 0.0
      %1841 = vmatmul.mubr.f32.gmra.mrb[0].mxu0 %v1658
      %v1842 = vpop.f32.mrb[0].mxu0
      %v1843 = vadd.f32 0.0, %v1842
      %v1844 = vpop.f32.mrb[0].mxu0
      %1845 = vmatprep.mubr.f32.mxu0 0.0
      %1846 = vmatmul.mubr.f32.gmra.mrb[0].mxu0 %v1661
      %v1847 = vpop.f32.mrb[0].mxu0
      %v1848 = vadd.f32 0.0, %v1847
      %v1849 = vpop.f32.mrb[0].mxu0
      %1850 = vmatprep.mubr.f32.mxu0 0.0
      %1851 = vmatmul.mubr.f32.gmra.mrb[0].mxu0 %v1664
      %v1852 = vpop.f32.mrb[0].mxu0
      %v1853 = vadd.f32 0.0, %v1852
      %v1854 = vpop.f32.mrb[0].mxu0
      %1855 = vmatprep.mubr.f32.mxu0 0.0
      %1856 = vmatmul.mubr.f32.gmra.mrb[0].mxu0 %v1667
      %v1857 = vpop.f32.mrb[0].mxu0
      %v1858 = vadd.f32 0.0, %v1857
      %v1859 = vpop.f32.mrb[0].mxu0
      %1860 = vmatprep.mubr.f32.mxu0 0.0
      %1861 = vmatmul.mubr.f32.gmra.mrb[0].mxu0 %v1670
      %v1862 = vpop.f32.mrb[0].mxu0
      %v1863 = vadd.f32 0.0, %v1862
      %v1864 = vpop.f32.mrb[0].mxu0
      %1865 = vmatprep.mubr.f32.mxu0 0.0
      %1866 = vmatmul.mubr.f32.gmra.mrb[0].mxu0 %v1673
      %v1867 = vpop.f32.mrb[0].mxu0
      %v1868 = vadd.f32 0.0, %v1867
      %v1869 = vpop.f32.mrb[0].mxu0
      %1870 = vmatprep.mubr.f32.mxu0 0.0
      %1871 = vmatmul.mubr.f32.gmra.mrb[0].mxu0 %v1676
      %v1872 = vpop.f32.mrb[0].mxu0
      %v1873 = vadd.f32 0.0, %v1872
      %v1874 = vpop.f32.mrb[0].mxu0
      %1875 = vmatprep.mubr.f32.mxu0 0.0
      %1876 = vmatmul.mubr.f32.gmra.mrb[0].mxu0 %v1679
      %v1877 = vpop.f32.mrb[0].mxu0
      %v1878 = vadd.f32 0.0, %v1877
      %v1879 = vpop.f32.mrb[0].mxu0
      %1880 = vmatprep.mubr.f32.mxu0 0.0
      %1881 = vmatmul.mubr.f32.gmra.mrb[0].mxu0 %v1682
      %v1882 = vpop.f32.mrb[0].mxu0
      %v1883 = vadd.f32 0.0, %v1882
      %v1884 = vpop.f32.mrb[0].mxu0
      %1885 = vmatprep.mubr.f32.mxu0 0.0
      %1886 = vmatmul.mubr.f32.gmra.mrb[0].mxu0 %v1685
      %v1887 = vpop.f32.mrb[0].mxu0
      %v1888 = vadd.f32 0.0, %v1887
      %v1889 = vpop.f32.mrb[0].mxu0
      %1890 = vmatprep.mubr.f32.mxu0 0.0
      %1891 = vmatmul.mubr.f32.gmra.mrb[0].mxu0 %v1688
      %v1892 = vpop.f32.mrb[0].mxu0
      %v1893 = vadd.f32 0.0, %v1892
      %v1894 = vpop.f32.mrb[0].mxu0
      %1895 = vmatprep.mubr.f32.mxu0 0.0
      %1896 = vmatmul.mubr.f32.gmra.mrb[0].mxu0 %v1691
      %v1897 = vpop.f32.mrb[0].mxu0
      %v1898 = vadd.f32 0.0, %v1897
      %v1899 = vpop.f32.mrb[0].mxu0
      %1900 = vdwg.mxu0
      %v1901 = vadd.f32 %v1551, %v1763
      %v1902 = vadd.f32 %v1552, %v1768
      %v1903 = vadd.f32 %v1553, %v1773
      %v1904 = vadd.f32 %v1554, %v1778
      %v1905 = vadd.f32 %v1555, %v1783
      %v1906 = vadd.f32 %v1556, %v1788
      %v1907 = vadd.f32 %v1557, %v1793
      %v1908 = vadd.f32 %v1558, %v1798
      %v1909 = vadd.f32 %v1559, %v1803
      %v1910 = vadd.f32 %v1560, %v1808
      %v1911 = vadd.f32 %v1561, %v1813
      %v1912 = vadd.f32 %v1562, %v1818
      %v1913 = vadd.f32 %v1563, %v1823
      %v1914 = vadd.f32 %v1564, %v1828
      %v1915 = vadd.f32 %v1565, %v1833
      %v1916 = vadd.f32 %v1566, %v1838
      %v1917 = vadd.f32 %v1567, %v1843
      %v1918 = vadd.f32 %v1568, %v1848
      %v1919 = vadd.f32 %v1569, %v1853
      %v1920 = vadd.f32 %v1570, %v1858
      %v1921 = vadd.f32 %v1571, %v1863
      %v1922 = vadd.f32 %v1572, %v1868
      %v1923 = vadd.f32 %v1573, %v1873
      %v1924 = vadd.f32 %v1574, %v1878
      %v1925 = vadd.f32 %v1575, %v1883
      %v1926 = vadd.f32 %v1576, %v1888
      %v1927 = vadd.f32 %v1577, %v1893
      %v1928 = vadd.f32 %v1578, %v1898
      %v1929 = vld [vmem:[%s165 + $0x12] sm:$0xff]
      %v1930 = vld [vmem:[%s165 + $0x1a] sm:$0xff]
      %v1931 = vld [vmem:[%s165 + $0x22] sm:$0xff]
      %v1932 = vld [vmem:[%s165 + $0x2a] sm:$0xff]
      %v1933 = vld [vmem:[%s165 + $0x32] sm:$0xff]
      %v1934 = vld [vmem:[%s165 + $0x3a] sm:$0xff]
      %v1935 = vld [vmem:[%s165 + $0x42] sm:$0xff]
      %v1936 = vld [vmem:[%s165 + $0x4a] sm:$0xff]
      %v1937 = vld [vmem:[%s165 + $0x52] sm:$0xff]
      %v1938 = vld [vmem:[%s165 + $0x5a] sm:$0xff]
      %v1939 = vld [vmem:[%s165 + $0x62] sm:$0xff]
      %v1940 = vld [vmem:[%s165 + $0x6a] sm:$0xff]
      %v1941 = vld [vmem:[%s165 + $0x72] sm:$0xff]
      %v1942 = vld [vmem:[%s165 + $0x7a] sm:$0xff]
      %v1943 = vld [vmem:[%s165 + $0x82] sm:$0xff]
      %v1944 = vld [vmem:[%s165 + $0x8a] sm:$0xff]
      %v1945 = vld [vmem:[%s165 + $0x92] sm:$0xff]
      %v1946 = vld [vmem:[%s165 + $0x9a] sm:$0xff]
      %v1947 = vld [vmem:[%s165 + $0xa2] sm:$0xff]
      %v1948 = vld [vmem:[%s165 + $0xaa] sm:$0xff]
      %v1949 = vld [vmem:[%s165 + $0xb2] sm:$0xff]
      %v1950 = vld [vmem:[%s165 + $0xba] sm:$0xff]
      %v1951 = vld [vmem:[%s165 + $0xc2] sm:$0xff]
      %v1952 = vld [vmem:[%s165 + $0xca] sm:$0xff]
      %v1953 = vld [vmem:[%s165 + $0xd2] sm:$0xff]
      %v1954 = vld [vmem:[%s165 + $0xda] sm:$0xff]
      %v1955 = vld [vmem:[%s165 + $0xe2] sm:$0xff]
      %v1956 = vld [vmem:[%s165 + $0xea] sm:$0xff]
      %s1957 = scalar_lea.vmem %s1, 20
      %v1958 = vld [vmem:[%s1957] sm:$0xf]
      %v1960 = vsel %vm207, %v1929, 0
      %v1963 = vsel %vm207, %v1930, 0
      %v1966 = vsel %vm207, %v1931, 0
      %v1969 = vsel %vm207, %v1932, 0
      %v1972 = vsel %vm207, %v1933, 0
      %v1975 = vsel %vm207, %v1934, 0
      %v1978 = vsel %vm207, %v1935, 0
      %v1981 = vsel %vm207, %v1936, 0
      %v1984 = vsel %vm207, %v1937, 0
      %v1987 = vsel %vm207, %v1938, 0
      %v1990 = vsel %vm207, %v1939, 0
      %v1993 = vsel %vm207, %v1940, 0
      %v1996 = vsel %vm207, %v1941, 0
      %v1999 = vsel %vm207, %v1942, 0
      %v2002 = vsel %vm207, %v1943, 0
      %v2005 = vsel %vm207, %v1944, 0
      %v2008 = vsel %vm207, %v1945, 0
      %v2011 = vsel %vm207, %v1946, 0
      %v2014 = vsel %vm207, %v1947, 0
      %v2017 = vsel %vm207, %v1948, 0
      %v2020 = vsel %vm207, %v1949, 0
      %v2023 = vsel %vm207, %v1950, 0
      %v2026 = vsel %vm207, %v1951, 0
      %v2029 = vsel %vm207, %v1952, 0
      %v2032 = vsel %vm207, %v1953, 0
      %v2035 = vsel %vm207, %v1954, 0
      %v2038 = vsel %vm207, %v1955, 0
      %v2041 = vsel %vm207, %v1956, 0
      %v2044 = vsel %vm292, %v1958, 0
      %2046 = vmatprep.subr.mxu0 0.0
      %2047 = vmatpush1.msra.mxu0 %v2044
      %2048 = vmatprep.subr.mxu0 0.0
      %2049 = vmatpush1.msra.mxu0 0.0
      %2050 = vmatprep.subr.mxu0 0.0
      %2051 = vmatpush1.msra.mxu0 0.0
      %2052 = vmatprep.subr.mxu0 0.0
      %2053 = vmatpush1.msra.mxu0 0.0
      %2054 = vmatprep.subr.mxu0 0.0
      %2055 = vmatpush1.msra.mxu0 0.0
      %2056 = vmatprep.subr.mxu0 0.0
      %2057 = vmatpush1.msra.mxu0 0.0
      %2058 = vmatprep.subr.mxu0 0.0
      %2059 = vmatpush1.msra.mxu0 0.0
      %2060 = vmatprep.subr.mxu0 0.0
      %2061 = vmatpush1.msra.mxu0 0.0
      %2062 = vmatprep.subr.mxu0 0.0
      %2063 = vmatpush1.msra.mxu0 0.0
      %2064 = vmatprep.subr.mxu0 0.0
      %2065 = vmatpush1.msra.mxu0 0.0
      %2066 = vmatprep.subr.mxu0 0.0
      %2067 = vmatpush1.msra.mxu0 0.0
      %2068 = vmatprep.subr.mxu0 0.0
      %2069 = vmatpush1.msra.mxu0 0.0
      %2070 = vmatprep.subr.mxu0 0.0
      %2071 = vmatpush1.msra.mxu0 0.0
      %2072 = vmatprep.subr.mxu0 0.0
      %2073 = vmatpush1.msra.mxu0 0.0
      %2074 = vmatprep.subr.mxu0 0.0
      %2075 = vmatpush1.msra.mxu0 0.0
      %2076 = vmatprep.subr.mxu0 0.0
      %2077 = vmatpush1.msra.mxu0 0.0
      %2078 = vmatprep.subr.mxu0 0.0
      %2079 = vmatpush1.msra.mxu0 0.0
      %2080 = vmatprep.subr.mxu0 0.0
      %2081 = vmatpush1.msra.mxu0 0.0
      %2082 = vmatprep.subr.mxu0 0.0
      %2083 = vmatpush1.msra.mxu0 0.0
      %2084 = vmatprep.subr.mxu0 0.0
      %2085 = vmatpush1.msra.mxu0 0.0
      %2086 = vmatprep.subr.mxu0 0.0
      %2087 = vmatpush1.msra.mxu0 0.0
      %2088 = vmatprep.subr.mxu0 0.0
      %2089 = vmatpush1.msra.mxu0 0.0
      %2090 = vmatprep.subr.mxu0 0.0
      %2091 = vmatpush1.msra.mxu0 0.0
      %2092 = vmatprep.subr.mxu0 0.0
      %2093 = vmatpush1.msra.mxu0 0.0
      %2094 = vmatprep.subr.mxu0 0.0
      %2095 = vmatpush1.msra.mxu0 0.0
      %2096 = vmatprep.subr.mxu0 0.0
      %2097 = vmatpush1.msra.mxu0 0.0
      %2098 = vmatprep.subr.mxu0 0.0
      %2099 = vmatpush1.msra.mxu0 0.0
      %2100 = vmatprep.subr.mxu0 0.0
      %2101 = vmatpush1.msra.mxu0 0.0
      %2102 = vmatprep.subr.mxu0 0.0
      %2103 = vmatpush1.msra.mxu0 0.0
      %2104 = vmatprep.subr.mxu0 0.0
      %2105 = vmatpush1.msra.mxu0 0.0
      %2106 = vmatprep.subr.mxu0 0.0
      %2107 = vmatpush1.msra.mxu0 0.0
      %2108 = vmatprep.subr.mxu0 0.0
      %2109 = vmatpush1.msra.mxu0 0.0
      %2110 = vmatprep.mubr.f32.mxu0 0.0
      %2111 = vmatmul.mubr.f32.gmra.mrb[0].mxu0 %v1960
      %v2112 = vpop.f32.mrb[0].mxu0
      %v2113 = vadd.f32 0.0, %v2112
      %v2114 = vpop.f32.mrb[0].mxu0
      %2115 = vmatprep.mubr.f32.mxu0 0.0
      %2116 = vmatmul.mubr.f32.gmra.mrb[0].mxu0 %v1963
      %v2117 = vpop.f32.mrb[0].mxu0
      %v2118 = vadd.f32 0.0, %v2117
      %v2119 = vpop.f32.mrb[0].mxu0
      %2120 = vmatprep.mubr.f32.mxu0 0.0
      %2121 = vmatmul.mubr.f32.gmra.mrb[0].mxu0 %v1966
      %v2122 = vpop.f32.mrb[0].mxu0
      %v2123 = vadd.f32 0.0, %v2122
      %v2124 = vpop.f32.mrb[0].mxu0
      %2125 = vmatprep.mubr.f32.mxu0 0.0
      %2126 = vmatmul.mubr.f32.gmra.mrb[0].mxu0 %v1969
      %v2127 = vpop.f32.mrb[0].mxu0
      %v2128 = vadd.f32 0.0, %v2127
      %v2129 = vpop.f32.mrb[0].mxu0
      %2130 = vmatprep.mubr.f32.mxu0 0.0
      %2131 = vmatmul.mubr.f32.gmra.mrb[0].mxu0 %v1972
      %v2132 = vpop.f32.mrb[0].mxu0
      %v2133 = vadd.f32 0.0, %v2132
      %v2134 = vpop.f32.mrb[0].mxu0
      %2135 = vmatprep.mubr.f32.mxu0 0.0
      %2136 = vmatmul.mubr.f32.gmra.mrb[0].mxu0 %v1975
      %v2137 = vpop.f32.mrb[0].mxu0
      %v2138 = vadd.f32 0.0, %v2137
      %v2139 = vpop.f32.mrb[0].mxu0
      %2140 = vmatprep.mubr.f32.mxu0 0.0
      %2141 = vmatmul.mubr.f32.gmra.mrb[0].mxu0 %v1978
      %v2142 = vpop.f32.mrb[0].mxu0
      %v2143 = vadd.f32 0.0, %v2142
      %v2144 = vpop.f32.mrb[0].mxu0
      %2145 = vmatprep.mubr.f32.mxu0 0.0
      %2146 = vmatmul.mubr.f32.gmra.mrb[0].mxu0 %v1981
      %v2147 = vpop.f32.mrb[0].mxu0
      %v2148 = vadd.f32 0.0, %v2147
      %v2149 = vpop.f32.mrb[0].mxu0
      %2150 = vmatprep.mubr.f32.mxu0 0.0
      %2151 = vmatmul.mubr.f32.gmra.mrb[0].mxu0 %v1984
      %v2152 = vpop.f32.mrb[0].mxu0
      %v2153 = vadd.f32 0.0, %v2152
      %v2154 = vpop.f32.mrb[0].mxu0
      %2155 = vmatprep.mubr.f32.mxu0 0.0
      %2156 = vmatmul.mubr.f32.gmra.mrb[0].mxu0 %v1987
      %v2157 = vpop.f32.mrb[0].mxu0
      %v2158 = vadd.f32 0.0, %v2157
      %v2159 = vpop.f32.mrb[0].mxu0
      %2160 = vmatprep.mubr.f32.mxu0 0.0
      %2161 = vmatmul.mubr.f32.gmra.mrb[0].mxu0 %v1990
      %v2162 = vpop.f32.mrb[0].mxu0
      %v2163 = vadd.f32 0.0, %v2162
      %v2164 = vpop.f32.mrb[0].mxu0
      %2165 = vmatprep.mubr.f32.mxu0 0.0
      %2166 = vmatmul.mubr.f32.gmra.mrb[0].mxu0 %v1993
      %v2167 = vpop.f32.mrb[0].mxu0
      %v2168 = vadd.f32 0.0, %v2167
      %v2169 = vpop.f32.mrb[0].mxu0
      %2170 = vmatprep.mubr.f32.mxu0 0.0
      %2171 = vmatmul.mubr.f32.gmra.mrb[0].mxu0 %v1996
      %v2172 = vpop.f32.mrb[0].mxu0
      %v2173 = vadd.f32 0.0, %v2172
      %v2174 = vpop.f32.mrb[0].mxu0
      %2175 = vmatprep.mubr.f32.mxu0 0.0
      %2176 = vmatmul.mubr.f32.gmra.mrb[0].mxu0 %v1999
      %v2177 = vpop.f32.mrb[0].mxu0
      %v2178 = vadd.f32 0.0, %v2177
      %v2179 = vpop.f32.mrb[0].mxu0
      %2180 = vmatprep.mubr.f32.mxu0 0.0
      %2181 = vmatmul.mubr.f32.gmra.mrb[0].mxu0 %v2002
      %v2182 = vpop.f32.mrb[0].mxu0
      %v2183 = vadd.f32 0.0, %v2182
      %v2184 = vpop.f32.mrb[0].mxu0
      %2185 = vmatprep.mubr.f32.mxu0 0.0
      %2186 = vmatmul.mubr.f32.gmra.mrb[0].mxu0 %v2005
      %v2187 = vpop.f32.mrb[0].mxu0
      %v2188 = vadd.f32 0.0, %v2187
      %v2189 = vpop.f32.mrb[0].mxu0
      %2190 = vmatprep.mubr.f32.mxu0 0.0
      %2191 = vmatmul.mubr.f32.gmra.mrb[0].mxu0 %v2008
      %v2192 = vpop.f32.mrb[0].mxu0
      %v2193 = vadd.f32 0.0, %v2192
      %v2194 = vpop.f32.mrb[0].mxu0
      %2195 = vmatprep.mubr.f32.mxu0 0.0
      %2196 = vmatmul.mubr.f32.gmra.mrb[0].mxu0 %v2011
      %v2197 = vpop.f32.mrb[0].mxu0
      %v2198 = vadd.f32 0.0, %v2197
      %v2199 = vpop.f32.mrb[0].mxu0
      %2200 = vmatprep.mubr.f32.mxu0 0.0
      %2201 = vmatmul.mubr.f32.gmra.mrb[0].mxu0 %v2014
      %v2202 = vpop.f32.mrb[0].mxu0
      %v2203 = vadd.f32 0.0, %v2202
      %v2204 = vpop.f32.mrb[0].mxu0
      %2205 = vmatprep.mubr.f32.mxu0 0.0
      %2206 = vmatmul.mubr.f32.gmra.mrb[0].mxu0 %v2017
      %v2207 = vpop.f32.mrb[0].mxu0
      %v2208 = vadd.f32 0.0, %v2207
      %v2209 = vpop.f32.mrb[0].mxu0
      %2210 = vmatprep.mubr.f32.mxu0 0.0
      %2211 = vmatmul.mubr.f32.gmra.mrb[0].mxu0 %v2020
      %v2212 = vpop.f32.mrb[0].mxu0
      %v2213 = vadd.f32 0.0, %v2212
      %v2214 = vpop.f32.mrb[0].mxu0
      %2215 = vmatprep.mubr.f32.mxu0 0.0
      %2216 = vmatmul.mubr.f32.gmra.mrb[0].mxu0 %v2023
      %v2217 = vpop.f32.mrb[0].mxu0
      %v2218 = vadd.f32 0.0, %v2217
      %v2219 = vpop.f32.mrb[0].mxu0
      %2220 = vmatprep.mubr.f32.mxu0 0.0
      %2221 = vmatmul.mubr.f32.gmra.mrb[0].mxu0 %v2026
      %v2222 = vpop.f32.mrb[0].mxu0
      %v2223 = vadd.f32 0.0, %v2222
      %v2224 = vpop.f32.mrb[0].mxu0
      %2225 = vmatprep.mubr.f32.mxu0 0.0
      %2226 = vmatmul.mubr.f32.gmra.mrb[0].mxu0 %v2029
      %v2227 = vpop.f32.mrb[0].mxu0
      %v2228 = vadd.f32 0.0, %v2227
      %v2229 = vpop.f32.mrb[0].mxu0
      %2230 = vmatprep.mubr.f32.mxu0 0.0
      %2231 = vmatmul.mubr.f32.gmra.mrb[0].mxu0 %v2032
      %v2232 = vpop.f32.mrb[0].mxu0
      %v2233 = vadd.f32 0.0, %v2232
      %v2234 = vpop.f32.mrb[0].mxu0
      %2235 = vmatprep.mubr.f32.mxu0 0.0
      %2236 = vmatmul.mubr.f32.gmra.mrb[0].mxu0 %v2035
      %v2237 = vpop.f32.mrb[0].mxu0
      %v2238 = vadd.f32 0.0, %v2237
      %v2239 = vpop.f32.mrb[0].mxu0
      %2240 = vmatprep.mubr.f32.mxu0 0.0
      %2241 = vmatmul.mubr.f32.gmra.mrb[0].mxu0 %v2038
      %v2242 = vpop.f32.mrb[0].mxu0
      %v2243 = vadd.f32 0.0, %v2242
      %v2244 = vpop.f32.mrb[0].mxu0
      %2245 = vmatprep.mubr.f32.mxu0 0.0
      %2246 = vmatmul.mubr.f32.gmra.mrb[0].mxu0 %v2041
      %v2247 = vpop.f32.mrb[0].mxu0
      %v2248 = vadd.f32 0.0, %v2247
      %v2249 = vpop.f32.mrb[0].mxu0
      %2250 = vdwg.mxu0
      %v2251 = vadd.f32 %v1901, %v2113
      %v2252 = vadd.f32 %v1902, %v2118
      %v2253 = vadd.f32 %v1903, %v2123
      %v2254 = vadd.f32 %v1904, %v2128
      %v2255 = vadd.f32 %v1905, %v2133
      %v2256 = vadd.f32 %v1906, %v2138
      %v2257 = vadd.f32 %v1907, %v2143
      %v2258 = vadd.f32 %v1908, %v2148
      %v2259 = vadd.f32 %v1909, %v2153
      %v2260 = vadd.f32 %v1910, %v2158
      %v2261 = vadd.f32 %v1911, %v2163
      %v2262 = vadd.f32 %v1912, %v2168
      %v2263 = vadd.f32 %v1913, %v2173
      %v2264 = vadd.f32 %v1914, %v2178
      %v2265 = vadd.f32 %v1915, %v2183
      %v2266 = vadd.f32 %v1916, %v2188
      %v2267 = vadd.f32 %v1917, %v2193
      %v2268 = vadd.f32 %v1918, %v2198
      %v2269 = vadd.f32 %v1919, %v2203
      %v2270 = vadd.f32 %v1920, %v2208
      %v2271 = vadd.f32 %v1921, %v2213
      %v2272 = vadd.f32 %v1922, %v2218
      %v2273 = vadd.f32 %v1923, %v2223
      %v2274 = vadd.f32 %v1924, %v2228
      %v2275 = vadd.f32 %v1925, %v2233
      %v2276 = vadd.f32 %v1926, %v2238
      %v2277 = vadd.f32 %v1927, %v2243
      %v2278 = vadd.f32 %v1928, %v2248
      %v2279 = vld [vmem:[%s165 + $0x20] sm:$0xff]
      %v2280 = vld [vmem:[%s165 + $0x28] sm:$0xff]
      %v2281 = vld [vmem:[%s165 + $0x30] sm:$0xff]
      %v2282 = vld [vmem:[%s165 + $0x38] sm:$0xff]
      %v2283 = vld [vmem:[%s165 + $0x40] sm:$0xff]
      %v2284 = vld [vmem:[%s165 + $0x48] sm:$0xff]
      %v2285 = vld [vmem:[%s165 + $0x50] sm:$0xff]
      %v2286 = vld [vmem:[%s165 + $0x58] sm:$0xff]
      %v2287 = vld [vmem:[%s165 + $0x60] sm:$0xff]
      %v2288 = vld [vmem:[%s165 + $0x68] sm:$0xff]
      %v2289 = vld [vmem:[%s165 + $0x70] sm:$0xff]
      %v2290 = vld [vmem:[%s165 + $0x78] sm:$0xff]
      %v2291 = vld [vmem:[%s165 + $0x80] sm:$0xff]
      %v2292 = vld [vmem:[%s165 + $0x88] sm:$0xff]
      %v2293 = vld [vmem:[%s165 + $0x90] sm:$0xff]
      %v2294 = vld [vmem:[%s165 + $0x98] sm:$0xff]
      %v2295 = vld [vmem:[%s165 + $0xa0] sm:$0xff]
      %v2296 = vld [vmem:[%s165 + $0xa8] sm:$0xff]
      %v2297 = vld [vmem:[%s165 + $0xb0] sm:$0xff]
      %v2298 = vld [vmem:[%s165 + $0xb8] sm:$0xff]
      %v2299 = vld [vmem:[%s165 + $0xc0] sm:$0xff]
      %v2300 = vld [vmem:[%s165 + $0xc8] sm:$0xff]
      %v2301 = vld [vmem:[%s165 + $0xd0] sm:$0xff]
      %v2302 = vld [vmem:[%s165 + $0xd8] sm:$0xff]
      %v2303 = vld [vmem:[%s165 + $0xe0] sm:$0xff]
      %v2304 = vld [vmem:[%s165 + $0xe8] sm:$0xff]
      %v2305 = vld [vmem:[%s165 + $0xf0] sm:$0xff]
      %v2306 = vld [vmem:[%s165 + $0xf8] sm:$0xff]
      %s2307 = scalar_lea.vmem %s1, 24
      %v2308 = vld [vmem:[%s2307] sm:$0xf]
      %v2310 = vsel %vm207, %v2279, 0
      %v2313 = vsel %vm207, %v2280, 0
      %v2316 = vsel %vm207, %v2281, 0
      %v2319 = vsel %vm207, %v2282, 0
      %v2322 = vsel %vm207, %v2283, 0
      %v2325 = vsel %vm207, %v2284, 0
      %v2328 = vsel %vm207, %v2285, 0
      %v2331 = vsel %vm207, %v2286, 0
      %v2334 = vsel %vm207, %v2287, 0
      %v2337 = vsel %vm207, %v2288, 0
      %v2340 = vsel %vm207, %v2289, 0
      %v2343 = vsel %vm207, %v2290, 0
      %v2346 = vsel %vm207, %v2291, 0
      %v2349 = vsel %vm207, %v2292, 0
      %v2352 = vsel %vm207, %v2293, 0
      %v2355 = vsel %vm207, %v2294, 0
      %v2358 = vsel %vm207, %v2295, 0
      %v2361 = vsel %vm207, %v2296, 0
      %v2364 = vsel %vm207, %v2297, 0
      %v2367 = vsel %vm207, %v2298, 0
      %v2370 = vsel %vm207, %v2299, 0
      %v2373 = vsel %vm207, %v2300, 0
      %v2376 = vsel %vm207, %v2301, 0
      %v2379 = vsel %vm207, %v2302, 0
      %v2382 = vsel %vm207, %v2303, 0
      %v2385 = vsel %vm207, %v2304, 0
      %v2388 = vsel %vm207, %v2305, 0
      %v2391 = vsel %vm207, %v2306, 0
      %v2394 = vsel %vm292, %v2308, 0
      %2396 = vmatprep.subr.mxu0 0.0
      %2397 = vmatpush1.msra.mxu0 %v2394
      %2398 = vmatprep.subr.mxu0 0.0
      %2399 = vmatpush1.msra.mxu0 0.0
      %2400 = vmatprep.subr.mxu0 0.0
      %2401 = vmatpush1.msra.mxu0 0.0
      %2402 = vmatprep.subr.mxu0 0.0
      %2403 = vmatpush1.msra.mxu0 0.0
      %2404 = vmatprep.subr.mxu0 0.0
      %2405 = vmatpush1.msra.mxu0 0.0
      %2406 = vmatprep.subr.mxu0 0.0
      %2407 = vmatpush1.msra.mxu0 0.0
      %2408 = vmatprep.subr.mxu0 0.0
      %2409 = vmatpush1.msra.mxu0 0.0
      %2410 = vmatprep.subr.mxu0 0.0
      %2411 = vmatpush1.msra.mxu0 0.0
      %2412 = vmatprep.subr.mxu0 0.0
      %2413 = vmatpush1.msra.mxu0 0.0
      %2414 = vmatprep.subr.mxu0 0.0
      %2415 = vmatpush1.msra.mxu0 0.0
      %2416 = vmatprep.subr.mxu0 0.0
      %2417 = vmatpush1.msra.mxu0 0.0
      %2418 = vmatprep.subr.mxu0 0.0
      %2419 = vmatpush1.msra.mxu0 0.0
      %2420 = vmatprep.subr.mxu0 0.0
      %2421 = vmatpush1.msra.mxu0 0.0
      %2422 = vmatprep.subr.mxu0 0.0
      %2423 = vmatpush1.msra.mxu0 0.0
      %2424 = vmatprep.subr.mxu0 0.0
      %2425 = vmatpush1.msra.mxu0 0.0
      %2426 = vmatprep.subr.mxu0 0.0
      %2427 = vmatpush1.msra.mxu0 0.0
      %2428 = vmatprep.subr.mxu0 0.0
      %2429 = vmatpush1.msra.mxu0 0.0
      %2430 = vmatprep.subr.mxu0 0.0
      %2431 = vmatpush1.msra.mxu0 0.0
      %2432 = vmatprep.subr.mxu0 0.0
      %2433 = vmatpush1.msra.mxu0 0.0
      %2434 = vmatprep.subr.mxu0 0.0
      %2435 = vmatpush1.msra.mxu0 0.0
      %2436 = vmatprep.subr.mxu0 0.0
      %2437 = vmatpush1.msra.mxu0 0.0
      %2438 = vmatprep.subr.mxu0 0.0
      %2439 = vmatpush1.msra.mxu0 0.0
      %2440 = vmatprep.subr.mxu0 0.0
      %2441 = vmatpush1.msra.mxu0 0.0
      %2442 = vmatprep.subr.mxu0 0.0
      %2443 = vmatpush1.msra.mxu0 0.0
      %2444 = vmatprep.subr.mxu0 0.0
      %2445 = vmatpush1.msra.mxu0 0.0
      %2446 = vmatprep.subr.mxu0 0.0
      %2447 = vmatpush1.msra.mxu0 0.0
      %2448 = vmatprep.subr.mxu0 0.0
      %2449 = vmatpush1.msra.mxu0 0.0
      %2450 = vmatprep.subr.mxu0 0.0
      %2451 = vmatpush1.msra.mxu0 0.0
      %2452 = vmatprep.subr.mxu0 0.0
      %2453 = vmatpush1.msra.mxu0 0.0
      %2454 = vmatprep.subr.mxu0 0.0
      %2455 = vmatpush1.msra.mxu0 0.0
      %2456 = vmatprep.subr.mxu0 0.0
      %2457 = vmatpush1.msra.mxu0 0.0
      %2458 = vmatprep.subr.mxu0 0.0
      %2459 = vmatpush1.msra.mxu0 0.0
      %2460 = vmatprep.mubr.f32.mxu0 0.0
      %2461 = vmatmul.mubr.f32.gmra.mrb[0].mxu0 %v2310
      %v2462 = vpop.f32.mrb[0].mxu0
      %v2463 = vadd.f32 0.0, %v2462
      %v2464 = vpop.f32.mrb[0].mxu0
      %2465 = vmatprep.mubr.f32.mxu0 0.0
      %2466 = vmatmul.mubr.f32.gmra.mrb[0].mxu0 %v2313
      %v2467 = vpop.f32.mrb[0].mxu0
      %v2468 = vadd.f32 0.0, %v2467
      %v2469 = vpop.f32.mrb[0].mxu0
      %2470 = vmatprep.mubr.f32.mxu0 0.0
      %2471 = vmatmul.mubr.f32.gmra.mrb[0].mxu0 %v2316
      %v2472 = vpop.f32.mrb[0].mxu0
      %v2473 = vadd.f32 0.0, %v2472
      %v2474 = vpop.f32.mrb[0].mxu0
      %2475 = vmatprep.mubr.f32.mxu0 0.0
      %2476 = vmatmul.mubr.f32.gmra.mrb[0].mxu0 %v2319
      %v2477 = vpop.f32.mrb[0].mxu0
      %v2478 = vadd.f32 0.0, %v2477
      %v2479 = vpop.f32.mrb[0].mxu0
      %2480 = vmatprep.mubr.f32.mxu0 0.0
      %2481 = vmatmul.mubr.f32.gmra.mrb[0].mxu0 %v2322
      %v2482 = vpop.f32.mrb[0].mxu0
      %v2483 = vadd.f32 0.0, %v2482
      %v2484 = vpop.f32.mrb[0].mxu0
      %2485 = vmatprep.mubr.f32.mxu0 0.0
      %2486 = vmatmul.mubr.f32.gmra.mrb[0].mxu0 %v2325
      %v2487 = vpop.f32.mrb[0].mxu0
      %v2488 = vadd.f32 0.0, %v2487
      %v2489 = vpop.f32.mrb[0].mxu0
      %2490 = vmatprep.mubr.f32.mxu0 0.0
      %2491 = vmatmul.mubr.f32.gmra.mrb[0].mxu0 %v2328
      %v2492 = vpop.f32.mrb[0].mxu0
      %v2493 = vadd.f32 0.0, %v2492
      %v2494 = vpop.f32.mrb[0].mxu0
      %2495 = vmatprep.mubr.f32.mxu0 0.0
      %2496 = vmatmul.mubr.f32.gmra.mrb[0].mxu0 %v2331
      %v2497 = vpop.f32.mrb[0].mxu0
      %v2498 = vadd.f32 0.0, %v2497
      %v2499 = vpop.f32.mrb[0].mxu0
      %2500 = vmatprep.mubr.f32.mxu0 0.0
      %2501 = vmatmul.mubr.f32.gmra.mrb[0].mxu0 %v2334
      %v2502 = vpop.f32.mrb[0].mxu0
      %v2503 = vadd.f32 0.0, %v2502
      %v2504 = vpop.f32.mrb[0].mxu0
      %2505 = vmatprep.mubr.f32.mxu0 0.0
      %2506 = vmatmul.mubr.f32.gmra.mrb[0].mxu0 %v2337
      %v2507 = vpop.f32.mrb[0].mxu0
      %v2508 = vadd.f32 0.0, %v2507
      %v2509 = vpop.f32.mrb[0].mxu0
      %2510 = vmatprep.mubr.f32.mxu0 0.0
      %2511 = vmatmul.mubr.f32.gmra.mrb[0].mxu0 %v2340
      %v2512 = vpop.f32.mrb[0].mxu0
      %v2513 = vadd.f32 0.0, %v2512
      %v2514 = vpop.f32.mrb[0].mxu0
      %2515 = vmatprep.mubr.f32.mxu0 0.0
      %2516 = vmatmul.mubr.f32.gmra.mrb[0].mxu0 %v2343
      %v2517 = vpop.f32.mrb[0].mxu0
      %v2518 = vadd.f32 0.0, %v2517
      %v2519 = vpop.f32.mrb[0].mxu0
      %2520 = vmatprep.mubr.f32.mxu0 0.0
      %2521 = vmatmul.mubr.f32.gmra.mrb[0].mxu0 %v2346
      %v2522 = vpop.f32.mrb[0].mxu0
      %v2523 = vadd.f32 0.0, %v2522
      %v2524 = vpop.f32.mrb[0].mxu0
      %2525 = vmatprep.mubr.f32.mxu0 0.0
      %2526 = vmatmul.mubr.f32.gmra.mrb[0].mxu0 %v2349
      %v2527 = vpop.f32.mrb[0].mxu0
      %v2528 = vadd.f32 0.0, %v2527
      %v2529 = vpop.f32.mrb[0].mxu0
      %2530 = vmatprep.mubr.f32.mxu0 0.0
      %2531 = vmatmul.mubr.f32.gmra.mrb[0].mxu0 %v2352
      %v2532 = vpop.f32.mrb[0].mxu0
      %v2533 = vadd.f32 0.0, %v2532
      %v2534 = vpop.f32.mrb[0].mxu0
      %2535 = vmatprep.mubr.f32.mxu0 0.0
      %2536 = vmatmul.mubr.f32.gmra.mrb[0].mxu0 %v2355
      %v2537 = vpop.f32.mrb[0].mxu0
      %v2538 = vadd.f32 0.0, %v2537
      %v2539 = vpop.f32.mrb[0].mxu0
      %2540 = vmatprep.mubr.f32.mxu0 0.0
      %2541 = vmatmul.mubr.f32.gmra.mrb[0].mxu0 %v2358
      %v2542 = vpop.f32.mrb[0].mxu0
      %v2543 = vadd.f32 0.0, %v2542
      %v2544 = vpop.f32.mrb[0].mxu0
      %2545 = vmatprep.mubr.f32.mxu0 0.0
      %2546 = vmatmul.mubr.f32.gmra.mrb[0].mxu0 %v2361
      %v2547 = vpop.f32.mrb[0].mxu0
      %v2548 = vadd.f32 0.0, %v2547
      %v2549 = vpop.f32.mrb[0].mxu0
      %2550 = vmatprep.mubr.f32.mxu0 0.0
      %2551 = vmatmul.mubr.f32.gmra.mrb[0].mxu0 %v2364
      %v2552 = vpop.f32.mrb[0].mxu0
      %v2553 = vadd.f32 0.0, %v2552
      %v2554 = vpop.f32.mrb[0].mxu0
      %2555 = vmatprep.mubr.f32.mxu0 0.0
      %2556 = vmatmul.mubr.f32.gmra.mrb[0].mxu0 %v2367
      %v2557 = vpop.f32.mrb[0].mxu0
      %v2558 = vadd.f32 0.0, %v2557
      %v2559 = vpop.f32.mrb[0].mxu0
      %2560 = vmatprep.mubr.f32.mxu0 0.0
      %2561 = vmatmul.mubr.f32.gmra.mrb[0].mxu0 %v2370
      %v2562 = vpop.f32.mrb[0].mxu0
      %v2563 = vadd.f32 0.0, %v2562
      %v2564 = vpop.f32.mrb[0].mxu0
      %2565 = vmatprep.mubr.f32.mxu0 0.0
      %2566 = vmatmul.mubr.f32.gmra.mrb[0].mxu0 %v2373
      %v2567 = vpop.f32.mrb[0].mxu0
      %v2568 = vadd.f32 0.0, %v2567
      %v2569 = vpop.f32.mrb[0].mxu0
      %2570 = vmatprep.mubr.f32.mxu0 0.0
      %2571 = vmatmul.mubr.f32.gmra.mrb[0].mxu0 %v2376
      %v2572 = vpop.f32.mrb[0].mxu0
      %v2573 = vadd.f32 0.0, %v2572
      %v2574 = vpop.f32.mrb[0].mxu0
      %2575 = vmatprep.mubr.f32.mxu0 0.0
      %2576 = vmatmul.mubr.f32.gmra.mrb[0].mxu0 %v2379
      %v2577 = vpop.f32.mrb[0].mxu0
      %v2578 = vadd.f32 0.0, %v2577
      %v2579 = vpop.f32.mrb[0].mxu0
      %2580 = vmatprep.mubr.f32.mxu0 0.0
      %2581 = vmatmul.mubr.f32.gmra.mrb[0].mxu0 %v2382
      %v2582 = vpop.f32.mrb[0].mxu0
      %v2583 = vadd.f32 0.0, %v2582
      %v2584 = vpop.f32.mrb[0].mxu0
      %2585 = vmatprep.mubr.f32.mxu0 0.0
      %2586 = vmatmul.mubr.f32.gmra.mrb[0].mxu0 %v2385
      %v2587 = vpop.f32.mrb[0].mxu0
      %v2588 = vadd.f32 0.0, %v2587
      %v2589 = vpop.f32.mrb[0].mxu0
      %2590 = vmatprep.mubr.f32.mxu0 0.0
      %2591 = vmatmul.mubr.f32.gmra.mrb[0].mxu0 %v2388
      %v2592 = vpop.f32.mrb[0].mxu0
      %v2593 = vadd.f32 0.0, %v2592
      %v2594 = vpop.f32.mrb[0].mxu0
      %2595 = vmatprep.mubr.f32.mxu0 0.0
      %2596 = vmatmul.mubr.f32.gmra.mrb[0].mxu0 %v2391
      %v2597 = vpop.f32.mrb[0].mxu0
      %v2598 = vadd.f32 0.0, %v2597
      %v2599 = vpop.f32.mrb[0].mxu0
      %2600 = vdwg.mxu0
      %v2601 = vadd.f32 %v2251, %v2463
      %v2602 = vadd.f32 %v2252, %v2468
      %v2603 = vadd.f32 %v2253, %v2473
      %v2604 = vadd.f32 %v2254, %v2478
      %v2605 = vadd.f32 %v2255, %v2483
      %v2606 = vadd.f32 %v2256, %v2488
      %v2607 = vadd.f32 %v2257, %v2493
      %v2608 = vadd.f32 %v2258, %v2498
      %v2609 = vadd.f32 %v2259, %v2503
      %v2610 = vadd.f32 %v2260, %v2508
      %v2611 = vadd.f32 %v2261, %v2513
      %v2612 = vadd.f32 %v2262, %v2518
      %v2613 = vadd.f32 %v2263, %v2523
      %v2614 = vadd.f32 %v2264, %v2528
      %v2615 = vadd.f32 %v2265, %v2533
      %v2616 = vadd.f32 %v2266, %v2538
      %v2617 = vadd.f32 %v2267, %v2543
      %v2618 = vadd.f32 %v2268, %v2548
      %v2619 = vadd.f32 %v2269, %v2553
      %v2620 = vadd.f32 %v2270, %v2558
      %v2621 = vadd.f32 %v2271, %v2563
      %v2622 = vadd.f32 %v2272, %v2568
      %v2623 = vadd.f32 %v2273, %v2573
      %v2624 = vadd.f32 %v2274, %v2578
      %v2625 = vadd.f32 %v2275, %v2583
      %v2626 = vadd.f32 %v2276, %v2588
      %v2627 = vadd.f32 %v2277, %v2593
      %v2628 = vadd.f32 %v2278, %v2598
      %v2629 = vld [vmem:[%s165 + $0x21] sm:$0xff]
      %v2630 = vld [vmem:[%s165 + $0x29] sm:$0xff]
      %v2631 = vld [vmem:[%s165 + $0x31] sm:$0xff]
      %v2632 = vld [vmem:[%s165 + $0x39] sm:$0xff]
      %v2633 = vld [vmem:[%s165 + $0x41] sm:$0xff]
      %v2634 = vld [vmem:[%s165 + $0x49] sm:$0xff]
      %v2635 = vld [vmem:[%s165 + $0x51] sm:$0xff]
      %v2636 = vld [vmem:[%s165 + $0x59] sm:$0xff]
      %v2637 = vld [vmem:[%s165 + $0x61] sm:$0xff]
      %v2638 = vld [vmem:[%s165 + $0x69] sm:$0xff]
      %v2639 = vld [vmem:[%s165 + $0x71] sm:$0xff]
      %v2640 = vld [vmem:[%s165 + $0x79] sm:$0xff]
      %v2641 = vld [vmem:[%s165 + $0x81] sm:$0xff]
      %v2642 = vld [vmem:[%s165 + $0x89] sm:$0xff]
      %v2643 = vld [vmem:[%s165 + $0x91] sm:$0xff]
      %v2644 = vld [vmem:[%s165 + $0x99] sm:$0xff]
      %v2645 = vld [vmem:[%s165 + $0xa1] sm:$0xff]
      %v2646 = vld [vmem:[%s165 + $0xa9] sm:$0xff]
      %v2647 = vld [vmem:[%s165 + $0xb1] sm:$0xff]
      %v2648 = vld [vmem:[%s165 + $0xb9] sm:$0xff]
      %v2649 = vld [vmem:[%s165 + $0xc1] sm:$0xff]
      %v2650 = vld [vmem:[%s165 + $0xc9] sm:$0xff]
      %v2651 = vld [vmem:[%s165 + $0xd1] sm:$0xff]
      %v2652 = vld [vmem:[%s165 + $0xd9] sm:$0xff]
      %v2653 = vld [vmem:[%s165 + $0xe1] sm:$0xff]
      %v2654 = vld [vmem:[%s165 + $0xe9] sm:$0xff]
      %v2655 = vld [vmem:[%s165 + $0xf1] sm:$0xff]
      %v2656 = vld [vmem:[%s165 + $0xf9] sm:$0xff]
      %s2657 = scalar_lea.vmem %s1, 28
      %v2658 = vld [vmem:[%s2657] sm:$0xf]
      %v2660 = vsel %vm207, %v2629, 0
      %v2663 = vsel %vm207, %v2630, 0
      %v2666 = vsel %vm207, %v2631, 0
      %v2669 = vsel %vm207, %v2632, 0
      %v2672 = vsel %vm207, %v2633, 0
      %v2675 = vsel %vm207, %v2634, 0
      %v2678 = vsel %vm207, %v2635, 0
      %v2681 = vsel %vm207, %v2636, 0
      %v2684 = vsel %vm207, %v2637, 0
      %v2687 = vsel %vm207, %v2638, 0
      %v2690 = vsel %vm207, %v2639, 0
      %v2693 = vsel %vm207, %v2640, 0
      %v2696 = vsel %vm207, %v2641, 0
      %v2699 = vsel %vm207, %v2642, 0
      %v2702 = vsel %vm207, %v2643, 0
      %v2705 = vsel %vm207, %v2644, 0
      %v2708 = vsel %vm207, %v2645, 0
      %v2711 = vsel %vm207, %v2646, 0
      %v2714 = vsel %vm207, %v2647, 0
      %v2717 = vsel %vm207, %v2648, 0
      %v2720 = vsel %vm207, %v2649, 0
      %v2723 = vsel %vm207, %v2650, 0
      %v2726 = vsel %vm207, %v2651, 0
      %v2729 = vsel %vm207, %v2652, 0
      %v2732 = vsel %vm207, %v2653, 0
      %v2735 = vsel %vm207, %v2654, 0
      %v2738 = vsel %vm207, %v2655, 0
      %v2741 = vsel %vm207, %v2656, 0
      %v2744 = vsel %vm292, %v2658, 0
      %2746 = vmatprep.subr.mxu0 0.0
      %2747 = vmatpush1.msra.mxu0 %v2744
      %2748 = vmatprep.subr.mxu0 0.0
      %2749 = vmatpush1.msra.mxu0 0.0
      %2750 = vmatprep.subr.mxu0 0.0
      %2751 = vmatpush1.msra.mxu0 0.0
      %2752 = vmatprep.subr.mxu0 0.0
      %2753 = vmatpush1.msra.mxu0 0.0
      %2754 = vmatprep.subr.mxu0 0.0
      %2755 = vmatpush1.msra.mxu0 0.0
      %2756 = vmatprep.subr.mxu0 0.0
      %2757 = vmatpush1.msra.mxu0 0.0
      %2758 = vmatprep.subr.mxu0 0.0
      %2759 = vmatpush1.msra.mxu0 0.0
      %2760 = vmatprep.subr.mxu0 0.0
      %2761 = vmatpush1.msra.mxu0 0.0
      %2762 = vmatprep.subr.mxu0 0.0
      %2763 = vmatpush1.msra.mxu0 0.0
      %2764 = vmatprep.subr.mxu0 0.0
      %2765 = vmatpush1.msra.mxu0 0.0
      %2766 = vmatprep.subr.mxu0 0.0
      %2767 = vmatpush1.msra.mxu0 0.0
      %2768 = vmatprep.subr.mxu0 0.0
      %2769 = vmatpush1.msra.mxu0 0.0
      %2770 = vmatprep.subr.mxu0 0.0
      %2771 = vmatpush1.msra.mxu0 0.0
      %2772 = vmatprep.subr.mxu0 0.0
      %2773 = vmatpush1.msra.mxu0 0.0
      %2774 = vmatprep.subr.mxu0 0.0
      %2775 = vmatpush1.msra.mxu0 0.0
      %2776 = vmatprep.subr.mxu0 0.0
      %2777 = vmatpush1.msra.mxu0 0.0
      %2778 = vmatprep.subr.mxu0 0.0
      %2779 = vmatpush1.msra.mxu0 0.0
      %2780 = vmatprep.subr.mxu0 0.0
      %2781 = vmatpush1.msra.mxu0 0.0
      %2782 = vmatprep.subr.mxu0 0.0
      %2783 = vmatpush1.msra.mxu0 0.0
      %2784 = vmatprep.subr.mxu0 0.0
      %2785 = vmatpush1.msra.mxu0 0.0
      %2786 = vmatprep.subr.mxu0 0.0
      %2787 = vmatpush1.msra.mxu0 0.0
      %2788 = vmatprep.subr.mxu0 0.0
      %2789 = vmatpush1.msra.mxu0 0.0
      %2790 = vmatprep.subr.mxu0 0.0
      %2791 = vmatpush1.msra.mxu0 0.0
      %2792 = vmatprep.subr.mxu0 0.0
      %2793 = vmatpush1.msra.mxu0 0.0
      %2794 = vmatprep.subr.mxu0 0.0
      %2795 = vmatpush1.msra.mxu0 0.0
      %2796 = vmatprep.subr.mxu0 0.0
      %2797 = vmatpush1.msra.mxu0 0.0
      %2798 = vmatprep.subr.mxu0 0.0
      %2799 = vmatpush1.msra.mxu0 0.0
      %2800 = vmatprep.subr.mxu0 0.0
      %2801 = vmatpush1.msra.mxu0 0.0
      %2802 = vmatprep.subr.mxu0 0.0
      %2803 = vmatpush1.msra.mxu0 0.0
      %2804 = vmatprep.subr.mxu0 0.0
      %2805 = vmatpush1.msra.mxu0 0.0
      %2806 = vmatprep.subr.mxu0 0.0
      %2807 = vmatpush1.msra.mxu0 0.0
      %2808 = vmatprep.subr.mxu0 0.0
      %2809 = vmatpush1.msra.mxu0 0.0
      %2810 = vmatprep.mubr.f32.mxu0 0.0
      %2811 = vmatmul.mubr.f32.gmra.mrb[0].mxu0 %v2660
      %v2812 = vpop.f32.mrb[0].mxu0
      %v2813 = vadd.f32 0.0, %v2812
      %v2814 = vpop.f32.mrb[0].mxu0
      %2815 = vmatprep.mubr.f32.mxu0 0.0
      %2816 = vmatmul.mubr.f32.gmra.mrb[0].mxu0 %v2663
      %v2817 = vpop.f32.mrb[0].mxu0
      %v2818 = vadd.f32 0.0, %v2817
      %v2819 = vpop.f32.mrb[0].mxu0
      %2820 = vmatprep.mubr.f32.mxu0 0.0
      %2821 = vmatmul.mubr.f32.gmra.mrb[0].mxu0 %v2666
      %v2822 = vpop.f32.mrb[0].mxu0
      %v2823 = vadd.f32 0.0, %v2822
      %v2824 = vpop.f32.mrb[0].mxu0
      %2825 = vmatprep.mubr.f32.mxu0 0.0
      %2826 = vmatmul.mubr.f32.gmra.mrb[0].mxu0 %v2669
      %v2827 = vpop.f32.mrb[0].mxu0
      %v2828 = vadd.f32 0.0, %v2827
      %v2829 = vpop.f32.mrb[0].mxu0
      %2830 = vmatprep.mubr.f32.mxu0 0.0
      %2831 = vmatmul.mubr.f32.gmra.mrb[0].mxu0 %v2672
      %v2832 = vpop.f32.mrb[0].mxu0
      %v2833 = vadd.f32 0.0, %v2832
      %v2834 = vpop.f32.mrb[0].mxu0
      %2835 = vmatprep.mubr.f32.mxu0 0.0
      %2836 = vmatmul.mubr.f32.gmra.mrb[0].mxu0 %v2675
      %v2837 = vpop.f32.mrb[0].mxu0
      %v2838 = vadd.f32 0.0, %v2837
      %v2839 = vpop.f32.mrb[0].mxu0
      %2840 = vmatprep.mubr.f32.mxu0 0.0
      %2841 = vmatmul.mubr.f32.gmra.mrb[0].mxu0 %v2678
      %v2842 = vpop.f32.mrb[0].mxu0
      %v2843 = vadd.f32 0.0, %v2842
      %v2844 = vpop.f32.mrb[0].mxu0
      %2845 = vmatprep.mubr.f32.mxu0 0.0
      %2846 = vmatmul.mubr.f32.gmra.mrb[0].mxu0 %v2681
      %v2847 = vpop.f32.mrb[0].mxu0
      %v2848 = vadd.f32 0.0, %v2847
      %v2849 = vpop.f32.mrb[0].mxu0
      %2850 = vmatprep.mubr.f32.mxu0 0.0
      %2851 = vmatmul.mubr.f32.gmra.mrb[0].mxu0 %v2684
      %v2852 = vpop.f32.mrb[0].mxu0
      %v2853 = vadd.f32 0.0, %v2852
      %v2854 = vpop.f32.mrb[0].mxu0
      %2855 = vmatprep.mubr.f32.mxu0 0.0
      %2856 = vmatmul.mubr.f32.gmra.mrb[0].mxu0 %v2687
      %v2857 = vpop.f32.mrb[0].mxu0
      %v2858 = vadd.f32 0.0, %v2857
      %v2859 = vpop.f32.mrb[0].mxu0
      %2860 = vmatprep.mubr.f32.mxu0 0.0
      %2861 = vmatmul.mubr.f32.gmra.mrb[0].mxu0 %v2690
      %v2862 = vpop.f32.mrb[0].mxu0
      %v2863 = vadd.f32 0.0, %v2862
      %v2864 = vpop.f32.mrb[0].mxu0
      %2865 = vmatprep.mubr.f32.mxu0 0.0
      %2866 = vmatmul.mubr.f32.gmra.mrb[0].mxu0 %v2693
      %v2867 = vpop.f32.mrb[0].mxu0
      %v2868 = vadd.f32 0.0, %v2867
      %v2869 = vpop.f32.mrb[0].mxu0
      %2870 = vmatprep.mubr.f32.mxu0 0.0
      %2871 = vmatmul.mubr.f32.gmra.mrb[0].mxu0 %v2696
      %v2872 = vpop.f32.mrb[0].mxu0
      %v2873 = vadd.f32 0.0, %v2872
      %v2874 = vpop.f32.mrb[0].mxu0
      %2875 = vmatprep.mubr.f32.mxu0 0.0
      %2876 = vmatmul.mubr.f32.gmra.mrb[0].mxu0 %v2699
      %v2877 = vpop.f32.mrb[0].mxu0
      %v2878 = vadd.f32 0.0, %v2877
      %v2879 = vpop.f32.mrb[0].mxu0
      %2880 = vmatprep.mubr.f32.mxu0 0.0
      %2881 = vmatmul.mubr.f32.gmra.mrb[0].mxu0 %v2702
      %v2882 = vpop.f32.mrb[0].mxu0
      %v2883 = vadd.f32 0.0, %v2882
      %v2884 = vpop.f32.mrb[0].mxu0
      %2885 = vmatprep.mubr.f32.mxu0 0.0
      %2886 = vmatmul.mubr.f32.gmra.mrb[0].mxu0 %v2705
      %v2887 = vpop.f32.mrb[0].mxu0
      %v2888 = vadd.f32 0.0, %v2887
      %v2889 = vpop.f32.mrb[0].mxu0
      %2890 = vmatprep.mubr.f32.mxu0 0.0
      %2891 = vmatmul.mubr.f32.gmra.mrb[0].mxu0 %v2708
      %v2892 = vpop.f32.mrb[0].mxu0
      %v2893 = vadd.f32 0.0, %v2892
      %v2894 = vpop.f32.mrb[0].mxu0
      %2895 = vmatprep.mubr.f32.mxu0 0.0
      %2896 = vmatmul.mubr.f32.gmra.mrb[0].mxu0 %v2711
      %v2897 = vpop.f32.mrb[0].mxu0
      %v2898 = vadd.f32 0.0, %v2897
      %v2899 = vpop.f32.mrb[0].mxu0
      %2900 = vmatprep.mubr.f32.mxu0 0.0
      %2901 = vmatmul.mubr.f32.gmra.mrb[0].mxu0 %v2714
      %v2902 = vpop.f32.mrb[0].mxu0
      %v2903 = vadd.f32 0.0, %v2902
      %v2904 = vpop.f32.mrb[0].mxu0
      %2905 = vmatprep.mubr.f32.mxu0 0.0
      %2906 = vmatmul.mubr.f32.gmra.mrb[0].mxu0 %v2717
      %v2907 = vpop.f32.mrb[0].mxu0
      %v2908 = vadd.f32 0.0, %v2907
      %v2909 = vpop.f32.mrb[0].mxu0
      %2910 = vmatprep.mubr.f32.mxu0 0.0
      %2911 = vmatmul.mubr.f32.gmra.mrb[0].mxu0 %v2720
      %v2912 = vpop.f32.mrb[0].mxu0
      %v2913 = vadd.f32 0.0, %v2912
      %v2914 = vpop.f32.mrb[0].mxu0
      %2915 = vmatprep.mubr.f32.mxu0 0.0
      %2916 = vmatmul.mubr.f32.gmra.mrb[0].mxu0 %v2723
      %v2917 = vpop.f32.mrb[0].mxu0
      %v2918 = vadd.f32 0.0, %v2917
      %v2919 = vpop.f32.mrb[0].mxu0
      %2920 = vmatprep.mubr.f32.mxu0 0.0
      %2921 = vmatmul.mubr.f32.gmra.mrb[0].mxu0 %v2726
      %v2922 = vpop.f32.mrb[0].mxu0
      %v2923 = vadd.f32 0.0, %v2922
      %v2924 = vpop.f32.mrb[0].mxu0
      %2925 = vmatprep.mubr.f32.mxu0 0.0
      %2926 = vmatmul.mubr.f32.gmra.mrb[0].mxu0 %v2729
      %v2927 = vpop.f32.mrb[0].mxu0
      %v2928 = vadd.f32 0.0, %v2927
      %v2929 = vpop.f32.mrb[0].mxu0
      %2930 = vmatprep.mubr.f32.mxu0 0.0
      %2931 = vmatmul.mubr.f32.gmra.mrb[0].mxu0 %v2732
      %v2932 = vpop.f32.mrb[0].mxu0
      %v2933 = vadd.f32 0.0, %v2932
      %v2934 = vpop.f32.mrb[0].mxu0
      %2935 = vmatprep.mubr.f32.mxu0 0.0
      %2936 = vmatmul.mubr.f32.gmra.mrb[0].mxu0 %v2735
      %v2937 = vpop.f32.mrb[0].mxu0
      %v2938 = vadd.f32 0.0, %v2937
      %v2939 = vpop.f32.mrb[0].mxu0
      %2940 = vmatprep.mubr.f32.mxu0 0.0
      %2941 = vmatmul.mubr.f32.gmra.mrb[0].mxu0 %v2738
      %v2942 = vpop.f32.mrb[0].mxu0
      %v2943 = vadd.f32 0.0, %v2942
      %v2944 = vpop.f32.mrb[0].mxu0
      %2945 = vmatprep.mubr.f32.mxu0 0.0
      %2946 = vmatmul.mubr.f32.gmra.mrb[0].mxu0 %v2741
      %v2947 = vpop.f32.mrb[0].mxu0
      %v2948 = vadd.f32 0.0, %v2947
      %v2949 = vpop.f32.mrb[0].mxu0
      %2950 = vdwg.mxu0
      %v2951 = vadd.f32 %v2601, %v2813
      %v2952 = vadd.f32 %v2602, %v2818
      %v2953 = vadd.f32 %v2603, %v2823
      %v2954 = vadd.f32 %v2604, %v2828
      %v2955 = vadd.f32 %v2605, %v2833
      %v2956 = vadd.f32 %v2606, %v2838
      %v2957 = vadd.f32 %v2607, %v2843
      %v2958 = vadd.f32 %v2608, %v2848
      %v2959 = vadd.f32 %v2609, %v2853
      %v2960 = vadd.f32 %v2610, %v2858
      %v2961 = vadd.f32 %v2611, %v2863
      %v2962 = vadd.f32 %v2612, %v2868
      %v2963 = vadd.f32 %v2613, %v2873
      %v2964 = vadd.f32 %v2614, %v2878
      %v2965 = vadd.f32 %v2615, %v2883
      %v2966 = vadd.f32 %v2616, %v2888
      %v2967 = vadd.f32 %v2617, %v2893
      %v2968 = vadd.f32 %v2618, %v2898
      %v2969 = vadd.f32 %v2619, %v2903
      %v2970 = vadd.f32 %v2620, %v2908
      %v2971 = vadd.f32 %v2621, %v2913
      %v2972 = vadd.f32 %v2622, %v2918
      %v2973 = vadd.f32 %v2623, %v2923
      %v2974 = vadd.f32 %v2624, %v2928
      %v2975 = vadd.f32 %v2625, %v2933
      %v2976 = vadd.f32 %v2626, %v2938
      %v2977 = vadd.f32 %v2627, %v2943
      %v2978 = vadd.f32 %v2628, %v2948
      %v2979 = vld [vmem:[%s165 + $0x22] sm:$0xff]
      %v2980 = vld [vmem:[%s165 + $0x2a] sm:$0xff]
      %v2981 = vld [vmem:[%s165 + $0x32] sm:$0xff]
      %v2982 = vld [vmem:[%s165 + $0x3a] sm:$0xff]
      %v2983 = vld [vmem:[%s165 + $0x42] sm:$0xff]
      %v2984 = vld [vmem:[%s165 + $0x4a] sm:$0xff]
      %v2985 = vld [vmem:[%s165 + $0x52] sm:$0xff]
      %v2986 = vld [vmem:[%s165 + $0x5a] sm:$0xff]
      %v2987 = vld [vmem:[%s165 + $0x62] sm:$0xff]
      %v2988 = vld [vmem:[%s165 + $0x6a] sm:$0xff]
      %v2989 = vld [vmem:[%s165 + $0x72] sm:$0xff]
      %v2990 = vld [vmem:[%s165 + $0x7a] sm:$0xff]
      %v2991 = vld [vmem:[%s165 + $0x82] sm:$0xff]
      %v2992 = vld [vmem:[%s165 + $0x8a] sm:$0xff]
      %v2993 = vld [vmem:[%s165 + $0x92] sm:$0xff]
      %v2994 = vld [vmem:[%s165 + $0x9a] sm:$0xff]
      %v2995 = vld [vmem:[%s165 + $0xa2] sm:$0xff]
      %v2996 = vld [vmem:[%s165 + $0xaa] sm:$0xff]
      %v2997 = vld [vmem:[%s165 + $0xb2] sm:$0xff]
      %v2998 = vld [vmem:[%s165 + $0xba] sm:$0xff]
      %v2999 = vld [vmem:[%s165 + $0xc2] sm:$0xff]
      %v3000 = vld [vmem:[%s165 + $0xca] sm:$0xff]
      %v3001 = vld [vmem:[%s165 + $0xd2] sm:$0xff]
      %v3002 = vld [vmem:[%s165 + $0xda] sm:$0xff]
      %v3003 = vld [vmem:[%s165 + $0xe2] sm:$0xff]
      %v3004 = vld [vmem:[%s165 + $0xea] sm:$0xff]
      %v3005 = vld [vmem:[%s165 + $0xf2] sm:$0xff]
      %v3006 = vld [vmem:[%s165 + $0xfa] sm:$0xff]
      %s3007 = scalar_lea.vmem %s1, 32
      %v3008 = vld [vmem:[%s3007] sm:$0xf]
      %v3010 = vsel %vm207, %v2979, 0
      %v3013 = vsel %vm207, %v2980, 0
      %v3016 = vsel %vm207, %v2981, 0
      %v3019 = vsel %vm207, %v2982, 0
      %v3022 = vsel %vm207, %v2983, 0
      %v3025 = vsel %vm207, %v2984, 0
      %v3028 = vsel %vm207, %v2985, 0
      %v3031 = vsel %vm207, %v2986, 0
      %v3034 = vsel %vm207, %v2987, 0
      %v3037 = vsel %vm207, %v2988, 0
      %v3040 = vsel %vm207, %v2989, 0
      %v3043 = vsel %vm207, %v2990, 0
      %v3046 = vsel %vm207, %v2991, 0
      %v3049 = vsel %vm207, %v2992, 0
      %v3052 = vsel %vm207, %v2993, 0
      %v3055 = vsel %vm207, %v2994, 0
      %v3058 = vsel %vm207, %v2995, 0
      %v3061 = vsel %vm207, %v2996, 0
      %v3064 = vsel %vm207, %v2997, 0
      %v3067 = vsel %vm207, %v2998, 0
      %v3070 = vsel %vm207, %v2999, 0
      %v3073 = vsel %vm207, %v3000, 0
      %v3076 = vsel %vm207, %v3001, 0
      %v3079 = vsel %vm207, %v3002, 0
      %v3082 = vsel %vm207, %v3003, 0
      %v3085 = vsel %vm207, %v3004, 0
      %v3088 = vsel %vm207, %v3005, 0
      %v3091 = vsel %vm207, %v3006, 0
      %v3094 = vsel %vm292, %v3008, 0
      %3096 = vmatprep.subr.mxu0 0.0
      %3097 = vmatpush1.msra.mxu0 %v3094
      %3098 = vmatprep.subr.mxu0 0.0
      %3099 = vmatpush1.msra.mxu0 0.0
      %3100 = vmatprep.subr.mxu0 0.0
      %3101 = vmatpush1.msra.mxu0 0.0
      %3102 = vmatprep.subr.mxu0 0.0
      %3103 = vmatpush1.msra.mxu0 0.0
      %3104 = vmatprep.subr.mxu0 0.0
      %3105 = vmatpush1.msra.mxu0 0.0
      %3106 = vmatprep.subr.mxu0 0.0
      %3107 = vmatpush1.msra.mxu0 0.0
      %3108 = vmatprep.subr.mxu0 0.0
      %3109 = vmatpush1.msra.mxu0 0.0
      %3110 = vmatprep.subr.mxu0 0.0
      %3111 = vmatpush1.msra.mxu0 0.0
      %3112 = vmatprep.subr.mxu0 0.0
      %3113 = vmatpush1.msra.mxu0 0.0
      %3114 = vmatprep.subr.mxu0 0.0
      %3115 = vmatpush1.msra.mxu0 0.0
      %3116 = vmatprep.subr.mxu0 0.0
      %3117 = vmatpush1.msra.mxu0 0.0
      %3118 = vmatprep.subr.mxu0 0.0
      %3119 = vmatpush1.msra.mxu0 0.0
      %3120 = vmatprep.subr.mxu0 0.0
      %3121 = vmatpush1.msra.mxu0 0.0
      %3122 = vmatprep.subr.mxu0 0.0
      %3123 = vmatpush1.msra.mxu0 0.0
      %3124 = vmatprep.subr.mxu0 0.0
      %3125 = vmatpush1.msra.mxu0 0.0
      %3126 = vmatprep.subr.mxu0 0.0
      %3127 = vmatpush1.msra.mxu0 0.0
      %3128 = vmatprep.subr.mxu0 0.0
      %3129 = vmatpush1.msra.mxu0 0.0
      %3130 = vmatprep.subr.mxu0 0.0
      %3131 = vmatpush1.msra.mxu0 0.0
      %3132 = vmatprep.subr.mxu0 0.0
      %3133 = vmatpush1.msra.mxu0 0.0
      %3134 = vmatprep.subr.mxu0 0.0
      %3135 = vmatpush1.msra.mxu0 0.0
      %3136 = vmatprep.subr.mxu0 0.0
      %3137 = vmatpush1.msra.mxu0 0.0
      %3138 = vmatprep.subr.mxu0 0.0
      %3139 = vmatpush1.msra.mxu0 0.0
      %3140 = vmatprep.subr.mxu0 0.0
      %3141 = vmatpush1.msra.mxu0 0.0
      %3142 = vmatprep.subr.mxu0 0.0
      %3143 = vmatpush1.msra.mxu0 0.0
      %3144 = vmatprep.subr.mxu0 0.0
      %3145 = vmatpush1.msra.mxu0 0.0
      %3146 = vmatprep.subr.mxu0 0.0
      %3147 = vmatpush1.msra.mxu0 0.0
      %3148 = vmatprep.subr.mxu0 0.0
      %3149 = vmatpush1.msra.mxu0 0.0
      %3150 = vmatprep.subr.mxu0 0.0
      %3151 = vmatpush1.msra.mxu0 0.0
      %3152 = vmatprep.subr.mxu0 0.0
      %3153 = vmatpush1.msra.mxu0 0.0
      %3154 = vmatprep.subr.mxu0 0.0
      %3155 = vmatpush1.msra.mxu0 0.0
      %3156 = vmatprep.subr.mxu0 0.0
      %3157 = vmatpush1.msra.mxu0 0.0
      %3158 = vmatprep.subr.mxu0 0.0
      %3159 = vmatpush1.msra.mxu0 0.0
      %3160 = vmatprep.mubr.f32.mxu0 0.0
      %3161 = vmatmul.mubr.f32.gmra.mrb[0].mxu0 %v3010
      %v3162 = vpop.f32.mrb[0].mxu0
      %v3163 = vadd.f32 0.0, %v3162
      %v3164 = vpop.f32.mrb[0].mxu0
      %3165 = vmatprep.mubr.f32.mxu0 0.0
      %3166 = vmatmul.mubr.f32.gmra.mrb[0].mxu0 %v3013
      %v3167 = vpop.f32.mrb[0].mxu0
      %v3168 = vadd.f32 0.0, %v3167
      %v3169 = vpop.f32.mrb[0].mxu0
      %3170 = vmatprep.mubr.f32.mxu0 0.0
      %3171 = vmatmul.mubr.f32.gmra.mrb[0].mxu0 %v3016
      %v3172 = vpop.f32.mrb[0].mxu0
      %v3173 = vadd.f32 0.0, %v3172
      %v3174 = vpop.f32.mrb[0].mxu0
      %3175 = vmatprep.mubr.f32.mxu0 0.0
      %3176 = vmatmul.mubr.f32.gmra.mrb[0].mxu0 %v3019
      %v3177 = vpop.f32.mrb[0].mxu0
      %v3178 = vadd.f32 0.0, %v3177
      %v3179 = vpop.f32.mrb[0].mxu0
      %3180 = vmatprep.mubr.f32.mxu0 0.0
      %3181 = vmatmul.mubr.f32.gmra.mrb[0].mxu0 %v3022
      %v3182 = vpop.f32.mrb[0].mxu0
      %v3183 = vadd.f32 0.0, %v3182
      %v3184 = vpop.f32.mrb[0].mxu0
      %3185 = vmatprep.mubr.f32.mxu0 0.0
      %3186 = vmatmul.mubr.f32.gmra.mrb[0].mxu0 %v3025
      %v3187 = vpop.f32.mrb[0].mxu0
      %v3188 = vadd.f32 0.0, %v3187
      %v3189 = vpop.f32.mrb[0].mxu0
      %3190 = vmatprep.mubr.f32.mxu0 0.0
      %3191 = vmatmul.mubr.f32.gmra.mrb[0].mxu0 %v3028
      %v3192 = vpop.f32.mrb[0].mxu0
      %v3193 = vadd.f32 0.0, %v3192
      %v3194 = vpop.f32.mrb[0].mxu0
      %3195 = vmatprep.mubr.f32.mxu0 0.0
      %3196 = vmatmul.mubr.f32.gmra.mrb[0].mxu0 %v3031
      %v3197 = vpop.f32.mrb[0].mxu0
      %v3198 = vadd.f32 0.0, %v3197
      %v3199 = vpop.f32.mrb[0].mxu0
      %3200 = vmatprep.mubr.f32.mxu0 0.0
      %3201 = vmatmul.mubr.f32.gmra.mrb[0].mxu0 %v3034
      %v3202 = vpop.f32.mrb[0].mxu0
      %v3203 = vadd.f32 0.0, %v3202
      %v3204 = vpop.f32.mrb[0].mxu0
      %3205 = vmatprep.mubr.f32.mxu0 0.0
      %3206 = vmatmul.mubr.f32.gmra.mrb[0].mxu0 %v3037
      %v3207 = vpop.f32.mrb[0].mxu0
      %v3208 = vadd.f32 0.0, %v3207
      %v3209 = vpop.f32.mrb[0].mxu0
      %3210 = vmatprep.mubr.f32.mxu0 0.0
      %3211 = vmatmul.mubr.f32.gmra.mrb[0].mxu0 %v3040
      %v3212 = vpop.f32.mrb[0].mxu0
      %v3213 = vadd.f32 0.0, %v3212
      %v3214 = vpop.f32.mrb[0].mxu0
      %3215 = vmatprep.mubr.f32.mxu0 0.0
      %3216 = vmatmul.mubr.f32.gmra.mrb[0].mxu0 %v3043
      %v3217 = vpop.f32.mrb[0].mxu0
      %v3218 = vadd.f32 0.0, %v3217
      %v3219 = vpop.f32.mrb[0].mxu0
      %3220 = vmatprep.mubr.f32.mxu0 0.0
      %3221 = vmatmul.mubr.f32.gmra.mrb[0].mxu0 %v3046
      %v3222 = vpop.f32.mrb[0].mxu0
      %v3223 = vadd.f32 0.0, %v3222
      %v3224 = vpop.f32.mrb[0].mxu0
      %3225 = vmatprep.mubr.f32.mxu0 0.0
      %3226 = vmatmul.mubr.f32.gmra.mrb[0].mxu0 %v3049
      %v3227 = vpop.f32.mrb[0].mxu0
      %v3228 = vadd.f32 0.0, %v3227
      %v3229 = vpop.f32.mrb[0].mxu0
      %3230 = vmatprep.mubr.f32.mxu0 0.0
      %3231 = vmatmul.mubr.f32.gmra.mrb[0].mxu0 %v3052
      %v3232 = vpop.f32.mrb[0].mxu0
      %v3233 = vadd.f32 0.0, %v3232
      %v3234 = vpop.f32.mrb[0].mxu0
      %3235 = vmatprep.mubr.f32.mxu0 0.0
      %3236 = vmatmul.mubr.f32.gmra.mrb[0].mxu0 %v3055
      %v3237 = vpop.f32.mrb[0].mxu0
      %v3238 = vadd.f32 0.0, %v3237
      %v3239 = vpop.f32.mrb[0].mxu0
      %3240 = vmatprep.mubr.f32.mxu0 0.0
      %3241 = vmatmul.mubr.f32.gmra.mrb[0].mxu0 %v3058
      %v3242 = vpop.f32.mrb[0].mxu0
      %v3243 = vadd.f32 0.0, %v3242
      %v3244 = vpop.f32.mrb[0].mxu0
      %3245 = vmatprep.mubr.f32.mxu0 0.0
      %3246 = vmatmul.mubr.f32.gmra.mrb[0].mxu0 %v3061
      %v3247 = vpop.f32.mrb[0].mxu0
      %v3248 = vadd.f32 0.0, %v3247
      %v3249 = vpop.f32.mrb[0].mxu0
      %3250 = vmatprep.mubr.f32.mxu0 0.0
      %3251 = vmatmul.mubr.f32.gmra.mrb[0].mxu0 %v3064
      %v3252 = vpop.f32.mrb[0].mxu0
      %v3253 = vadd.f32 0.0, %v3252
      %v3254 = vpop.f32.mrb[0].mxu0
      %3255 = vmatprep.mubr.f32.mxu0 0.0
      %3256 = vmatmul.mubr.f32.gmra.mrb[0].mxu0 %v3067
      %v3257 = vpop.f32.mrb[0].mxu0
      %v3258 = vadd.f32 0.0, %v3257
      %v3259 = vpop.f32.mrb[0].mxu0
      %3260 = vmatprep.mubr.f32.mxu0 0.0
      %3261 = vmatmul.mubr.f32.gmra.mrb[0].mxu0 %v3070
      %v3262 = vpop.f32.mrb[0].mxu0
      %v3263 = vadd.f32 0.0, %v3262
      %v3264 = vpop.f32.mrb[0].mxu0
      %3265 = vmatprep.mubr.f32.mxu0 0.0
      %3266 = vmatmul.mubr.f32.gmra.mrb[0].mxu0 %v3073
      %v3267 = vpop.f32.mrb[0].mxu0
      %v3268 = vadd.f32 0.0, %v3267
      %v3269 = vpop.f32.mrb[0].mxu0
      %3270 = vmatprep.mubr.f32.mxu0 0.0
      %3271 = vmatmul.mubr.f32.gmra.mrb[0].mxu0 %v3076
      %v3272 = vpop.f32.mrb[0].mxu0
      %v3273 = vadd.f32 0.0, %v3272
      %v3274 = vpop.f32.mrb[0].mxu0
      %3275 = vmatprep.mubr.f32.mxu0 0.0
      %3276 = vmatmul.mubr.f32.gmra.mrb[0].mxu0 %v3079
      %v3277 = vpop.f32.mrb[0].mxu0
      %v3278 = vadd.f32 0.0, %v3277
      %v3279 = vpop.f32.mrb[0].mxu0
      %3280 = vmatprep.mubr.f32.mxu0 0.0
      %3281 = vmatmul.mubr.f32.gmra.mrb[0].mxu0 %v3082
      %v3282 = vpop.f32.mrb[0].mxu0
      %v3283 = vadd.f32 0.0, %v3282
      %v3284 = vpop.f32.mrb[0].mxu0
      %3285 = vmatprep.mubr.f32.mxu0 0.0
      %3286 = vmatmul.mubr.f32.gmra.mrb[0].mxu0 %v3085
      %v3287 = vpop.f32.mrb[0].mxu0
      %v3288 = vadd.f32 0.0, %v3287
      %v3289 = vpop.f32.mrb[0].mxu0
      %3290 = vmatprep.mubr.f32.mxu0 0.0
      %3291 = vmatmul.mubr.f32.gmra.mrb[0].mxu0 %v3088
      %v3292 = vpop.f32.mrb[0].mxu0
      %v3293 = vadd.f32 0.0, %v3292
      %v3294 = vpop.f32.mrb[0].mxu0
      %3295 = vmatprep.mubr.f32.mxu0 0.0
      %3296 = vmatmul.mubr.f32.gmra.mrb[0].mxu0 %v3091
      %v3297 = vpop.f32.mrb[0].mxu0
      %v3298 = vadd.f32 0.0, %v3297
      %v3299 = vpop.f32.mrb[0].mxu0
      %3300 = vdwg.mxu0
      %v3301 = vadd.f32 %v2951, %v3163
      %v3302 = vadd.f32 %v2952, %v3168
      %v3303 = vadd.f32 %v2953, %v3173
      %v3304 = vadd.f32 %v2954, %v3178
      %v3305 = vadd.f32 %v2955, %v3183
      %v3306 = vadd.f32 %v2956, %v3188
      %v3307 = vadd.f32 %v2957, %v3193
      %v3308 = vadd.f32 %v2958, %v3198
      %v3309 = vadd.f32 %v2959, %v3203
      %v3310 = vadd.f32 %v2960, %v3208
      %v3311 = vadd.f32 %v2961, %v3213
      %v3312 = vadd.f32 %v2962, %v3218
      %v3313 = vadd.f32 %v2963, %v3223
      %v3314 = vadd.f32 %v2964, %v3228
      %v3315 = vadd.f32 %v2965, %v3233
      %v3316 = vadd.f32 %v2966, %v3238
      %v3317 = vadd.f32 %v2967, %v3243
      %v3318 = vadd.f32 %v2968, %v3248
      %v3319 = vadd.f32 %v2969, %v3253
      %v3320 = vadd.f32 %v2970, %v3258
      %v3321 = vadd.f32 %v2971, %v3263
      %v3322 = vadd.f32 %v2972, %v3268
      %v3323 = vadd.f32 %v2973, %v3273
      %v3324 = vadd.f32 %v2974, %v3278
      %v3325 = vadd.f32 %v2975, %v3283
      %v3326 = vadd.f32 %v2976, %v3288
      %v3327 = vadd.f32 %v2977, %v3293
      %v3328 = vadd.f32 %v2978, %v3298
      %v3329 = vadd.f32 %v3301, 3.0
      %v3330 = vadd.f32 %v3302, 3.0
      %v3331 = vadd.f32 %v3303, 3.0
      %v3332 = vadd.f32 %v3304, 3.0
      %v3333 = vadd.f32 %v3305, 3.0
      %v3334 = vadd.f32 %v3306, 3.0
      %v3335 = vadd.f32 %v3307, 3.0
      %v3336 = vadd.f32 %v3308, 3.0
      %v3337 = vadd.f32 %v3309, 3.0
      %v3338 = vadd.f32 %v3310, 3.0
      %v3339 = vadd.f32 %v3311, 3.0
      %v3340 = vadd.f32 %v3312, 3.0
      %v3341 = vadd.f32 %v3313, 3.0
      %v3342 = vadd.f32 %v3314, 3.0
      %v3343 = vadd.f32 %v3315, 3.0
      %v3344 = vadd.f32 %v3316, 3.0
      %v3345 = vadd.f32 %v3317, 3.0
      %v3346 = vadd.f32 %v3318, 3.0
      %v3347 = vadd.f32 %v3319, 3.0
      %v3348 = vadd.f32 %v3320, 3.0
      %v3349 = vadd.f32 %v3321, 3.0
      %v3350 = vadd.f32 %v3322, 3.0
      %v3351 = vadd.f32 %v3323, 3.0
      %v3352 = vadd.f32 %v3324, 3.0
      %v3353 = vadd.f32 %v3325, 3.0
      %v3354 = vadd.f32 %v3326, 3.0
      %v3355 = vadd.f32 %v3327, 3.0
      %v3356 = vadd.f32 %v3328, 3.0
      %v3357 = vmax.f32 %v3329, 0.0
      %v3358 = vmax.f32 %v3330, 0.0
      %v3359 = vmax.f32 %v3331, 0.0
      %v3360 = vmax.f32 %v3332, 0.0
      %v3361 = vmax.f32 %v3333, 0.0
      %v3362 = vmax.f32 %v3334, 0.0
      %v3363 = vmax.f32 %v3335, 0.0
      %v3364 = vmax.f32 %v3336, 0.0
      %v3365 = vmax.f32 %v3337, 0.0
      %v3366 = vmax.f32 %v3338, 0.0
      %v3367 = vmax.f32 %v3339, 0.0
      %v3368 = vmax.f32 %v3340, 0.0
      %v3369 = vmax.f32 %v3341, 0.0
      %v3370 = vmax.f32 %v3342, 0.0
      %v3371 = vmax.f32 %v3343, 0.0
      %v3372 = vmax.f32 %v3344, 0.0
      %v3373 = vmax.f32 %v3345, 0.0
      %v3374 = vmax.f32 %v3346, 0.0
      %v3375 = vmax.f32 %v3347, 0.0
      %v3376 = vmax.f32 %v3348, 0.0
      %v3377 = vmax.f32 %v3349, 0.0
      %v3378 = vmax.f32 %v3350, 0.0
      %v3379 = vmax.f32 %v3351, 0.0
      %v3380 = vmax.f32 %v3352, 0.0
      %v3381 = vmax.f32 %v3353, 0.0
      %v3382 = vmax.f32 %v3354, 0.0
      %v3383 = vmax.f32 %v3355, 0.0
      %v3384 = vmax.f32 %v3356, 0.0
      %v3385 = vmin.f32 %v3357, 6.0
      %v3386 = vmin.f32 %v3358, 6.0
      %v3387 = vmin.f32 %v3359, 6.0
      %v3388 = vmin.f32 %v3360, 6.0
      %v3389 = vmin.f32 %v3361, 6.0
      %v3390 = vmin.f32 %v3362, 6.0
      %v3391 = vmin.f32 %v3363, 6.0
      %v3392 = vmin.f32 %v3364, 6.0
      %v3393 = vmin.f32 %v3365, 6.0
      %v3394 = vmin.f32 %v3366, 6.0
      %v3395 = vmin.f32 %v3367, 6.0
      %v3396 = vmin.f32 %v3368, 6.0
      %v3397 = vmin.f32 %v3369, 6.0
      %v3398 = vmin.f32 %v3370, 6.0
      %v3399 = vmin.f32 %v3371, 6.0
      %v3400 = vmin.f32 %v3372, 6.0
      %v3401 = vmin.f32 %v3373, 6.0
      %v3402 = vmin.f32 %v3374, 6.0
      %v3403 = vmin.f32 %v3375, 6.0
      %v3404 = vmin.f32 %v3376, 6.0
      %v3405 = vmin.f32 %v3377, 6.0
      %v3406 = vmin.f32 %v3378, 6.0
      %v3407 = vmin.f32 %v3379, 6.0
      %v3408 = vmin.f32 %v3380, 6.0
      %v3409 = vmin.f32 %v3381, 6.0
      %v3410 = vmin.f32 %v3382, 6.0
      %v3411 = vmin.f32 %v3383, 6.0
      %v3412 = vmin.f32 %v3384, 6.0
      %v3413 = vmul.f32 %v3301, %v3385
      %v3414 = vmul.f32 %v3302, %v3386
      %v3415 = vmul.f32 %v3303, %v3387
      %v3416 = vmul.f32 %v3304, %v3388
      %v3417 = vmul.f32 %v3305, %v3389
      %v3418 = vmul.f32 %v3306, %v3390
      %v3419 = vmul.f32 %v3307, %v3391
      %v3420 = vmul.f32 %v3308, %v3392
      %v3421 = vmul.f32 %v3309, %v3393
      %v3422 = vmul.f32 %v3310, %v3394
      %v3423 = vmul.f32 %v3311, %v3395
      %v3424 = vmul.f32 %v3312, %v3396
      %v3425 = vmul.f32 %v3313, %v3397
      %v3426 = vmul.f32 %v3314, %v3398
      %v3427 = vmul.f32 %v3315, %v3399
      %v3428 = vmul.f32 %v3316, %v3400
      %v3429 = vmul.f32 %v3317, %v3401
      %v3430 = vmul.f32 %v3318, %v3402
      %v3431 = vmul.f32 %v3319, %v3403
      %v3432 = vmul.f32 %v3320, %v3404
      %v3433 = vmul.f32 %v3321, %v3405
      %v3434 = vmul.f32 %v3322, %v3406
      %v3435 = vmul.f32 %v3323, %v3407
      %v3436 = vmul.f32 %v3324, %v3408
      %v3437 = vmul.f32 %v3325, %v3409
      %v3438 = vmul.f32 %v3326, %v3410
      %v3439 = vmul.f32 %v3327, %v3411
      %v3440 = vmul.f32 %v3328, %v3412
      %v3441 = vmul.f32 %v3413, 0.16666667
      %v3442 = vmul.f32 %v3414, 0.16666667
      %v3443 = vmul.f32 %v3415, 0.16666667
      %v3444 = vmul.f32 %v3416, 0.16666667
      %v3445 = vmul.f32 %v3417, 0.16666667
      %v3446 = vmul.f32 %v3418, 0.16666667
      %v3447 = vmul.f32 %v3419, 0.16666667
      %v3448 = vmul.f32 %v3420, 0.16666667
      %v3449 = vmul.f32 %v3421, 0.16666667
      %v3450 = vmul.f32 %v3422, 0.16666667
      %v3451 = vmul.f32 %v3423, 0.16666667
      %v3452 = vmul.f32 %v3424, 0.16666667
      %v3453 = vmul.f32 %v3425, 0.16666667
      %v3454 = vmul.f32 %v3426, 0.16666667
      %v3455 = vmul.f32 %v3427, 0.16666667
      %v3456 = vmul.f32 %v3428, 0.16666667
      %v3457 = vmul.f32 %v3429, 0.16666667
      %v3458 = vmul.f32 %v3430, 0.16666667
      %v3459 = vmul.f32 %v3431, 0.16666667
      %v3460 = vmul.f32 %v3432, 0.16666667
      %v3461 = vmul.f32 %v3433, 0.16666667
      %v3462 = vmul.f32 %v3434, 0.16666667
      %v3463 = vmul.f32 %v3435, 0.16666667
      %v3464 = vmul.f32 %v3436, 0.16666667
      %v3465 = vmul.f32 %v3437, 0.16666667
      %v3466 = vmul.f32 %v3438, 0.16666667
      %v3467 = vmul.f32 %v3439, 0.16666667
      %v3468 = vmul.f32 %v3440, 0.16666667
      %v3469 = vmax.f32 %v3441, %v3443
      %v3470 = vmax.f32 %v3442, %v3444
      %v3471 = vmax.f32 %v3445, %v3447
      %v3472 = vmax.f32 %v3446, %v3448
      %v3473 = vmax.f32 %v3449, %v3451
      %v3474 = vmax.f32 %v3450, %v3452
      %v3475 = vmax.f32 %v3453, %v3455
      %v3476 = vmax.f32 %v3454, %v3456
      %v3477 = vmax.f32 %v3457, %v3459
      %v3478 = vmax.f32 %v3458, %v3460
      %v3479 = vmax.f32 %v3461, %v3463
      %v3480 = vmax.f32 %v3462, %v3464
      %v3481 = vmax.f32 %v3465, %v3467
      %v3482 = vmax.f32 %v3466, %v3468
      %vm3497 = vcmask 1046528
      %v3498 = vrot.slane %v3469, 1
      %v3499 = vrot.slane %v3470, 1
      %v3500 = vsel %vm3497, %v3498, %v3499
      %v3501 = vrot.slane %v3471, 1
      %v3502 = vrot.slane %v3472, 1
      %v3503 = vsel %vm3497, %v3501, %v3502
      %v3504 = vrot.slane %v3473, 1
      %v3505 = vrot.slane %v3474, 1
      %v3506 = vsel %vm3497, %v3504, %v3505
      %v3507 = vrot.slane %v3475, 1
      %v3508 = vrot.slane %v3476, 1
      %v3509 = vsel %vm3497, %v3507, %v3508
      %v3510 = vrot.slane %v3477, 1
      %v3511 = vrot.slane %v3478, 1
      %v3512 = vsel %vm3497, %v3510, %v3511
      %v3513 = vrot.slane %v3479, 1
      %v3514 = vrot.slane %v3480, 1
      %v3515 = vsel %vm3497, %v3513, %v3514
      %v3516 = vrot.slane %v3481, 1
      %v3517 = vrot.slane %v3482, 1
      %v3518 = vsel %vm3497, %v3516, %v3517
      %v3533 = vmax.f32 %v3469, %v3500
      %v3534 = vmax.f32 %v3470, %v3499
      %v3535 = vmax.f32 %v3471, %v3503
      %v3536 = vmax.f32 %v3472, %v3502
      %v3537 = vmax.f32 %v3473, %v3506
      %v3538 = vmax.f32 %v3474, %v3505
      %v3539 = vmax.f32 %v3475, %v3509
      %v3540 = vmax.f32 %v3476, %v3508
      %v3541 = vmax.f32 %v3477, %v3512
      %v3542 = vmax.f32 %v3478, %v3511
      %v3543 = vmax.f32 %v3479, %v3515
      %v3544 = vmax.f32 %v3480, %v3514
      %v3545 = vmax.f32 %v3481, %v3518
      %v3546 = vmax.f32 %v3482, %v3517
      %v3547 = vmax.f32 %v3533, 0.0
      %v3548 = vmax.f32 %v3534, 0.0
      %v3549 = vmax.f32 %v3535, 0.0
      %v3550 = vmax.f32 %v3536, 0.0
      %v3551 = vmax.f32 %v3537, 0.0
      %v3552 = vmax.f32 %v3538, 0.0
      %v3553 = vmax.f32 %v3539, 0.0
      %v3554 = vmax.f32 %v3540, 0.0
      %v3555 = vmax.f32 %v3541, 0.0
      %v3556 = vmax.f32 %v3542, 0.0
      %v3557 = vmax.f32 %v3543, 0.0
      %v3558 = vmax.f32 %v3544, 0.0
      %v3559 = vmax.f32 %v3545, 0.0
      %v3560 = vmax.f32 %v3546, 0.0
      %vm3561 = vcmp.ne.f32.partialorder %v3533, %v3533
      %vm3562 = vcmp.ne.f32.partialorder %v3534, %v3534
      %vm3563 = vcmp.ne.f32.partialorder %v3535, %v3535
      %vm3564 = vcmp.ne.f32.partialorder %v3536, %v3536
      %vm3565 = vcmp.ne.f32.partialorder %v3537, %v3537
      %vm3566 = vcmp.ne.f32.partialorder %v3538, %v3538
      %vm3567 = vcmp.ne.f32.partialorder %v3539, %v3539
      %vm3568 = vcmp.ne.f32.partialorder %v3540, %v3540
      %vm3569 = vcmp.ne.f32.partialorder %v3541, %v3541
      %vm3570 = vcmp.ne.f32.partialorder %v3542, %v3542
      %vm3571 = vcmp.ne.f32.partialorder %v3543, %v3543
      %vm3572 = vcmp.ne.f32.partialorder %v3544, %v3544
      %vm3573 = vcmp.ne.f32.partialorder %v3545, %v3545
      %vm3574 = vcmp.ne.f32.partialorder %v3546, %v3546
      %v3575 = vadd.f32 %v3533, 0.0
      %v3576 = vadd.f32 %v3534, 0.0
      %v3577 = vadd.f32 %v3535, 0.0
      %v3578 = vadd.f32 %v3536, 0.0
      %v3579 = vadd.f32 %v3537, 0.0
      %v3580 = vadd.f32 %v3538, 0.0
      %v3581 = vadd.f32 %v3539, 0.0
      %v3582 = vadd.f32 %v3540, 0.0
      %v3583 = vadd.f32 %v3541, 0.0
      %v3584 = vadd.f32 %v3542, 0.0
      %v3585 = vadd.f32 %v3543, 0.0
      %v3586 = vadd.f32 %v3544, 0.0
      %v3587 = vadd.f32 %v3545, 0.0
      %v3588 = vadd.f32 %v3546, 0.0
      %v3589 = vand.u32 2147483647, %v3533
      %v3590 = vand.u32 2147483647, %v3534
      %v3591 = vand.u32 2147483647, %v3535
      %v3592 = vand.u32 2147483647, %v3536
      %v3593 = vand.u32 2147483647, %v3537
      %v3594 = vand.u32 2147483647, %v3538
      %v3595 = vand.u32 2147483647, %v3539
      %v3596 = vand.u32 2147483647, %v3540
      %v3597 = vand.u32 2147483647, %v3541
      %v3598 = vand.u32 2147483647, %v3542
      %v3599 = vand.u32 2147483647, %v3543
      %v3600 = vand.u32 2147483647, %v3544
      %v3601 = vand.u32 2147483647, %v3545
      %v3602 = vand.u32 2147483647, %v3546
      %v3603 = vsub.f32 0.0, %v3589
      %v3604 = vsub.f32 0.0, %v3590
      %v3605 = vsub.f32 0.0, %v3591
      %v3606 = vsub.f32 0.0, %v3592
      %v3607 = vsub.f32 0.0, %v3593
      %v3608 = vsub.f32 0.0, %v3594
      %v3609 = vsub.f32 0.0, %v3595
      %v3610 = vsub.f32 0.0, %v3596
      %v3611 = vsub.f32 0.0, %v3597
      %v3612 = vsub.f32 0.0, %v3598
      %v3613 = vsub.f32 0.0, %v3599
      %v3614 = vsub.f32 0.0, %v3600
      %v3615 = vsub.f32 0.0, %v3601
      %v3616 = vsub.f32 0.0, %v3602
      %v3617 = vmul.f32 %v3603, 1.442695
      %v3618 = vpow.pop %v3617
      %v3619 = vmul.f32 %v3604, 1.442695
      %v3620 = vpow.pop %v3619
      %v3621 = vmul.f32 %v3605, 1.442695
      %v3622 = vpow.pop %v3621
      %v3623 = vmul.f32 %v3606, 1.442695
      %v3624 = vpow.pop %v3623
      %v3625 = vmul.f32 %v3607, 1.442695
      %v3626 = vpow.pop %v3625
      %v3627 = vmul.f32 %v3608, 1.442695
      %v3628 = vpow.pop %v3627
      %v3629 = vmul.f32 %v3609, 1.442695
      %v3630 = vpow.pop %v3629
      %v3631 = vmul.f32 %v3610, 1.442695
      %v3632 = vpow.pop %v3631
      %v3633 = vmul.f32 %v3611, 1.442695
      %v3634 = vpow.pop %v3633
      %v3635 = vmul.f32 %v3612, 1.442695
      %v3636 = vpow.pop %v3635
      %v3637 = vmul.f32 %v3613, 1.442695
      %v3638 = vpow.pop %v3637
      %v3639 = vmul.f32 %v3614, 1.442695
      %v3640 = vpow.pop %v3639
      %v3641 = vmul.f32 %v3615, 1.442695
      %v3642 = vpow.pop %v3641
      %v3643 = vmul.f32 %v3616, 1.442695
      %v3644 = vpow.pop %v3643
      %v3645 = vadd.f32 %v3618, 1.0
      %v3646 = vlog2.pop %v3645
      %v3647 = vmul.f32 %v3646, 0.6931472
      %v3648 = vmul.f32 -0.5, %v3618
      %v3649 = vadd.f32 %v3648, 1.0
      %v3650 = vmul.f32 %v3649, %v3618
      %v3651 = vand.u32 2147483647, %v3618
      %vm3652 = vcmp.lt.f32.partialorder %v3651, 0.0004427343
      %v3653 = vsel %vm3652, %v3650, %v3647
      %v3654 = vadd.f32 %v3620, 1.0
      %v3655 = vlog2.pop %v3654
      %v3656 = vmul.f32 %v3655, 0.6931472
      %v3657 = vmul.f32 -0.5, %v3620
      %v3658 = vadd.f32 %v3657, 1.0
      %v3659 = vmul.f32 %v3658, %v3620
      %v3660 = vand.u32 2147483647, %v3620
      %vm3661 = vcmp.lt.f32.partialorder %v3660, 0.0004427343
      %v3662 = vsel %vm3661, %v3659, %v3656
      %v3663 = vadd.f32 %v3622, 1.0
      %v3664 = vlog2.pop %v3663
      %v3665 = vmul.f32 %v3664, 0.6931472
      %v3666 = vmul.f32 -0.5, %v3622
      %v3667 = vadd.f32 %v3666, 1.0
      %v3668 = vmul.f32 %v3667, %v3622
      %v3669 = vand.u32 2147483647, %v3622
      %vm3670 = vcmp.lt.f32.partialorder %v3669, 0.0004427343
      %v3671 = vsel %vm3670, %v3668, %v3665
      %v3672 = vadd.f32 %v3624, 1.0
      %v3673 = vlog2.pop %v3672
      %v3674 = vmul.f32 %v3673, 0.6931472
      %v3675 = vmul.f32 -0.5, %v3624
      %v3676 = vadd.f32 %v3675, 1.0
      %v3677 = vmul.f32 %v3676, %v3624
      %v3678 = vand.u32 2147483647, %v3624
      %vm3679 = vcmp.lt.f32.partialorder %v3678, 0.0004427343
      %v3680 = vsel %vm3679, %v3677, %v3674
      %v3681 = vadd.f32 %v3626, 1.0
      %v3682 = vlog2.pop %v3681
      %v3683 = vmul.f32 %v3682, 0.6931472
      %v3684 = vmul.f32 -0.5, %v3626
      %v3685 = vadd.f32 %v3684, 1.0
      %v3686 = vmul.f32 %v3685, %v3626
      %v3687 = vand.u32 2147483647, %v3626
      %vm3688 = vcmp.lt.f32.partialorder %v3687, 0.0004427343
      %v3689 = vsel %vm3688, %v3686, %v3683
      %v3690 = vadd.f32 %v3628, 1.0
      %v3691 = vlog2.pop %v3690
      %v3692 = vmul.f32 %v3691, 0.6931472
      %v3693 = vmul.f32 -0.5, %v3628
      %v3694 = vadd.f32 %v3693, 1.0
      %v3695 = vmul.f32 %v3694, %v3628
      %v3696 = vand.u32 2147483647, %v3628
      %vm3697 = vcmp.lt.f32.partialorder %v3696, 0.0004427343
      %v3698 = vsel %vm3697, %v3695, %v3692
      %v3699 = vadd.f32 %v3630, 1.0
      %v3700 = vlog2.pop %v3699
      %v3701 = vmul.f32 %v3700, 0.6931472
      %v3702 = vmul.f32 -0.5, %v3630
      %v3703 = vadd.f32 %v3702, 1.0
      %v3704 = vmul.f32 %v3703, %v3630
      %v3705 = vand.u32 2147483647, %v3630
      %vm3706 = vcmp.lt.f32.partialorder %v3705, 0.0004427343
      %v3707 = vsel %vm3706, %v3704, %v3701
      %v3708 = vadd.f32 %v3632, 1.0
      %v3709 = vlog2.pop %v3708
      %v3710 = vmul.f32 %v3709, 0.6931472
      %v3711 = vmul.f32 -0.5, %v3632
      %v3712 = vadd.f32 %v3711, 1.0
      %v3713 = vmul.f32 %v3712, %v3632
      %v3714 = vand.u32 2147483647, %v3632
      %vm3715 = vcmp.lt.f32.partialorder %v3714, 0.0004427343
      %v3716 = vsel %vm3715, %v3713, %v3710
      %v3717 = vadd.f32 %v3634, 1.0
      %v3718 = vlog2.pop %v3717
      %v3719 = vmul.f32 %v3718, 0.6931472
      %v3720 = vmul.f32 -0.5, %v3634
      %v3721 = vadd.f32 %v3720, 1.0
      %v3722 = vmul.f32 %v3721, %v3634
      %v3723 = vand.u32 2147483647, %v3634
      %vm3724 = vcmp.lt.f32.partialorder %v3723, 0.0004427343
      %v3725 = vsel %vm3724, %v3722, %v3719
      %v3726 = vadd.f32 %v3636, 1.0
      %v3727 = vlog2.pop %v3726
      %v3728 = vmul.f32 %v3727, 0.6931472
      %v3729 = vmul.f32 -0.5, %v3636
      %v3730 = vadd.f32 %v3729, 1.0
      %v3731 = vmul.f32 %v3730, %v3636
      %v3732 = vand.u32 2147483647, %v3636
      %vm3733 = vcmp.lt.f32.partialorder %v3732, 0.0004427343
      %v3734 = vsel %vm3733, %v3731, %v3728
      %v3735 = vadd.f32 %v3638, 1.0
      %v3736 = vlog2.pop %v3735
      %v3737 = vmul.f32 %v3736, 0.6931472
      %v3738 = vmul.f32 -0.5, %v3638
      %v3739 = vadd.f32 %v3738, 1.0
      %v3740 = vmul.f32 %v3739, %v3638
      %v3741 = vand.u32 2147483647, %v3638
      %vm3742 = vcmp.lt.f32.partialorder %v3741, 0.0004427343
      %v3743 = vsel %vm3742, %v3740, %v3737
      %v3744 = vadd.f32 %v3640, 1.0
      %v3745 = vlog2.pop %v3744
      %v3746 = vmul.f32 %v3745, 0.6931472
      %v3747 = vmul.f32 -0.5, %v3640
      %v3748 = vadd.f32 %v3747, 1.0
      %v3749 = vmul.f32 %v3748, %v3640
      %v3750 = vand.u32 2147483647, %v3640
      %vm3751 = vcmp.lt.f32.partialorder %v3750, 0.0004427343
      %v3752 = vsel %vm3751, %v3749, %v3746
      %v3753 = vadd.f32 %v3642, 1.0
      %v3754 = vlog2.pop %v3753
      %v3755 = vmul.f32 %v3754, 0.6931472
      %v3756 = vmul.f32 -0.5, %v3642
      %v3757 = vadd.f32 %v3756, 1.0
      %v3758 = vmul.f32 %v3757, %v3642
      %v3759 = vand.u32 2147483647, %v3642
      %vm3760 = vcmp.lt.f32.partialorder %v3759, 0.0004427343
      %v3761 = vsel %vm3760, %v3758, %v3755
      %v3762 = vadd.f32 %v3644, 1.0
      %v3763 = vlog2.pop %v3762
      %v3764 = vmul.f32 %v3763, 0.6931472
      %v3765 = vmul.f32 -0.5, %v3644
      %v3766 = vadd.f32 %v3765, 1.0
      %v3767 = vmul.f32 %v3766, %v3644
      %v3768 = vand.u32 2147483647, %v3644
      %vm3769 = vcmp.lt.f32.partialorder %v3768, 0.0004427343
      %v3770 = vsel %vm3769, %v3767, %v3764
      %v3771 = vadd.f32 %v3547, %v3653
      %v3772 = vadd.f32 %v3548, %v3662
      %v3773 = vadd.f32 %v3549, %v3671
      %v3774 = vadd.f32 %v3550, %v3680
      %v3775 = vadd.f32 %v3551, %v3689
      %v3776 = vadd.f32 %v3552, %v3698
      %v3777 = vadd.f32 %v3553, %v3707
      %v3778 = vadd.f32 %v3554, %v3716
      %v3779 = vadd.f32 %v3555, %v3725
      %v3780 = vadd.f32 %v3556, %v3734
      %v3781 = vadd.f32 %v3557, %v3743
      %v3782 = vadd.f32 %v3558, %v3752
      %v3783 = vadd.f32 %v3559, %v3761
      %v3784 = vadd.f32 %v3560, %v3770
      %v3785 = vsel %vm3561, %v3575, %v3771
      %v3786 = vsel %vm3562, %v3576, %v3772
      %v3787 = vsel %vm3563, %v3577, %v3773
      %v3788 = vsel %vm3564, %v3578, %v3774
      %v3789 = vsel %vm3565, %v3579, %v3775
      %v3790 = vsel %vm3566, %v3580, %v3776
      %v3791 = vsel %vm3567, %v3581, %v3777
      %v3792 = vsel %vm3568, %v3582, %v3778
      %v3793 = vsel %vm3569, %v3583, %v3779
      %v3794 = vsel %vm3570, %v3584, %v3780
      %v3795 = vsel %vm3571, %v3585, %v3781
      %v3796 = vsel %vm3572, %v3586, %v3782
      %v3797 = vsel %vm3573, %v3587, %v3783
      %v3798 = vsel %vm3574, %v3588, %v3784
      %v3799 = vtanh.pop %v3785
      %v3800 = vtanh.pop %v3786
      %v3801 = vtanh.pop %v3787
      %v3802 = vtanh.pop %v3788
      %v3803 = vtanh.pop %v3789
      %v3804 = vtanh.pop %v3790
      %v3805 = vtanh.pop %v3791
      %v3806 = vtanh.pop %v3792
      %v3807 = vtanh.pop %v3793
      %v3808 = vtanh.pop %v3794
      %v3809 = vtanh.pop %v3795
      %v3810 = vtanh.pop %v3796
      %v3811 = vtanh.pop %v3797
      %v3812 = vtanh.pop %v3798
      %v3813 = vmul.f32 %v3533, %v3799
      %v3814 = vmul.f32 %v3534, %v3800
      %v3815 = vmul.f32 %v3535, %v3801
      %v3816 = vmul.f32 %v3536, %v3802
      %v3817 = vmul.f32 %v3537, %v3803
      %v3818 = vmul.f32 %v3538, %v3804
      %v3819 = vmul.f32 %v3539, %v3805
      %v3820 = vmul.f32 %v3540, %v3806
      %v3821 = vmul.f32 %v3541, %v3807
      %v3822 = vmul.f32 %v3542, %v3808
      %v3823 = vmul.f32 %v3543, %v3809
      %v3824 = vmul.f32 %v3544, %v3810
      %v3825 = vmul.f32 %v3545, %v3811
      %v3826 = vmul.f32 %v3546, %v3812
      %vm3827 = vcmask 64512
      %3828 = vst.msk [vmem:[%s170] sm:$0xff] %vm3827, %v3813
      %vm3829 = vcmask 61440
      %3830 = vst.msk [vmem:[%s170 + $0x8] sm:$0x1f] %vm3829, %v3814
      %3831 = vst.msk [vmem:[%s170 + $0x10] sm:$0xff] %vm3827, %v3815
      %3832 = vst.msk [vmem:[%s170 + $0x18] sm:$0x1f] %vm3829, %v3816
      %3833 = vst.msk [vmem:[%s170 + $0x20] sm:$0xff] %vm3827, %v3817
      %3834 = vst.msk [vmem:[%s170 + $0x28] sm:$0x1f] %vm3829, %v3818
      %3835 = vst.msk [vmem:[%s170 + $0x30] sm:$0xff] %vm3827, %v3819
      %3836 = vst.msk [vmem:[%s170 + $0x38] sm:$0x1f] %vm3829, %v3820
      %3837 = vst.msk [vmem:[%s170 + $0x40] sm:$0xff] %vm3827, %v3821
      %3838 = vst.msk [vmem:[%s170 + $0x48] sm:$0x1f] %vm3829, %v3822
      %3839 = vst.msk [vmem:[%s170 + $0x50] sm:$0xff] %vm3827, %v3823
      %3840 = vst.msk [vmem:[%s170 + $0x58] sm:$0x1f] %vm3829, %v3824
      %3841 = vst.msk [vmem:[%s170 + $0x60] sm:$0xff] %vm3827, %v3825
      %3842 = vst.msk [vmem:[%s170 + $0x68] sm:$0x1f] %vm3829, %v3826
      %p3843 = scmp.lt.s32.totalorder %s14, 1
      %s3844 = scalar_select %p3843, %s14, 1
      %s3845 = smul.addr %s3844, 14
      %s3846 = smul.addr %s3845, 8
      %s3847 = scalar_lea.vmem %s3, %s3846
      // Predicated region
      $region33: #{tpu_custom_call.1} parent=31 // pred_check
        %p3848 = pneg %p100
      $region34: #{tpu_custom_call.1} parent=31 // pred_check_branch
        %3850 = sbr.rel (%p3848) target = $region36
      $region35: #{tpu_custom_call.1} parent=31 // pred_region
        _
      $region36: #{tpu_custom_call.1} parent=31 // pred_fallthru
        _
    $region32: #{tpu_custom_call.1} parent=5 // pred_fallthru
      _
    %p3851 = scmp.le.s32.totalorder 2, %s9
    // Predicated region
    $region37: #{tpu_custom_call.1} parent=5 // pred_check
      %p3852 = pneg %p3851
    $region38: #{tpu_custom_call.1} parent=5 // pred_check_branch
      %3854 = sbr.rel (%p3852) target = $region40
    $region39: #{tpu_custom_call.1} parent=5 // pred_region
      %s3855 = ssub.s32 %s9, 2
      // Predicated region
      $region41: #{tpu_custom_call.1} parent=39 // pred_check
        %p3856 = pneg %p106
      $region42: #{tpu_custom_call.1} parent=39 // pred_check_branch
        %3858 = sbr.rel (%p3856) target = $region44
      $region43: #{tpu_custom_call.1} parent=39 // pred_region
        %p3859 = scmp.lt.s32.totalorder %s15, 1
        %s3860 = scalar_select %p3859, %s15, 1
        %s3861 = smul.addr %s3860, 14
        %s3862 = smul.addr %s3861, 8
        %s3863 = scalar_lea.vmem %s3, %s3862
      $region44: #{tpu_custom_call.1} parent=39 // pred_fallthru
        _
    $region40: #{tpu_custom_call.1} parent=5 // pred_fallthru
      _
  $region6: #{tpu_custom_call.1} parent=0 // loop_footer
    %s13 = sadd.s32 1, %s9
  $region7: #{tpu_custom_call.1} parent=0 // loop_footer_branch
    %8 = sbr.rel target = $region3
  $region8: #{tpu_custom_call.1} parent=0 // loop_exit
    _

</llo_original>
